<compile_context>
chip_gen: v7x
topology: tpu7x:2x2x1
jax: 0.10.0
libtpu: 0.0.40
codegen_flags: <defaults>
</compile_context>

<pallas_src>
import functools
import math

import jax
import jax.numpy as jnp
from jax.experimental import pallas as pl
from jax.experimental.pallas import tpu as pltpu


def _laconv_kernel(x_ref, y_ref, pmat_ref, w1_ref, b1_ref, w2_ref, b2_ref,
                   w3_ref, b3_ref, o_ref, *, spatial_h, spatial_w, ksize, bblk):
    """One grid step == `bblk` images.

    x_ref   : (bblk, (H+2p)*W, Kpad) bf16   row-padded, kx-expanded, K zero-padded input
    y_ref   : (bblk, H*W, D)         bf16   unfold(x), window-major rows
    pmat_ref: (H*W, H*W)             bf16   0/1 spatial-raster -> window-major permutation
    w1_ref  : (ksize, Kpad, F1)      bf16   3x3 conv weight, one [Kpad, F1] slab per ky
    w2_ref  : (F1, F1); w3_ref: (F1, D)     1x1 conv weights (pre-transposed), bf16
    b*_ref  : (1, F)                 f32    conv biases
    o_ref   : (bblk, H*W, D)                sigmoid(attention) * y, window-major rows
    """
    hw = spatial_h * spatial_w
    m = bblk * hw
    kdim = x_ref.shape[-1]

    # ---- 3x3 conv: ksize accumulated GEMMs over the fused (kx, c) contraction --------
    # tap ky only needs rows [ky*W, (ky+H)*W): static, sublane-aligned slices (W % 8 == 0).
    tap0 = x_ref[:, 0:hw, :].reshape(m, kdim)
    acc = jnp.dot(tap0, w1_ref[0], preferred_element_type=jnp.float32)
    for ky in range(1, ksize):
        tap = x_ref[:, ky * spatial_w:(ky + spatial_h) * spatial_w, :].reshape(m, kdim)
        acc = acc + jnp.dot(tap, w1_ref[ky], preferred_element_type=jnp.float32)
    h1 = jnp.maximum(acc + b1_ref[...], 0.0)                                  # ReLU, f32

    # ---- 1x1 conv -> ReLU --------------------------------------------------------------
    h2 = jnp.dot(h1.astype(jnp.bfloat16), w2_ref[...],
                 preferred_element_type=jnp.float32) + b2_ref[...]
    h2 = jnp.maximum(h2, 0.0)

    # ---- 1x1 conv -> Sigmoid (reciprocal on the EUP slot) ------------------------------
    z = jnp.dot(h2.astype(jnp.bfloat16), w3_ref[...],
                preferred_element_type=jnp.float32) + b3_ref[...]
    attn = pl.reciprocal(1.0 + jnp.exp(-z), approx=True)                      # sigmoid
    attn = attn.astype(jnp.bfloat16)

    # ---- spatial -> window-major row permutation as a GEMM, then attn * unfold(x) ------
    pmat = pmat_ref[...]
    for bb in range(bblk):                      # static unroll; bblk is small
        a_wm = jnp.dot(pmat, attn[bb * hw:(bb + 1) * hw, :],
                       preferred_element_type=jnp.float32)
        o_ref[bb, :, :] = (a_wm * y_ref[bb].astype(jnp.float32)).astype(o_ref.dtype)


def _shift_w(a, off):
    """Shift a [B, H', W, C] array along W by `off` with zero fill."""
    if off == 0:
        return a
    if off < 0:
        return jnp.pad(a[:, :, :off, :], ((0, 0), (0, 0), (-off, 0), (0, 0)))
    return jnp.pad(a[:, :, off:, :], ((0, 0), (0, 0), (0, off), (0, 0)))


def _choose_bblk(batch, per_image_bytes, budget_bytes):
    """Largest batch block that fits the VMEM budget while keeping >= 2 grid steps."""
    for cand in range(batch, 0, -1):
        if batch % cand:
            continue
        if batch >= 2 and batch // cand < 2:      # keep both v7x TensorCores busy
            continue
        if cand * per_image_bytes > budget_bytes:
            continue
        return cand
    return 1


def laconv_forward(x, w1, b1, w2, b2, w3, b3, *, patch, ksize=3, pad=1):
    """LAConv.forward(x, chunk=1, order='N') with proj_mode='conv'.

    x : [B, C, H, W]; w1: [F1, C, k, k]; w2: [F1, F1, 1, 1]; w3: [D, F1, 1, 1].
    Returns [B, (H//patch)*(W//patch), patch*patch*D].
    """
    B, C, H, W = x.shape
    F1 = w1.shape[0]
    D = w3.shape[0]
    P = patch
    assert H % P == 0 and W % P == 0
    assert W % 8 == 0, "W must be a multiple of 8 for sublane-aligned ky tap slices"
    assert 2 * pad == ksize - 1, "only 'same'-padded stride-1 convs supported"
    assert D == C, "chunk=1 / order='N' path requires outdim == dim (elementwise x*y)"
    L = (H // P) * (W // P)
    HW = H * W
    Kc = ksize * C
    Kpad = ((Kc + 127) // 128) * 128            # contraction padded to a lane multiple
    rows_pad = (H + 2 * pad) * W

    # ---- input layout plumbing (wrapper-side, one pass over x) -------------------------
    # channels-last, H padded; kx window shifts folded into the channel dim so the kernel
    # only slices along the aligned row dimension; fused K zero-padded to 128; bf16.
    x_nhwc = jnp.transpose(x, (0, 2, 3, 1))                         # [B, H, W, C]
    xh = jnp.pad(x_nhwc, ((0, 0), (pad, pad), (0, 0), (0, 0)))      # [B, H+2p, W, C]
    xsh = jnp.concatenate([_shift_w(xh, kx - pad) for kx in range(ksize)], axis=-1)
    if Kpad > Kc:
        xsh = jnp.pad(xsh, ((0, 0), (0, 0), (0, 0), (0, Kpad - Kc)))
    xsh = xsh.reshape(B, rows_pad, Kpad).astype(jnp.bfloat16)       # [B, (H+2p)*W, Kpad]
    # TODO(synk): for large H*W, build the kx taps in-kernel from an unexpanded
    # (H+2p)*W x C slab (masked pltpu.roll) to cut this 3x input-byte expansion.

    # unfold(x, P, stride=P).permute(0, 2, 1) -> [B, L, C*P*P]; window-major rows are a
    # *free* contiguous reshape of it (the elementwise product uses the same linear j
    # axis for both factors, exactly as the PyTorch module does).
    y_unf = (x.reshape(B, C, H // P, P, W // P, P)
               .transpose(0, 2, 4, 1, 3, 5)
               .reshape(B, L, C * P * P))
    y_wm = y_unf.reshape(B, L * P * P, D).astype(jnp.bfloat16)      # [B, HW, D]

    # 0/1 permutation matrix: spatial-raster row -> window-major row (applied on the MXU
    # inside the kernel instead of a post-kernel XLA transpose pass).
    r = jnp.arange(HW)
    l_idx, q = r // (P * P), r % (P * P)
    wh, ww = l_idx // (W // P), l_idx % (W // P)
    ph, pw = q // P, q % P
    s = (wh * P + ph) * W + (ww * P + pw)
    pmat = jax.nn.one_hot(s, HW, dtype=jnp.bfloat16)                # [HW, HW]

    # weights pre-transposed / pre-reshaped: the kernel only ever does `rows @ W`.
    w1p = jnp.transpose(w1, (2, 3, 1, 0)).reshape(ksize, Kc, F1)    # [ky, kx*C + c, f]
    w1p = jnp.pad(w1p, ((0, 0), (0, Kpad - Kc), (0, 0))).astype(jnp.bfloat16)
    w2p = jnp.transpose(w2[:, :, 0, 0], (1, 0)).astype(jnp.bfloat16)
    w3p = jnp.transpose(w3[:, :, 0, 0], (1, 0)).astype(jnp.bfloat16)
    b1p = b1.reshape(1, F1).astype(jnp.float32)
    b2p = b2.reshape(1, F1).astype(jnp.float32)
    b3p = b3.reshape(1, D).astype(jnp.float32)

    # batch block: largest block under an explicit VMEM budget, keeping >= 2 grid steps.
    per_img = 2 * (rows_pad * Kpad + HW * D) * 2 + 2 * HW * D * x.dtype.itemsize
    bblk = _choose_bblk(B, per_img, budget_bytes=8 * 1024 * 1024)

    kernel = functools.partial(_laconv_kernel, spatial_h=H, spatial_w=W,
                               ksize=ksize, bblk=bblk)

    out_wm = pl.pallas_call(
        kernel,
        out_shape=jax.ShapeDtypeStruct((B, HW, D), x.dtype),
        grid_spec=pltpu.PrefetchScalarGridSpec(
            num_scalar_prefetch=0,
            grid=(B // bblk,),
            in_specs=[
                # NOTE: if an xprof trace shows exposed DMA waits at larger shapes, add
                # pipeline_mode=pl.Buffered(3) to these two data specs.
                pl.BlockSpec((bblk, rows_pad, Kpad), lambda g: (g, 0, 0)),
                pl.BlockSpec((bblk, HW, D), lambda g: (g, 0, 0)),
                pl.BlockSpec((HW, HW), lambda g: (0, 0)),
                pl.BlockSpec((ksize, Kpad, F1), lambda g: (0, 0, 0)),
                pl.BlockSpec((1, F1), lambda g: (0, 0)),
                pl.BlockSpec((F1, F1), lambda g: (0, 0)),
                pl.BlockSpec((1, F1), lambda g: (0, 0)),
                pl.BlockSpec((F1, D), lambda g: (0, 0)),
                pl.BlockSpec((1, D), lambda g: (0, 0)),
            ],
            out_specs=pl.BlockSpec((bblk, HW, D), lambda g: (g, 0, 0)),
        ),
        compiler_params=pltpu.CompilerParams(
            dimension_semantics=("parallel",),
            vmem_limit_bytes=32 * 1024 * 1024),
    )(xsh, y_wm, pmat, w1p, b1p, w2p, b2p, w3p, b3p)

    # window-major rows -> [B, L, P*P*D]: contiguous reshape, no extra HBM pass.
    # TODO(synk): chunk=3 and order='C' return branches (output-only reshapes of this
    # same product) are not implemented.
    return out_wm.reshape(B, L, P * P * D)


def laconv_ref(x, w1, b1, w2, b2, w3, b3, patch):
    """Pure-JAX f32 reference mirroring the PyTorch LAConv.forward (chunk=1, order='N')."""
    B, C, H, W = x.shape
    D = w3.shape[0]
    P = patch
    a = jax.lax.conv_general_dilated(
        x, w1, window_strides=(1, 1), padding=((1, 1), (1, 1)),
        dimension_numbers=('NCHW', 'OIHW', 'NCHW'))
    a = jax.nn.relu(a + b1[None, :, None, None])
    a = jax.nn.relu(jnp.einsum('bchw,oc->bohw', a, w2[:, :, 0, 0])
                    + b2[None, :, None, None])
    a = jax.nn.sigmoid(jnp.einsum('bchw,oc->bohw', a, w3[:, :, 0, 0])
                       + b3[None, :, None, None])
    L = (H // P) * (W // P)
    y = (x.reshape(B, C, H // P, P, W // P, P)
          .transpose(0, 2, 4, 1, 3, 5).reshape(B, L, C * P * P))
    xr = (a.reshape(B, D, H // P, P, W // P, P)
           .transpose(0, 2, 4, 3, 5, 1).reshape(B, L, P * P * D))
    return xr * y


if __name__ == "__main__":
    B, dim, H, W = 4, 32, 16, 16
    outdim = dim                 # chunk=1 / order='N' path needs outdim == dim
    patch = 4
    mlp_ratio = 4
    hidden = dim * mlp_ratio     # 128

    key = jax.random.PRNGKey(0)
    kx_, k1, k2, k3, kb1, kb2, kb3 = jax.random.split(key, 7)

    x = jax.random.normal(kx_, (B, dim, H, W), dtype=jnp.float32)

    # PyTorch Conv2d default init: U(-1/sqrt(fan_in), 1/sqrt(fan_in)), fan_in = Cin*k*k
    def conv_w_init(k, shape):
        fan_in = shape[1] * shape[2] * shape[3]
        bound = 1.0 / math.sqrt(fan_in)
        return jax.random.uniform(k, shape, jnp.float32, -bound, bound)

    def conv_b_init(k, n, fan_in):
        bound = 1.0 / math.sqrt(fan_in)
        return jax.random.uniform(k, (n,), jnp.float32, -bound, bound)

    w1 = conv_w_init(k1, (hidden, dim, 3, 3))
    w2 = conv_w_init(k2, (hidden, hidden, 1, 1))
    w3 = conv_w_init(k3, (outdim, hidden, 1, 1))
    b1 = conv_b_init(kb1, hidden, dim * 9)
    b2 = conv_b_init(kb2, hidden, hidden)
    b3 = conv_b_init(kb3, outdim, hidden)

    laconv = jax.jit(functools.partial(laconv_forward, patch=patch))
    out = jax.block_until_ready(laconv(x, w1, b1, w2, b2, w3, b3))

    ref = laconv_ref(x, w1, b1, w2, b2, w3, b3, patch)
    L = (H // patch) * (W // patch)
    assert out.shape == (B, L, patch * patch * outdim)
    # bf16 MXU operands (f32 accumulation) against an all-f32 reference -> loosened tol.
    assert jnp.allclose(out, ref, atol=5e-2, rtol=5e-2), "mismatch vs JAX reference"

    print("KERNEL_OK")
</pallas_src>

<mosaic_0001>
module attributes {stable_mosaic.version = 11 : i64} {
  func.func @_laconv_kernel(%arg0: i32, %arg1: memref<2x288x128xbf16, #tpu.memory_space<vmem>>, %arg2: memref<2x256x32xbf16, #tpu.memory_space<vmem>>, %arg3: memref<256x256xbf16, #tpu.memory_space<vmem>>, %arg4: memref<3x128x128xbf16, #tpu.memory_space<vmem>>, %arg5: memref<1x128xf32, #tpu.memory_space<vmem>>, %arg6: memref<128x128xbf16, #tpu.memory_space<vmem>>, %arg7: memref<1x128xf32, #tpu.memory_space<vmem>>, %arg8: memref<128x32xbf16, #tpu.memory_space<vmem>>, %arg9: memref<1x32xf32, #tpu.memory_space<vmem>>, %arg10: memref<2x256x32xf32, #tpu.memory_space<vmem>>) attributes {dimension_semantics = [#tpu.dimension_semantics<parallel>], iteration_bounds = array<i64: 2>, scalar_prefetch = 0 : i64, scratch_operands = 0 : i64, tpu.core_type = #tpu.core_type<tc>, window_params = [{transform_indices = @transform_0, window_bounds = array<i64: 2, 288, 128>}, {transform_indices = @transform_1, window_bounds = array<i64: 2, 256, 32>}, {pipeline_mode = #tpu.pipeline_mode<synchronous>, transform_indices = @transform_2, window_bounds = array<i64: 256, 256>}, {pipeline_mode = #tpu.pipeline_mode<synchronous>, transform_indices = @transform_3, window_bounds = array<i64: 3, 128, 128>}, {pipeline_mode = #tpu.pipeline_mode<synchronous>, transform_indices = @transform_4, window_bounds = array<i64: 1, 128>}, {pipeline_mode = #tpu.pipeline_mode<synchronous>, transform_indices = @transform_5, window_bounds = array<i64: 128, 128>}, {pipeline_mode = #tpu.pipeline_mode<synchronous>, transform_indices = @transform_6, window_bounds = array<i64: 1, 128>}, {pipeline_mode = #tpu.pipeline_mode<synchronous>, transform_indices = @transform_7, window_bounds = array<i64: 128, 32>}, {pipeline_mode = #tpu.pipeline_mode<synchronous>, transform_indices = @transform_8, window_bounds = array<i64: 1, 32>}, {transform_indices = @transform_9, window_bounds = array<i64: 2, 256, 32>}]} {
    %c0 = arith.constant 0 : index
    %c0_0 = arith.constant 0 : index
    %c0_1 = arith.constant 0 : index
    %0 = vector.load %arg1[%c0, %c0_0, %c0_1] : memref<2x288x128xbf16, #tpu.memory_space<vmem>>, vector<2x256x128xbf16>
    %1 = vector.shape_cast %0 : vector<2x256x128xbf16> to vector<512x128xbf16>
    %c0_2 = arith.constant 0 : index
    %c0_3 = arith.constant 0 : index
    %c0_4 = arith.constant 0 : index
    %2 = vector.load %arg4[%c0_2, %c0_3, %c0_4] : memref<3x128x128xbf16, #tpu.memory_space<vmem>>, vector<1x128x128xbf16>
    %3 = vector.shape_cast %2 : vector<1x128x128xbf16> to vector<128x128xbf16>
    %cst = arith.constant dense<0.000000e+00> : vector<512x128xf32>
    %4 = tpu.matmul %1, %3, %cst {dimension_numbers = #tpu.dot_dimension_numbers<[1], [0], [0], [1], [0, 0, 1, 1], [], []>} : vector<512x128xbf16>, vector<128x128xbf16>, vector<512x128xf32> -> vector<512x128xf32>
    %c0_5 = arith.constant 0 : index
    %c16 = arith.constant 16 : index
    %c0_6 = arith.constant 0 : index
    %5 = vector.load %arg1[%c0_5, %c16, %c0_6] : memref<2x288x128xbf16, #tpu.memory_space<vmem>>, vector<2x256x128xbf16>
    %6 = vector.shape_cast %5 : vector<2x256x128xbf16> to vector<512x128xbf16>
    %c1 = arith.constant 1 : index
    %c0_7 = arith.constant 0 : index
    %c0_8 = arith.constant 0 : index
    %7 = vector.load %arg4[%c1, %c0_7, %c0_8] : memref<3x128x128xbf16, #tpu.memory_space<vmem>>, vector<1x128x128xbf16>
    %8 = vector.shape_cast %7 : vector<1x128x128xbf16> to vector<128x128xbf16>
    %cst_9 = arith.constant dense<0.000000e+00> : vector<512x128xf32>
    %9 = tpu.matmul %6, %8, %cst_9 {dimension_numbers = #tpu.dot_dimension_numbers<[1], [0], [0], [1], [0, 0, 1, 1], [], []>} : vector<512x128xbf16>, vector<128x128xbf16>, vector<512x128xf32> -> vector<512x128xf32>
    %10 = arith.addf %4, %9 : vector<512x128xf32>
    %c0_10 = arith.constant 0 : index
    %c32 = arith.constant 32 : index
    %c0_11 = arith.constant 0 : index
    %11 = vector.load %arg1[%c0_10, %c32, %c0_11] : memref<2x288x128xbf16, #tpu.memory_space<vmem>>, vector<2x256x128xbf16>
    %12 = vector.shape_cast %11 : vector<2x256x128xbf16> to vector<512x128xbf16>
    %c2 = arith.constant 2 : index
    %c0_12 = arith.constant 0 : index
    %c0_13 = arith.constant 0 : index
    %13 = vector.load %arg4[%c2, %c0_12, %c0_13] : memref<3x128x128xbf16, #tpu.memory_space<vmem>>, vector<1x128x128xbf16>
    %14 = vector.shape_cast %13 : vector<1x128x128xbf16> to vector<128x128xbf16>
    %cst_14 = arith.constant dense<0.000000e+00> : vector<512x128xf32>
    %15 = tpu.matmul %12, %14, %cst_14 {dimension_numbers = #tpu.dot_dimension_numbers<[1], [0], [0], [1], [0, 0, 1, 1], [], []>} : vector<512x128xbf16>, vector<128x128xbf16>, vector<512x128xf32> -> vector<512x128xf32>
    %16 = arith.addf %10, %15 : vector<512x128xf32>
    %c0_15 = arith.constant 0 : index
    %c0_16 = arith.constant 0 : index
    %17 = vector.load %arg5[%c0_15, %c0_16] : memref<1x128xf32, #tpu.memory_space<vmem>>, vector<1x128xf32>
    %18 = vector.broadcast %17 : vector<1x128xf32> to vector<512x128xf32>
    %19 = arith.addf %16, %18 : vector<512x128xf32>
    %cst_17 = arith.constant 0.000000e+00 : f32
    %20 = vector.broadcast %cst_17 : f32 to vector<512x128xf32>
    %21 = arith.maximumf %19, %20 : vector<512x128xf32>
    %22 = arith.truncf %21 : vector<512x128xf32> to vector<512x128xbf16>
    %c0_18 = arith.constant 0 : index
    %c0_19 = arith.constant 0 : index
    %23 = vector.load %arg6[%c0_18, %c0_19] : memref<128x128xbf16, #tpu.memory_space<vmem>>, vector<128x128xbf16>
    %cst_20 = arith.constant dense<0.000000e+00> : vector<512x128xf32>
    %24 = tpu.matmul %22, %23, %cst_20 {dimension_numbers = #tpu.dot_dimension_numbers<[1], [0], [0], [1], [0, 0, 1, 1], [], []>} : vector<512x128xbf16>, vector<128x128xbf16>, vector<512x128xf32> -> vector<512x128xf32>
    %c0_21 = arith.constant 0 : index
    %c0_22 = arith.constant 0 : index
    %25 = vector.load %arg7[%c0_21, %c0_22] : memref<1x128xf32, #tpu.memory_space<vmem>>, vector<1x128xf32>
    %26 = vector.broadcast %25 : vector<1x128xf32> to vector<512x128xf32>
    %27 = arith.addf %24, %26 : vector<512x128xf32>
    %cst_23 = arith.constant 0.000000e+00 : f32
    %28 = vector.broadcast %cst_23 : f32 to vector<512x128xf32>
    %29 = arith.maximumf %27, %28 : vector<512x128xf32>
    %30 = arith.truncf %29 : vector<512x128xf32> to vector<512x128xbf16>
    %c0_24 = arith.constant 0 : index
    %c0_25 = arith.constant 0 : index
    %31 = vector.load %arg8[%c0_24, %c0_25] : memref<128x32xbf16, #tpu.memory_space<vmem>>, vector<128x32xbf16>
    %cst_26 = arith.constant dense<0.000000e+00> : vector<512x32xf32>
    %32 = tpu.matmul %30, %31, %cst_26 {dimension_numbers = #tpu.dot_dimension_numbers<[1], [0], [0], [1], [0, 0, 1, 1], [], []>} : vector<512x128xbf16>, vector<128x32xbf16>, vector<512x32xf32> -> vector<512x32xf32>
    %c0_27 = arith.constant 0 : index
    %c0_28 = arith.constant 0 : index
    %33 = vector.load %arg9[%c0_27, %c0_28] : memref<1x32xf32, #tpu.memory_space<vmem>>, vector<1x32xf32>
    %34 = vector.broadcast %33 : vector<1x32xf32> to vector<512x32xf32>
    %35 = arith.addf %32, %34 : vector<512x32xf32>
    %cst_29 = arith.constant 0.000000e+00 : f32
    %36 = vector.broadcast %cst_29 : f32 to vector<512x32xf32>
    %37 = arith.subf %36, %35 : vector<512x32xf32>
    %38 = math.exp %37 : vector<512x32xf32>
    %cst_30 = arith.constant 1.000000e+00 : f32
    %39 = vector.broadcast %cst_30 : f32 to vector<512x32xf32>
    %40 = arith.addf %39, %38 : vector<512x32xf32>
    %41 = tpu.reciprocal %40 {approx = true} : vector<512x32xf32> -> vector<512x32xf32>
    %42 = arith.truncf %41 : vector<512x32xf32> to vector<512x32xbf16>
    %c0_31 = arith.constant 0 : index
    %c0_32 = arith.constant 0 : index
    %43 = vector.load %arg3[%c0_31, %c0_32] : memref<256x256xbf16, #tpu.memory_space<vmem>>, vector<256x256xbf16>
    %44 = vector.extract_strided_slice %42 {offsets = [0, 0], sizes = [256, 32], strides = [1, 1]} : vector<512x32xbf16> to vector<256x32xbf16>
    %cst_33 = arith.constant dense<0.000000e+00> : vector<256x32xf32>
    %45 = tpu.matmul %43, %44, %cst_33 {dimension_numbers = #tpu.dot_dimension_numbers<[1], [0], [0], [1], [0, 0, 1, 1], [], []>} : vector<256x256xbf16>, vector<256x32xbf16>, vector<256x32xf32> -> vector<256x32xf32>
    %c0_34 = arith.constant 0 : index
    %c0_35 = arith.constant 0 : index
    %c0_36 = arith.constant 0 : index
    %46 = vector.load %arg2[%c0_34, %c0_35, %c0_36] : memref<2x256x32xbf16, #tpu.memory_space<vmem>>, vector<1x256x32xbf16>
    %47 = vector.shape_cast %46 : vector<1x256x32xbf16> to vector<256x32xbf16>
    %48 = arith.extf %47 : vector<256x32xbf16> to vector<256x32xf32>
    %49 = arith.mulf %45, %48 : vector<256x32xf32>
    %c0_37 = arith.constant 0 : index
    %c0_38 = arith.constant 0 : index
    %c0_39 = arith.constant 0 : index
    %50 = vector.load %arg10[%c0_37, %c0_38, %c0_39] : memref<2x256x32xf32, #tpu.memory_space<vmem>>, vector<1x256x32xf32>
    %51 = vector.shape_cast %50 : vector<1x256x32xf32> to vector<256x32xf32>
    %52 = vector.shape_cast %49 : vector<256x32xf32> to vector<1x256x32xf32>
    tpu.vector_store %arg10[%c0_37, %c0_38, %c0_39], %52 {strides = array<i32>} : memref<2x256x32xf32, #tpu.memory_space<vmem>>, vector<1x256x32xf32>,
    %53 = vector.extract_strided_slice %42 {offsets = [256, 0], sizes = [256, 32], strides = [1, 1]} : vector<512x32xbf16> to vector<256x32xbf16>
    %cst_40 = arith.constant dense<0.000000e+00> : vector<256x32xf32>
    %54 = tpu.matmul %43, %53, %cst_40 {dimension_numbers = #tpu.dot_dimension_numbers<[1], [0], [0], [1], [0, 0, 1, 1], [], []>} : vector<256x256xbf16>, vector<256x32xbf16>, vector<256x32xf32> -> vector<256x32xf32>
    %c1_41 = arith.constant 1 : index
    %c0_42 = arith.constant 0 : index
    %c0_43 = arith.constant 0 : index
    %55 = vector.load %arg2[%c1_41, %c0_42, %c0_43] : memref<2x256x32xbf16, #tpu.memory_space<vmem>>, vector<1x256x32xbf16>
    %56 = vector.shape_cast %55 : vector<1x256x32xbf16> to vector<256x32xbf16>
    %57 = arith.extf %56 : vector<256x32xbf16> to vector<256x32xf32>
    %58 = arith.mulf %54, %57 : vector<256x32xf32>
    %c1_44 = arith.constant 1 : index
    %c0_45 = arith.constant 0 : index
    %c0_46 = arith.constant 0 : index
    %59 = vector.load %arg10[%c1_44, %c0_45, %c0_46] : memref<2x256x32xf32, #tpu.memory_space<vmem>>, vector<1x256x32xf32>
    %60 = vector.shape_cast %59 : vector<1x256x32xf32> to vector<256x32xf32>
    %61 = vector.shape_cast %58 : vector<256x32xf32> to vector<1x256x32xf32>
    tpu.vector_store %arg10[%c1_44, %c0_45, %c0_46], %61 {strides = array<i32>} : memref<2x256x32xf32, #tpu.memory_space<vmem>>, vector<1x256x32xf32>,
    return
  }
  func.func @transform_0(%arg0: i32) -> (i32, i32, i32) {
    %c0_i32 = arith.constant 0 : i32
    %c0_i32_0 = arith.constant 0 : i32
    %c0_i32_1 = arith.constant 0 : i32
    return %arg0, %c0_i32, %c0_i32_0 : i32, i32, i32
  }
  func.func @transform_1(%arg0: i32) -> (i32, i32, i32) {
    %c0_i32 = arith.constant 0 : i32
    %c0_i32_0 = arith.constant 0 : i32
    %c0_i32_1 = arith.constant 0 : i32
    return %arg0, %c0_i32, %c0_i32_0 : i32, i32, i32
  }
  func.func @transform_2(%arg0: i32) -> (i32, i32) {
    %c0_i32 = arith.constant 0 : i32
    %c0_i32_0 = arith.constant 0 : i32
    %c0_i32_1 = arith.constant 0 : i32
    return %c0_i32, %c0_i32_0 : i32, i32
  }
  func.func @transform_3(%arg0: i32) -> (i32, i32, i32) {
    %c0_i32 = arith.constant 0 : i32
    %c0_i32_0 = arith.constant 0 : i32
    %c0_i32_1 = arith.constant 0 : i32
    %c0_i32_2 = arith.constant 0 : i32
    return %c0_i32, %c0_i32_0, %c0_i32_1 : i32, i32, i32
  }
  func.func @transform_4(%arg0: i32) -> (i32, i32) {
    %c0_i32 = arith.constant 0 : i32
    %c0_i32_0 = arith.constant 0 : i32
    %c0_i32_1 = arith.constant 0 : i32
    return %c0_i32, %c0_i32_0 : i32, i32
  }
  func.func @transform_5(%arg0: i32) -> (i32, i32) {
    %c0_i32 = arith.constant 0 : i32
    %c0_i32_0 = arith.constant 0 : i32
    %c0_i32_1 = arith.constant 0 : i32
    return %c0_i32, %c0_i32_0 : i32, i32
  }
  func.func @transform_6(%arg0: i32) -> (i32, i32) {
    %c0_i32 = arith.constant 0 : i32
    %c0_i32_0 = arith.constant 0 : i32
    %c0_i32_1 = arith.constant 0 : i32
    return %c0_i32, %c0_i32_0 : i32, i32
  }
  func.func @transform_7(%arg0: i32) -> (i32, i32) {
    %c0_i32 = arith.constant 0 : i32
    %c0_i32_0 = arith.constant 0 : i32
    %c0_i32_1 = arith.constant 0 : i32
    return %c0_i32, %c0_i32_0 : i32, i32
  }
  func.func @transform_8(%arg0: i32) -> (i32, i32) {
    %c0_i32 = arith.constant 0 : i32
    %c0_i32_0 = arith.constant 0 : i32
    %c0_i32_1 = arith.constant 0 : i32
    return %c0_i32, %c0_i32_0 : i32, i32
  }
  func.func @transform_9(%arg0: i32) -> (i32, i32, i32) {
    %c0_i32 = arith.constant 0 : i32
    %c0_i32_0 = arith.constant 0 : i32
    %c0_i32_1 = arith.constant 0 : i32
    return %arg0, %c0_i32, %c0_i32_0 : i32, i32, i32
  }
}

</mosaic_0001>

<llo_original>
// kernel: laconv_forward.1
$region0: #{laconv_forward.1}
  #allocation0 [shape = 'u32[]', space=smem, size = 0x4, offset = 0x4, fixed_abs, tag = 'smem constant byte address 0x4 - core index']
  #allocation1 [shape = 'u32[144,128]{1,0:T(1,128)}', space=vmem, size = 0x12000, scoped, tag = 'internal scratch']
  %s0 = inlined_call_operand.vmem [shape: bf16[4,288,128], index: 0, kind: input, shape index: {}]
  %s1 = inlined_call_operand.vmem [shape: bf16[4,256,32], index: 1, kind: input, shape index: {}]
  %s2 = inlined_call_operand.vmem [shape: bf16[256,256], index: 2, kind: input, shape index: {}]
  %s3 = inlined_call_operand.vmem [shape: bf16[3,128,128], index: 3, kind: input, shape index: {}]
  %s4 = inlined_call_operand.vmem [shape: f32[1,128], index: 4, kind: input, shape index: {}]
  %s5 = inlined_call_operand.vmem [shape: bf16[128,128], index: 5, kind: input, shape index: {}]
  %s6 = inlined_call_operand.vmem [shape: f32[1,128], index: 6, kind: input, shape index: {}]
  %s7 = inlined_call_operand.vmem [shape: bf16[128,32], index: 7, kind: input, shape index: {}]
  %s8 = inlined_call_operand.vmem [shape: f32[1,32], index: 8, kind: input, shape index: {}]
  %s9 = inlined_call_operand.vmem [shape: f32[4,256,32], index: 9, kind: output, shape index: {}]
  %s10 = sld [smem:[#allocation0]]
  $region69: #{laconv_forward.1} parent=0
    _
  %s12 = ssub.s32 1, %s10
  %s13 = scalar_select 0, %s12, %s10
  loop: start=0, step=1, limit=4
  $region2: #{laconv_forward.1} parent=0 // loop_pre_header
    _
  $region3: #{laconv_forward.1} parent=0 // loop_header
    %s15 = sphi 0, %s19
    %p16 = scmp.ge.s32.totalorder %s15, 4
    %s25 = sphi 0, %s27
    %s28 = sphi 0, %s25
    %s29 = sphi 0, %s28
    %s45 = sphi 0, %s29
    %s51 = sphi 0, %s53
    %s54 = sphi 0, %s51
    %s55 = sphi 0, %s54
    %s71 = sphi 0, %s55
    %s75 = sphi 0, %s75
    %s77 = sphi 0, %s75
    %s78 = sphi 0, %s77
    %s92 = sphi 0, %s78
    %s96 = sphi 0, %s96
    %s98 = sphi 0, %s96
    %s99 = sphi 0, %s98
    %s113 = sphi 0, %s99
    %s117 = sphi 0, %s117
    %s119 = sphi 0, %s117
    %s120 = sphi 0, %s119
    %s134 = sphi 0, %s120
    %s138 = sphi 0, %s138
    %s140 = sphi 0, %s138
    %s141 = sphi 0, %s140
    %s155 = sphi 0, %s141
    %s159 = sphi 0, %s159
    %s161 = sphi 0, %s159
    %s162 = sphi 0, %s161
    %s176 = sphi 0, %s162
    %s180 = sphi 0, %s180
    %s182 = sphi 0, %s180
    %s183 = sphi 0, %s182
    %s197 = sphi 0, %s183
    %s201 = sphi 0, %s201
    %s203 = sphi 0, %s201
    %s204 = sphi 0, %s203
    %s218 = sphi 0, %s204
    %s224 = sphi 0, %s226
    %s227 = sphi 0, %s224
    %s228 = sphi 0, %s227
    %s244 = sphi 0, %s228
  $region4: #{laconv_forward.1} parent=0 // loop_header_branch
    %18 = sbr.rel (%p16) target = $region8
  $region5: #{laconv_forward.1} parent=0 // loop_body
    %s20 = ssub.s32 %s15, 1
    %s21 = ssub.s32 %s15, 2
    %s22 = sadd.s32 %s15, 1
    %s23 = ssub.s32 %s15, %s22
    %p24 = scmp.eq.s32.totalorder %s23, 0
    %s26 = sadd.s32 %s25, 1
    %s27 = scalar_select %p24, %s25, %s26
    %p30 = pneg %p24
    %p31 = scmp.eq.s32.totalorder %s15, 1
    %p32 = por %p30, %p31
    %p33 = scmp.ne.s32.totalorder %s25, %s28
    %p34 = scmp.eq.s32.totalorder %s15, 0
    %p35 = por %p33, %p34
    %p36 = scmp.ne.s32.totalorder %s25, %s28
    %p37 = scmp.eq.s32.totalorder %s20, 1
    %p38 = por %p36, %p37
    %p39 = scmp.ne.s32.totalorder %s28, %s29
    %p40 = scmp.eq.s32.totalorder %s20, 0
    %p41 = por %p39, %p40
    %p42 = scmp.ne.s32.totalorder %s28, %s29
    %p43 = scmp.eq.s32.totalorder %s21, 1
    %p44 = por %p42, %p43
    %p46 = scmp.ne.s32.totalorder %s29, %s45
    %p47 = scmp.eq.s32.totalorder %s21, 0
    %p48 = por %p46, %p47
    %s49 = ssub.s32 %s15, %s22
    %p50 = scmp.eq.s32.totalorder %s49, 0
    %s52 = sadd.s32 %s51, 1
    %s53 = scalar_select %p50, %s51, %s52
    %p56 = pneg %p50
    %p57 = scmp.eq.s32.totalorder %s15, 1
    %p58 = por %p56, %p57
    %p59 = scmp.ne.s32.totalorder %s51, %s54
    %p60 = scmp.eq.s32.totalorder %s15, 0
    %p61 = por %p59, %p60
    %p62 = scmp.ne.s32.totalorder %s51, %s54
    %p63 = scmp.eq.s32.totalorder %s20, 1
    %p64 = por %p62, %p63
    %p65 = scmp.ne.s32.totalorder %s54, %s55
    %p66 = scmp.eq.s32.totalorder %s20, 0
    %p67 = por %p65, %p66
    %p68 = scmp.ne.s32.totalorder %s54, %s55
    %p69 = scmp.eq.s32.totalorder %s21, 1
    %p70 = por %p68, %p69
    %p72 = scmp.ne.s32.totalorder %s55, %s71
    %p73 = scmp.eq.s32.totalorder %s21, 0
    %p74 = por %p72, %p73
    %s76 = sadd.s32 %s75, 1
    %p79 = scmp.eq.s32.totalorder %s15, 1
    %p80 = scmp.ne.s32.totalorder %s75, %s77
    %p81 = scmp.eq.s32.totalorder %s15, 0
    %p82 = por %p80, %p81
    %p83 = scmp.ne.s32.totalorder %s75, %s77
    %p84 = scmp.eq.s32.totalorder %s20, 1
    %p85 = por %p83, %p84
    %p86 = scmp.ne.s32.totalorder %s77, %s78
    %p87 = scmp.eq.s32.totalorder %s20, 0
    %p88 = por %p86, %p87
    %p89 = scmp.ne.s32.totalorder %s77, %s78
    %p90 = scmp.eq.s32.totalorder %s21, 1
    %p91 = por %p89, %p90
    %p93 = scmp.ne.s32.totalorder %s78, %s92
    %p94 = scmp.eq.s32.totalorder %s21, 0
    %p95 = por %p93, %p94
    %s97 = sadd.s32 %s96, 1
    %p100 = scmp.eq.s32.totalorder %s15, 1
    %p101 = scmp.ne.s32.totalorder %s96, %s98
    %p102 = scmp.eq.s32.totalorder %s15, 0
    %p103 = por %p101, %p102
    %p104 = scmp.ne.s32.totalorder %s96, %s98
    %p105 = scmp.eq.s32.totalorder %s20, 1
    %p106 = por %p104, %p105
    %p107 = scmp.ne.s32.totalorder %s98, %s99
    %p108 = scmp.eq.s32.totalorder %s20, 0
    %p109 = por %p107, %p108
    %p110 = scmp.ne.s32.totalorder %s98, %s99
    %p111 = scmp.eq.s32.totalorder %s21, 1
    %p112 = por %p110, %p111
    %p114 = scmp.ne.s32.totalorder %s99, %s113
    %p115 = scmp.eq.s32.totalorder %s21, 0
    %p116 = por %p114, %p115
    %s118 = sadd.s32 %s117, 1
    %p121 = scmp.eq.s32.totalorder %s15, 1
    %p122 = scmp.ne.s32.totalorder %s117, %s119
    %p123 = scmp.eq.s32.totalorder %s15, 0
    %p124 = por %p122, %p123
    %p125 = scmp.ne.s32.totalorder %s117, %s119
    %p126 = scmp.eq.s32.totalorder %s20, 1
    %p127 = por %p125, %p126
    %p128 = scmp.ne.s32.totalorder %s119, %s120
    %p129 = scmp.eq.s32.totalorder %s20, 0
    %p130 = por %p128, %p129
    %p131 = scmp.ne.s32.totalorder %s119, %s120
    %p132 = scmp.eq.s32.totalorder %s21, 1
    %p133 = por %p131, %p132
    %p135 = scmp.ne.s32.totalorder %s120, %s134
    %p136 = scmp.eq.s32.totalorder %s21, 0
    %p137 = por %p135, %p136
    %s139 = sadd.s32 %s138, 1
    %p142 = scmp.eq.s32.totalorder %s15, 1
    %p143 = scmp.ne.s32.totalorder %s138, %s140
    %p144 = scmp.eq.s32.totalorder %s15, 0
    %p145 = por %p143, %p144
    %p146 = scmp.ne.s32.totalorder %s138, %s140
    %p147 = scmp.eq.s32.totalorder %s20, 1
    %p148 = por %p146, %p147
    %p149 = scmp.ne.s32.totalorder %s140, %s141
    %p150 = scmp.eq.s32.totalorder %s20, 0
    %p151 = por %p149, %p150
    %p152 = scmp.ne.s32.totalorder %s140, %s141
    %p153 = scmp.eq.s32.totalorder %s21, 1
    %p154 = por %p152, %p153
    %p156 = scmp.ne.s32.totalorder %s141, %s155
    %p157 = scmp.eq.s32.totalorder %s21, 0
    %p158 = por %p156, %p157
    %s160 = sadd.s32 %s159, 1
    %p163 = scmp.eq.s32.totalorder %s15, 1
    %p164 = scmp.ne.s32.totalorder %s159, %s161
    %p165 = scmp.eq.s32.totalorder %s15, 0
    %p166 = por %p164, %p165
    %p167 = scmp.ne.s32.totalorder %s159, %s161
    %p168 = scmp.eq.s32.totalorder %s20, 1
    %p169 = por %p167, %p168
    %p170 = scmp.ne.s32.totalorder %s161, %s162
    %p171 = scmp.eq.s32.totalorder %s20, 0
    %p172 = por %p170, %p171
    %p173 = scmp.ne.s32.totalorder %s161, %s162
    %p174 = scmp.eq.s32.totalorder %s21, 1
    %p175 = por %p173, %p174
    %p177 = scmp.ne.s32.totalorder %s162, %s176
    %p178 = scmp.eq.s32.totalorder %s21, 0
    %p179 = por %p177, %p178
    %s181 = sadd.s32 %s180, 1
    %p184 = scmp.eq.s32.totalorder %s15, 1
    %p185 = scmp.ne.s32.totalorder %s180, %s182
    %p186 = scmp.eq.s32.totalorder %s15, 0
    %p187 = por %p185, %p186
    %p188 = scmp.ne.s32.totalorder %s180, %s182
    %p189 = scmp.eq.s32.totalorder %s20, 1
    %p190 = por %p188, %p189
    %p191 = scmp.ne.s32.totalorder %s182, %s183
    %p192 = scmp.eq.s32.totalorder %s20, 0
    %p193 = por %p191, %p192
    %p194 = scmp.ne.s32.totalorder %s182, %s183
    %p195 = scmp.eq.s32.totalorder %s21, 1
    %p196 = por %p194, %p195
    %p198 = scmp.ne.s32.totalorder %s183, %s197
    %p199 = scmp.eq.s32.totalorder %s21, 0
    %p200 = por %p198, %p199
    %s202 = sadd.s32 %s201, 1
    %p205 = scmp.eq.s32.totalorder %s15, 1
    %p206 = scmp.ne.s32.totalorder %s201, %s203
    %p207 = scmp.eq.s32.totalorder %s15, 0
    %p208 = por %p206, %p207
    %p209 = scmp.ne.s32.totalorder %s201, %s203
    %p210 = scmp.eq.s32.totalorder %s20, 1
    %p211 = por %p209, %p210
    %p212 = scmp.ne.s32.totalorder %s203, %s204
    %p213 = scmp.eq.s32.totalorder %s20, 0
    %p214 = por %p212, %p213
    %p215 = scmp.ne.s32.totalorder %s203, %s204
    %p216 = scmp.eq.s32.totalorder %s21, 1
    %p217 = por %p215, %p216
    %p219 = scmp.ne.s32.totalorder %s204, %s218
    %p220 = scmp.eq.s32.totalorder %s21, 0
    %p221 = por %p219, %p220
    %s222 = ssub.s32 %s15, %s22
    %p223 = scmp.eq.s32.totalorder %s222, 0
    %s225 = sadd.s32 %s224, 1
    %s226 = scalar_select %p223, %s224, %s225
    %p229 = pneg %p223
    %p230 = scmp.eq.s32.totalorder %s15, 1
    %p231 = por %p229, %p230
    %p232 = scmp.ne.s32.totalorder %s224, %s227
    %p233 = scmp.eq.s32.totalorder %s15, 0
    %p234 = por %p232, %p233
    %p235 = scmp.ne.s32.totalorder %s224, %s227
    %p236 = scmp.eq.s32.totalorder %s20, 1
    %p237 = por %p235, %p236
    %p238 = scmp.ne.s32.totalorder %s227, %s228
    %p239 = scmp.eq.s32.totalorder %s20, 0
    %p240 = por %p238, %p239
    %p241 = scmp.ne.s32.totalorder %s227, %s228
    %p242 = scmp.eq.s32.totalorder %s21, 1
    %p243 = por %p241, %p242
    %p245 = scmp.ne.s32.totalorder %s228, %s244
    %p246 = scmp.eq.s32.totalorder %s21, 0
    %p247 = por %p245, %p246
    %p248 = scmp.le.s32.totalorder 1, %s15
    %p249 = scmp.lt.s32.totalorder %s15, 3
    %p250 = pnand %p248, %p249
    %p251 = pneg %p250
    // Predicated region
    $region9: #{laconv_forward.1} parent=5 // pred_check
      _
    $region10: #{laconv_forward.1} parent=5 // pred_check_branch
      %253 = sbr.rel (%p250) target = $region12
    $region11: #{laconv_forward.1} parent=5 // pred_region
      %s254 = ssub.s32 %s15, 1
      // Predicated region
      $region13: #{laconv_forward.1} parent=11 // pred_check
        %p255 = pneg %p88
      $region14: #{laconv_forward.1} parent=11 // pred_check_branch
        %257 = sbr.rel (%p255) target = $region16
      $region15: #{laconv_forward.1} parent=11 // pred_region
        _
      $region16: #{laconv_forward.1} parent=11 // pred_fallthru
        _
      // Predicated region
      $region17: #{laconv_forward.1} parent=11 // pred_check
        %p258 = pneg %p109
      $region18: #{laconv_forward.1} parent=11 // pred_check_branch
        %260 = sbr.rel (%p258) target = $region20
      $region19: #{laconv_forward.1} parent=11 // pred_region
        _
      $region20: #{laconv_forward.1} parent=11 // pred_fallthru
        _
      // Predicated region
      $region21: #{laconv_forward.1} parent=11 // pred_check
        %p261 = pneg %p130
      $region22: #{laconv_forward.1} parent=11 // pred_check_branch
        %263 = sbr.rel (%p261) target = $region24
      $region23: #{laconv_forward.1} parent=11 // pred_region
        _
      $region24: #{laconv_forward.1} parent=11 // pred_fallthru
        _
      // Predicated region
      $region25: #{laconv_forward.1} parent=11 // pred_check
        %p264 = pneg %p151
      $region26: #{laconv_forward.1} parent=11 // pred_check_branch
        %266 = sbr.rel (%p264) target = $region28
      $region27: #{laconv_forward.1} parent=11 // pred_region
        _
      $region28: #{laconv_forward.1} parent=11 // pred_fallthru
        _
      // Predicated region
      $region29: #{laconv_forward.1} parent=11 // pred_check
        %p267 = pneg %p172
      $region30: #{laconv_forward.1} parent=11 // pred_check_branch
        %269 = sbr.rel (%p267) target = $region32
      $region31: #{laconv_forward.1} parent=11 // pred_region
        _
      $region32: #{laconv_forward.1} parent=11 // pred_fallthru
        _
      // Predicated region
      $region33: #{laconv_forward.1} parent=11 // pred_check
        %p270 = pneg %p193
      $region34: #{laconv_forward.1} parent=11 // pred_check_branch
        %272 = sbr.rel (%p270) target = $region36
      $region35: #{laconv_forward.1} parent=11 // pred_region
        _
      $region36: #{laconv_forward.1} parent=11 // pred_fallthru
        _
      // Predicated region
      $region37: #{laconv_forward.1} parent=11 // pred_check
        %p273 = pneg %p214
      $region38: #{laconv_forward.1} parent=11 // pred_check_branch
        %275 = sbr.rel (%p273) target = $region40
      $region39: #{laconv_forward.1} parent=11 // pred_region
        _
      $region40: #{laconv_forward.1} parent=11 // pred_fallthru
        _
    $region12: #{laconv_forward.1} parent=5 // pred_fallthru
      _
    %p276 = scmp.lt.s32.totalorder %s15, 2
    // Predicated region
    $region41: #{laconv_forward.1} parent=5 // pred_check
      %p277 = pneg %p276
    $region42: #{laconv_forward.1} parent=5 // pred_check_branch
      %279 = sbr.rel (%p277) target = $region44
    $region43: #{laconv_forward.1} parent=5 // pred_region
      // Predicated region
      $region45: #{laconv_forward.1} parent=43 // pred_check
        %p280 = pneg %p35
      $region46: #{laconv_forward.1} parent=43 // pred_check_branch
        %282 = sbr.rel (%p280) target = $region48
      $region47: #{laconv_forward.1} parent=43 // pred_region
        %s283 = smul.u32 2, %s15
        %p284 = scmp.lt.s32.totalorder %s283, 3
        %s285 = scalar_select %p284, %s283, 3
        %s286 = smul.addr %s285, 36
        %s287 = smul.addr %s286, 4
        %s288 = scalar_lea.vmem %s0, %s287
        %s289 = smul.u32 2, %s15
      $region48: #{laconv_forward.1} parent=43 // pred_fallthru
        _
      // Predicated region
      $region49: #{laconv_forward.1} parent=43 // pred_check
        %p290 = pneg %p61
      $region50: #{laconv_forward.1} parent=43 // pred_check_branch
        %292 = sbr.rel (%p290) target = $region52
      $region51: #{laconv_forward.1} parent=43 // pred_region
        %s293 = smul.u32 2, %s15
        %p294 = scmp.lt.s32.totalorder %s293, 3
        %s295 = scalar_select %p294, %s293, 3
        %s296 = smul.addr %s295, 32
        %s297 = smul.addr %s296, 4
        %s298 = scalar_lea.vmem %s1, %s297
        %s299 = smul.u32 2, %s15
      $region52: #{laconv_forward.1} parent=43 // pred_fallthru
        _
    $region44: #{laconv_forward.1} parent=5 // pred_fallthru
      _
    %p300 = scmp.le.s32.totalorder 1, %s15
    %p301 = scmp.lt.s32.totalorder %s15, 3
    %p302 = pnand %p300, %p301
    %p303 = pneg %p302
    // Predicated region
    $region53: #{laconv_forward.1} parent=5 // pred_check
      _
    $region54: #{laconv_forward.1} parent=5 // pred_check_branch
      %305 = sbr.rel (%p302) target = $region56
    $region55: #{laconv_forward.1} parent=5 // pred_region
      %s306 = ssub.s32 %s15, 1
      %s307 = smul.u32 2, %s20
      %p308 = scmp.lt.s32.totalorder %s307, 3
      %s309 = scalar_select %p308, %s307, 3
      %s310 = smul.addr %s309, 36
      %s311 = smul.addr %s310, 4
      %s312 = scalar_lea.vmem %s0, %s311
      %p313 = pneg %p41
      %p314 = pneg %p38
      %s315 = smul.u32 2, %s20
      %p316 = scmp.lt.s32.totalorder %s315, 3
      %s317 = scalar_select %p316, %s315, 3
      %s318 = smul.addr %s317, 32
      %s319 = smul.addr %s318, 4
      %s320 = scalar_lea.vmem %s1, %s319
      %p321 = pneg %p67
      %p322 = pneg %p64
      %p323 = pneg %p88
      %p324 = pneg %p85
      %p325 = pneg %p109
      %p326 = pneg %p106
      %p327 = pneg %p130
      %p328 = pneg %p127
      %p329 = pneg %p151
      %p330 = pneg %p148
      %p331 = pneg %p172
      %p332 = pneg %p169
      %p333 = pneg %p193
      %p334 = pneg %p190
      %p335 = pneg %p214
      %p336 = pneg %p211
      %p337 = pneg %p240
      %p338 = pneg %p237
      %s339 = smul.u32 2, %s20
      %p340 = scmp.lt.s32.totalorder %s339, 3
      %s341 = scalar_select %p340, %s339, 3
      %s342 = smul.addr %s341, 32
      %s343 = smul.addr %s342, 8
      %s344 = scalar_lea.vmem %s9, %s343
      %s345 = smul.u32 2, %s20
      %p346 = scmp.lt.s32.totalorder %s345, 3
      %s347 = scalar_select %p346, %s345, 3
      %s348 = smul.addr %s347, 36
      %s349 = smul.addr %s348, 4
      %s350 = scalar_lea.vmem %s0, %s349
      %s351 = smul.u32 2, %s20
      %s352 = smul.u32 2, %s20
      %p353 = scmp.lt.s32.totalorder %s352, 3
      %s354 = scalar_select %p353, %s352, 3
      %s355 = smul.addr %s354, 32
      %s356 = smul.addr %s355, 4
      %s357 = scalar_lea.vmem %s1, %s356
      %s358 = smul.u32 2, %s20
      %s359 = smul.u32 2, %s20
      %p360 = scmp.lt.s32.totalorder %s359, 3
      %s361 = scalar_select %p360, %s359, 3
      %s362 = smul.addr %s361, 32
      %s363 = smul.addr %s362, 8
      %s364 = scalar_lea.vmem %s9, %s363
      %s365 = smul.u32 2, %s20
      %v367 = vld [vmem:[%s350] sm:$0xf]
      %v368 = vld [vmem:[%s350 + $0x4] sm:$0xf]
      %v369 = vld [vmem:[%s350 + $0x8] sm:$0xf]
      %v370 = vld [vmem:[%s350 + $0xc] sm:$0xf]
      %v371 = vld [vmem:[%s350 + $0x10] sm:$0xf]
      %v372 = vld [vmem:[%s350 + $0x14] sm:$0xf]
      %v373 = vld [vmem:[%s350 + $0x18] sm:$0xf]
      %v374 = vld [vmem:[%s350 + $0x1c] sm:$0xf]
      %v375 = vld [vmem:[%s350 + $0x20] sm:$0xf]
      %v376 = vld [vmem:[%s350 + $0x24] sm:$0xf]
      %v377 = vld [vmem:[%s350 + $0x28] sm:$0xf]
      %v378 = vld [vmem:[%s350 + $0x2c] sm:$0xf]
      %v379 = vld [vmem:[%s350 + $0x30] sm:$0xf]
      %v380 = vld [vmem:[%s350 + $0x34] sm:$0xf]
      %v381 = vld [vmem:[%s350 + $0x38] sm:$0xf]
      %v382 = vld [vmem:[%s350 + $0x3c] sm:$0xf]
      %v383 = vld [vmem:[%s350 + $0x40] sm:$0xf]
      %v384 = vld [vmem:[%s350 + $0x44] sm:$0xf]
      %v385 = vld [vmem:[%s350 + $0x48] sm:$0xf]
      %v386 = vld [vmem:[%s350 + $0x4c] sm:$0xf]
      %v387 = vld [vmem:[%s350 + $0x50] sm:$0xf]
      %v388 = vld [vmem:[%s350 + $0x54] sm:$0xf]
      %v389 = vld [vmem:[%s350 + $0x58] sm:$0xf]
      %v390 = vld [vmem:[%s350 + $0x5c] sm:$0xf]
      %v391 = vld [vmem:[%s350 + $0x60] sm:$0xf]
      %v392 = vld [vmem:[%s350 + $0x64] sm:$0xf]
      %v393 = vld [vmem:[%s350 + $0x68] sm:$0xf]
      %v394 = vld [vmem:[%s350 + $0x6c] sm:$0xf]
      %v395 = vld [vmem:[%s350 + $0x70] sm:$0xf]
      %v396 = vld [vmem:[%s350 + $0x74] sm:$0xf]
      %v397 = vld [vmem:[%s350 + $0x78] sm:$0xf]
      %v398 = vld [vmem:[%s350 + $0x7c] sm:$0xf]
      %v399 = vld [vmem:[%s350 + $0x90] sm:$0xf]
      %v400 = vld [vmem:[%s350 + $0x94] sm:$0xf]
      %v401 = vld [vmem:[%s350 + $0x98] sm:$0xf]
      %v402 = vld [vmem:[%s350 + $0x9c] sm:$0xf]
      %v403 = vld [vmem:[%s350 + $0xa0] sm:$0xf]
      %v404 = vld [vmem:[%s350 + $0xa4] sm:$0xf]
      %v405 = vld [vmem:[%s350 + $0xa8] sm:$0xf]
      %v406 = vld [vmem:[%s350 + $0xac] sm:$0xf]
      %v407 = vld [vmem:[%s350 + $0xb0] sm:$0xf]
      %v408 = vld [vmem:[%s350 + $0xb4] sm:$0xf]
      %v409 = vld [vmem:[%s350 + $0xb8] sm:$0xf]
      %v410 = vld [vmem:[%s350 + $0xbc] sm:$0xf]
      %v411 = vld [vmem:[%s350 + $0xc0] sm:$0xf]
      %v412 = vld [vmem:[%s350 + $0xc4] sm:$0xf]
      %v413 = vld [vmem:[%s350 + $0xc8] sm:$0xf]
      %v414 = vld [vmem:[%s350 + $0xcc] sm:$0xf]
      %v415 = vld [vmem:[%s350 + $0xd0] sm:$0xf]
      %v416 = vld [vmem:[%s350 + $0xd4] sm:$0xf]
      %v417 = vld [vmem:[%s350 + $0xd8] sm:$0xf]
      %v418 = vld [vmem:[%s350 + $0xdc] sm:$0xf]
      %v419 = vld [vmem:[%s350 + $0xe0] sm:$0xf]
      %v420 = vld [vmem:[%s350 + $0xe4] sm:$0xf]
      %v421 = vld [vmem:[%s350 + $0xe8] sm:$0xf]
      %v422 = vld [vmem:[%s350 + $0xec] sm:$0xf]
      %v423 = vld [vmem:[%s350 + $0xf0] sm:$0xf]
      %v424 = vld [vmem:[%s350 + $0xf4] sm:$0xf]
      %v425 = vld [vmem:[%s350 + $0xf8] sm:$0xf]
      %v426 = vld [vmem:[%s350 + $0xfc] sm:$0xf]
      %v427 = vld [vmem:[%s350 + $0x100] sm:$0xf]
      %v428 = vld [vmem:[%s350 + $0x104] sm:$0xf]
      %v429 = vld [vmem:[%s350 + $0x108] sm:$0xf]
      %v430 = vld [vmem:[%s350 + $0x10c] sm:$0xf]
      %v431 = vld [vmem:[%s3] sm:$0xf]
      %v432 = vld [vmem:[%s3 + $0x4] sm:$0xf]
      %v433 = vld [vmem:[%s3 + $0x8] sm:$0xf]
      %v434 = vld [vmem:[%s3 + $0xc] sm:$0xf]
      %v435 = vld [vmem:[%s3 + $0x10] sm:$0xf]
      %v436 = vld [vmem:[%s3 + $0x14] sm:$0xf]
      %v437 = vld [vmem:[%s3 + $0x18] sm:$0xf]
      %v438 = vld [vmem:[%s3 + $0x1c] sm:$0xf]
      %v439 = vld [vmem:[%s3 + $0x20] sm:$0xf]
      %v440 = vld [vmem:[%s3 + $0x24] sm:$0xf]
      %v441 = vld [vmem:[%s3 + $0x28] sm:$0xf]
      %v442 = vld [vmem:[%s3 + $0x2c] sm:$0xf]
      %v443 = vld [vmem:[%s3 + $0x30] sm:$0xf]
      %v444 = vld [vmem:[%s3 + $0x34] sm:$0xf]
      %v445 = vld [vmem:[%s3 + $0x38] sm:$0xf]
      %v446 = vld [vmem:[%s3 + $0x3c] sm:$0xf]
      %v447 = vld [vmem:[%s350 + $0x80] sm:$0xf]
      %v448 = vld [vmem:[%s350 + $0x84] sm:$0xf]
      %v449 = vld [vmem:[%s350 + $0x110] sm:$0xf]
      %v450 = vld [vmem:[%s350 + $0x114] sm:$0xf]
      %s451 = scalar_lea.vmem %s3, 64
      %v452 = vld [vmem:[%s451] sm:$0xf]
      %v453 = vld [vmem:[%s451 + $0x4] sm:$0xf]
      %v454 = vld [vmem:[%s451 + $0x8] sm:$0xf]
      %v455 = vld [vmem:[%s451 + $0xc] sm:$0xf]
      %v456 = vld [vmem:[%s451 + $0x10] sm:$0xf]
      %v457 = vld [vmem:[%s451 + $0x14] sm:$0xf]
      %v458 = vld [vmem:[%s451 + $0x18] sm:$0xf]
      %v459 = vld [vmem:[%s451 + $0x1c] sm:$0xf]
      %v460 = vld [vmem:[%s451 + $0x20] sm:$0xf]
      %v461 = vld [vmem:[%s451 + $0x24] sm:$0xf]
      %v462 = vld [vmem:[%s451 + $0x28] sm:$0xf]
      %v463 = vld [vmem:[%s451 + $0x2c] sm:$0xf]
      %v464 = vld [vmem:[%s451 + $0x30] sm:$0xf]
      %v465 = vld [vmem:[%s451 + $0x34] sm:$0xf]
      %v466 = vld [vmem:[%s451 + $0x38] sm:$0xf]
      %v467 = vld [vmem:[%s451 + $0x3c] sm:$0xf]
      %v532 = vunpack.c.l.b16 %v369
      %v533 = vunpack.c.l.b16 %v370
      %v534 = vunpack.c.l.b16 %v371
      %v535 = vunpack.c.l.b16 %v372
      %v536 = vunpack.c.l.b16 %v373
      %v537 = vunpack.c.l.b16 %v374
      %v538 = vunpack.c.l.b16 %v375
      %v539 = vunpack.c.l.b16 %v376
      %v540 = vunpack.c.l.b16 %v377
      %v541 = vunpack.c.l.b16 %v378
      %v542 = vunpack.c.l.b16 %v379
      %v543 = vunpack.c.l.b16 %v380
      %v544 = vunpack.c.l.b16 %v381
      %v545 = vunpack.c.l.b16 %v382
      %v546 = vunpack.c.l.b16 %v383
      %v547 = vunpack.c.l.b16 %v384
      %v548 = vunpack.c.l.b16 %v385
      %v549 = vunpack.c.l.b16 %v386
      %v550 = vunpack.c.l.b16 %v387
      %v551 = vunpack.c.l.b16 %v388
      %v552 = vunpack.c.l.b16 %v389
      %v553 = vunpack.c.l.b16 %v390
      %v554 = vunpack.c.l.b16 %v391
      %v555 = vunpack.c.l.b16 %v392
      %v556 = vunpack.c.l.b16 %v393
      %v557 = vunpack.c.l.b16 %v394
      %v558 = vunpack.c.l.b16 %v395
      %v559 = vunpack.c.l.b16 %v396
      %v560 = vunpack.c.l.b16 %v397
      %v561 = vunpack.c.l.b16 %v398
      %v562 = vunpack.c.l.b16 %v447
      %v563 = vunpack.c.l.b16 %v448
      %v564 = vunpack.c.l.b16 %v401
      %v565 = vunpack.c.l.b16 %v402
      %v566 = vunpack.c.l.b16 %v403
      %v567 = vunpack.c.l.b16 %v404
      %v568 = vunpack.c.l.b16 %v405
      %v569 = vunpack.c.l.b16 %v406
      %v570 = vunpack.c.l.b16 %v407
      %v571 = vunpack.c.l.b16 %v408
      %v572 = vunpack.c.l.b16 %v409
      %v573 = vunpack.c.l.b16 %v410
      %v574 = vunpack.c.l.b16 %v411
      %v575 = vunpack.c.l.b16 %v412
      %v576 = vunpack.c.l.b16 %v413
      %v577 = vunpack.c.l.b16 %v414
      %v578 = vunpack.c.l.b16 %v415
      %v579 = vunpack.c.l.b16 %v416
      %v580 = vunpack.c.l.b16 %v417
      %v581 = vunpack.c.l.b16 %v418
      %v582 = vunpack.c.l.b16 %v419
      %v583 = vunpack.c.l.b16 %v420
      %v584 = vunpack.c.l.b16 %v421
      %v585 = vunpack.c.l.b16 %v422
      %v586 = vunpack.c.l.b16 %v423
      %v587 = vunpack.c.l.b16 %v424
      %v588 = vunpack.c.l.b16 %v425
      %v589 = vunpack.c.l.b16 %v426
      %v590 = vunpack.c.l.b16 %v427
      %v591 = vunpack.c.l.b16 %v428
      %v592 = vunpack.c.l.b16 %v429
      %v593 = vunpack.c.l.b16 %v430
      %v594 = vunpack.c.l.b16 %v449
      %v595 = vunpack.c.l.b16 %v450
      %v596 = vpack.c.b16 %v533, %v532
      %v597 = vpack.c.b16 %v535, %v534
      %v598 = vpack.c.b16 %v537, %v536
      %v599 = vpack.c.b16 %v539, %v538
      %v600 = vpack.c.b16 %v541, %v540
      %v601 = vpack.c.b16 %v543, %v542
      %v602 = vpack.c.b16 %v545, %v544
      %v603 = vpack.c.b16 %v547, %v546
      %v604 = vpack.c.b16 %v549, %v548
      %v605 = vpack.c.b16 %v551, %v550
      %v606 = vpack.c.b16 %v553, %v552
      %v607 = vpack.c.b16 %v555, %v554
      %v608 = vpack.c.b16 %v557, %v556
      %v609 = vpack.c.b16 %v559, %v558
      %v610 = vpack.c.b16 %v561, %v560
      %v611 = vpack.c.b16 %v563, %v562
      %v612 = vpack.c.b16 %v565, %v564
      %v613 = vpack.c.b16 %v567, %v566
      %v614 = vpack.c.b16 %v569, %v568
      %v615 = vpack.c.b16 %v571, %v570
      %v616 = vpack.c.b16 %v573, %v572
      %v617 = vpack.c.b16 %v575, %v574
      %v618 = vpack.c.b16 %v577, %v576
      %v619 = vpack.c.b16 %v579, %v578
      %v620 = vpack.c.b16 %v581, %v580
      %v621 = vpack.c.b16 %v583, %v582
      %v622 = vpack.c.b16 %v585, %v584
      %v623 = vpack.c.b16 %v587, %v586
      %v624 = vpack.c.b16 %v589, %v588
      %v625 = vpack.c.b16 %v591, %v590
      %v626 = vpack.c.b16 %v593, %v592
      %v627 = vpack.c.b16 %v595, %v594
      %v676 = vunpack.c.l.b16 %v452
      %v677 = vunpack.c.l.b16 %v453
      %v678 = vunpack.c.l.b16 %v454
      %v679 = vunpack.c.l.b16 %v455
      %v680 = vunpack.c.l.b16 %v456
      %v681 = vunpack.c.l.b16 %v457
      %v682 = vunpack.c.l.b16 %v458
      %v683 = vunpack.c.l.b16 %v459
      %v684 = vunpack.c.l.b16 %v460
      %v685 = vunpack.c.l.b16 %v461
      %v686 = vunpack.c.l.b16 %v462
      %v687 = vunpack.c.l.b16 %v463
      %v688 = vunpack.c.l.b16 %v464
      %v689 = vunpack.c.l.b16 %v465
      %v690 = vunpack.c.l.b16 %v466
      %v691 = vunpack.c.l.b16 %v467
      %v692 = vpack.c.b16 %v677, %v676
      %v693 = vpack.c.b16 %v679, %v678
      %v694 = vpack.c.b16 %v681, %v680
      %v695 = vpack.c.b16 %v683, %v682
      %v696 = vpack.c.b16 %v685, %v684
      %v697 = vpack.c.b16 %v687, %v686
      %v698 = vpack.c.b16 %v689, %v688
      %v699 = vpack.c.b16 %v691, %v690
      %708 = vmatprep.subr.bf16.mxu0 0
      %709 = vmatpush1.bf16.msra.mxu0 %v692
      %710 = vmatprep.subr.bf16.mxu0 0
      %711 = vmatpush1.bf16.msra.mxu0 %v693
      %712 = vmatprep.subr.bf16.mxu0 0
      %713 = vmatpush1.bf16.msra.mxu0 %v694
      %714 = vmatprep.subr.bf16.mxu0 0
      %715 = vmatpush1.bf16.msra.mxu0 %v695
      %716 = vmatprep.subr.bf16.mxu0 0
      %717 = vmatpush1.bf16.msra.mxu0 %v696
      %718 = vmatprep.subr.bf16.mxu0 0
      %719 = vmatpush1.bf16.msra.mxu0 %v697
      %720 = vmatprep.subr.bf16.mxu0 0
      %721 = vmatpush1.bf16.msra.mxu0 %v698
      %722 = vmatprep.subr.bf16.mxu0 0
      %723 = vmatpush1.bf16.msra.mxu0 %v699
      %724 = vmatprep.subr.bf16.mxu0 0
      %725 = vmatpush1.bf16.msra.mxu0 0
      %726 = vmatprep.subr.bf16.mxu0 0
      %727 = vmatpush1.bf16.msra.mxu0 0
      %728 = vmatprep.subr.bf16.mxu0 0
      %729 = vmatpush1.bf16.msra.mxu0 0
      %730 = vmatprep.subr.bf16.mxu0 0
      %731 = vmatpush1.bf16.msra.mxu0 0
      %732 = vmatprep.subr.bf16.mxu0 0
      %733 = vmatpush1.bf16.msra.mxu0 0
      %734 = vmatprep.subr.bf16.mxu0 0
      %735 = vmatpush1.bf16.msra.mxu0 0
      %736 = vmatprep.subr.bf16.mxu0 0
      %737 = vmatpush1.bf16.msra.mxu0 0
      %738 = vmatprep.subr.bf16.mxu0 0
      %739 = vmatpush1.bf16.msra.mxu0 0
      %740 = vmatprep.mubr.bf16.mxu0 0
      %741 = vmatmul.mubr.bf16.gmra.mrb[0].mxu0 %v596
      %v742 = vpop.f32.mrb[0].mxu0
      %v743 = vadd.f32 0.0, %v742
      %v744 = vpop.f32.mrb[0].mxu0
      %v745 = vpop.f32.mrb[0].mxu0
      %v746 = vadd.f32 0.0, %v745
      %v747 = vpop.f32.mrb[0].mxu0
      %748 = vmatprep.mubr.bf16.mxu0 0
      %749 = vmatmul.mubr.bf16.gmra.mrb[0].mxu0 %v597
      %v750 = vpop.f32.mrb[0].mxu0
      %v751 = vadd.f32 0.0, %v750
      %v752 = vpop.f32.mrb[0].mxu0
      %v753 = vpop.f32.mrb[0].mxu0
      %v754 = vadd.f32 0.0, %v753
      %v755 = vpop.f32.mrb[0].mxu0
      %756 = vmatprep.mubr.bf16.mxu0 0
      %757 = vmatmul.mubr.bf16.gmra.mrb[0].mxu0 %v598
      %v758 = vpop.f32.mrb[0].mxu0
      %v759 = vadd.f32 0.0, %v758
      %v760 = vpop.f32.mrb[0].mxu0
      %v761 = vpop.f32.mrb[0].mxu0
      %v762 = vadd.f32 0.0, %v761
      %v763 = vpop.f32.mrb[0].mxu0
      %764 = vmatprep.mubr.bf16.mxu0 0
      %765 = vmatmul.mubr.bf16.gmra.mrb[0].mxu0 %v599
      %v766 = vpop.f32.mrb[0].mxu0
      %v767 = vadd.f32 0.0, %v766
      %v768 = vpop.f32.mrb[0].mxu0
      %v769 = vpop.f32.mrb[0].mxu0
      %v770 = vadd.f32 0.0, %v769
      %v771 = vpop.f32.mrb[0].mxu0
      %772 = vmatprep.mubr.bf16.mxu0 0
      %773 = vmatmul.mubr.bf16.gmra.mrb[0].mxu0 %v600
      %v774 = vpop.f32.mrb[0].mxu0
      %v775 = vadd.f32 0.0, %v774
      %v776 = vpop.f32.mrb[0].mxu0
      %v777 = vpop.f32.mrb[0].mxu0
      %v778 = vadd.f32 0.0, %v777
      %v779 = vpop.f32.mrb[0].mxu0
      %780 = vmatprep.mubr.bf16.mxu0 0
      %781 = vmatmul.mubr.bf16.gmra.mrb[0].mxu0 %v601
      %v782 = vpop.f32.mrb[0].mxu0
      %v783 = vadd.f32 0.0, %v782
      %v784 = vpop.f32.mrb[0].mxu0
      %v785 = vpop.f32.mrb[0].mxu0
      %v786 = vadd.f32 0.0, %v785
      %v787 = vpop.f32.mrb[0].mxu0
      %788 = vmatprep.mubr.bf16.mxu0 0
      %789 = vmatmul.mubr.bf16.gmra.mrb[0].mxu0 %v602
      %v790 = vpop.f32.mrb[0].mxu0
      %v791 = vadd.f32 0.0, %v790
      %v792 = vpop.f32.mrb[0].mxu0
      %v793 = vpop.f32.mrb[0].mxu0
      %v794 = vadd.f32 0.0, %v793
      %v795 = vpop.f32.mrb[0].mxu0
      %796 = vmatprep.mubr.bf16.mxu0 0
      %797 = vmatmul.mubr.bf16.gmra.mrb[0].mxu0 %v603
      %v798 = vpop.f32.mrb[0].mxu0
      %v799 = vadd.f32 0.0, %v798
      %v800 = vpop.f32.mrb[0].mxu0
      %v801 = vpop.f32.mrb[0].mxu0
      %v802 = vadd.f32 0.0, %v801
      %v803 = vpop.f32.mrb[0].mxu0
      %804 = vmatprep.mubr.bf16.mxu0 0
      %805 = vmatmul.mubr.bf16.gmra.mrb[0].mxu0 %v604
      %v806 = vpop.f32.mrb[0].mxu0
      %v807 = vadd.f32 0.0, %v806
      %v808 = vpop.f32.mrb[0].mxu0
      %v809 = vpop.f32.mrb[0].mxu0
      %v810 = vadd.f32 0.0, %v809
      %v811 = vpop.f32.mrb[0].mxu0
      %812 = vmatprep.mubr.bf16.mxu0 0
      %813 = vmatmul.mubr.bf16.gmra.mrb[0].mxu0 %v605
      %v814 = vpop.f32.mrb[0].mxu0
      %v815 = vadd.f32 0.0, %v814
      %v816 = vpop.f32.mrb[0].mxu0
      %v817 = vpop.f32.mrb[0].mxu0
      %v818 = vadd.f32 0.0, %v817
      %v819 = vpop.f32.mrb[0].mxu0
      %820 = vmatprep.mubr.bf16.mxu0 0
      %821 = vmatmul.mubr.bf16.gmra.mrb[0].mxu0 %v606
      %v822 = vpop.f32.mrb[0].mxu0
      %v823 = vadd.f32 0.0, %v822
      %v824 = vpop.f32.mrb[0].mxu0
      %v825 = vpop.f32.mrb[0].mxu0
      %v826 = vadd.f32 0.0, %v825
      %v827 = vpop.f32.mrb[0].mxu0
      %828 = vmatprep.mubr.bf16.mxu0 0
      %829 = vmatmul.mubr.bf16.gmra.mrb[0].mxu0 %v607
      %v830 = vpop.f32.mrb[0].mxu0
      %v831 = vadd.f32 0.0, %v830
      %v832 = vpop.f32.mrb[0].mxu0
      %v833 = vpop.f32.mrb[0].mxu0
      %v834 = vadd.f32 0.0, %v833
      %v835 = vpop.f32.mrb[0].mxu0
      %836 = vmatprep.mubr.bf16.mxu0 0
      %837 = vmatmul.mubr.bf16.gmra.mrb[0].mxu0 %v608
      %v838 = vpop.f32.mrb[0].mxu0
      %v839 = vadd.f32 0.0, %v838
      %v840 = vpop.f32.mrb[0].mxu0
      %v841 = vpop.f32.mrb[0].mxu0
      %v842 = vadd.f32 0.0, %v841
      %v843 = vpop.f32.mrb[0].mxu0
      %844 = vmatprep.mubr.bf16.mxu0 0
      %845 = vmatmul.mubr.bf16.gmra.mrb[0].mxu0 %v609
      %v846 = vpop.f32.mrb[0].mxu0
      %v847 = vadd.f32 0.0, %v846
      %v848 = vpop.f32.mrb[0].mxu0
      %v849 = vpop.f32.mrb[0].mxu0
      %v850 = vadd.f32 0.0, %v849
      %v851 = vpop.f32.mrb[0].mxu0
      %852 = vmatprep.mubr.bf16.mxu0 0
      %853 = vmatmul.mubr.bf16.gmra.mrb[0].mxu0 %v610
      %v854 = vpop.f32.mrb[0].mxu0
      %v855 = vadd.f32 0.0, %v854
      %v856 = vpop.f32.mrb[0].mxu0
      %v857 = vpop.f32.mrb[0].mxu0
      %v858 = vadd.f32 0.0, %v857
      %v859 = vpop.f32.mrb[0].mxu0
      %860 = vmatprep.mubr.bf16.mxu0 0
      %861 = vmatmul.mubr.bf16.gmra.mrb[0].mxu0 %v611
      %v862 = vpop.f32.mrb[0].mxu0
      %v863 = vadd.f32 0.0, %v862
      %v864 = vpop.f32.mrb[0].mxu0
      %v865 = vpop.f32.mrb[0].mxu0
      %v866 = vadd.f32 0.0, %v865
      %v867 = vpop.f32.mrb[0].mxu0
      %868 = vmatprep.mubr.bf16.mxu0 0
      %869 = vmatmul.mubr.bf16.gmra.mrb[0].mxu0 %v612
      %v870 = vpop.f32.mrb[0].mxu0
      %v871 = vadd.f32 0.0, %v870
      %v872 = vpop.f32.mrb[0].mxu0
      %v873 = vpop.f32.mrb[0].mxu0
      %v874 = vadd.f32 0.0, %v873
      %v875 = vpop.f32.mrb[0].mxu0
      %876 = vmatprep.mubr.bf16.mxu0 0
      %877 = vmatmul.mubr.bf16.gmra.mrb[0].mxu0 %v613
      %v878 = vpop.f32.mrb[0].mxu0
      %v879 = vadd.f32 0.0, %v878
      %v880 = vpop.f32.mrb[0].mxu0
      %v881 = vpop.f32.mrb[0].mxu0
      %v882 = vadd.f32 0.0, %v881
      %v883 = vpop.f32.mrb[0].mxu0
      %884 = vmatprep.mubr.bf16.mxu0 0
      %885 = vmatmul.mubr.bf16.gmra.mrb[0].mxu0 %v614
      %v886 = vpop.f32.mrb[0].mxu0
      %v887 = vadd.f32 0.0, %v886
      %v888 = vpop.f32.mrb[0].mxu0
      %v889 = vpop.f32.mrb[0].mxu0
      %v890 = vadd.f32 0.0, %v889
      %v891 = vpop.f32.mrb[0].mxu0
      %892 = vmatprep.mubr.bf16.mxu0 0
      %893 = vmatmul.mubr.bf16.gmra.mrb[0].mxu0 %v615
      %v894 = vpop.f32.mrb[0].mxu0
      %v895 = vadd.f32 0.0, %v894
      %v896 = vpop.f32.mrb[0].mxu0
      %v897 = vpop.f32.mrb[0].mxu0
      %v898 = vadd.f32 0.0, %v897
      %v899 = vpop.f32.mrb[0].mxu0
      %900 = vmatprep.mubr.bf16.mxu0 0
      %901 = vmatmul.mubr.bf16.gmra.mrb[0].mxu0 %v616
      %v902 = vpop.f32.mrb[0].mxu0
      %v903 = vadd.f32 0.0, %v902
      %v904 = vpop.f32.mrb[0].mxu0
      %v905 = vpop.f32.mrb[0].mxu0
      %v906 = vadd.f32 0.0, %v905
      %v907 = vpop.f32.mrb[0].mxu0
      %908 = vmatprep.mubr.bf16.mxu0 0
      %909 = vmatmul.mubr.bf16.gmra.mrb[0].mxu0 %v617
      %v910 = vpop.f32.mrb[0].mxu0
      %v911 = vadd.f32 0.0, %v910
      %v912 = vpop.f32.mrb[0].mxu0
      %v913 = vpop.f32.mrb[0].mxu0
      %v914 = vadd.f32 0.0, %v913
      %v915 = vpop.f32.mrb[0].mxu0
      %916 = vmatprep.mubr.bf16.mxu0 0
      %917 = vmatmul.mubr.bf16.gmra.mrb[0].mxu0 %v618
      %v918 = vpop.f32.mrb[0].mxu0
      %v919 = vadd.f32 0.0, %v918
      %v920 = vpop.f32.mrb[0].mxu0
      %v921 = vpop.f32.mrb[0].mxu0
      %v922 = vadd.f32 0.0, %v921
      %v923 = vpop.f32.mrb[0].mxu0
      %924 = vmatprep.mubr.bf16.mxu0 0
      %925 = vmatmul.mubr.bf16.gmra.mrb[0].mxu0 %v619
      %v926 = vpop.f32.mrb[0].mxu0
      %v927 = vadd.f32 0.0, %v926
      %v928 = vpop.f32.mrb[0].mxu0
      %v929 = vpop.f32.mrb[0].mxu0
      %v930 = vadd.f32 0.0, %v929
      %v931 = vpop.f32.mrb[0].mxu0
      %932 = vmatprep.mubr.bf16.mxu0 0
      %933 = vmatmul.mubr.bf16.gmra.mrb[0].mxu0 %v620
      %v934 = vpop.f32.mrb[0].mxu0
      %v935 = vadd.f32 0.0, %v934
      %v936 = vpop.f32.mrb[0].mxu0
      %v937 = vpop.f32.mrb[0].mxu0
      %v938 = vadd.f32 0.0, %v937
      %v939 = vpop.f32.mrb[0].mxu0
      %940 = vmatprep.mubr.bf16.mxu0 0
      %941 = vmatmul.mubr.bf16.gmra.mrb[0].mxu0 %v621
      %v942 = vpop.f32.mrb[0].mxu0
      %v943 = vadd.f32 0.0, %v942
      %v944 = vpop.f32.mrb[0].mxu0
      %v945 = vpop.f32.mrb[0].mxu0
      %v946 = vadd.f32 0.0, %v945
      %v947 = vpop.f32.mrb[0].mxu0
      %948 = vmatprep.mubr.bf16.mxu0 0
      %949 = vmatmul.mubr.bf16.gmra.mrb[0].mxu0 %v622
      %v950 = vpop.f32.mrb[0].mxu0
      %v951 = vadd.f32 0.0, %v950
      %v952 = vpop.f32.mrb[0].mxu0
      %v953 = vpop.f32.mrb[0].mxu0
      %v954 = vadd.f32 0.0, %v953
      %v955 = vpop.f32.mrb[0].mxu0
      %956 = vmatprep.mubr.bf16.mxu0 0
      %957 = vmatmul.mubr.bf16.gmra.mrb[0].mxu0 %v623
      %v958 = vpop.f32.mrb[0].mxu0
      %v959 = vadd.f32 0.0, %v958
      %v960 = vpop.f32.mrb[0].mxu0
      %v961 = vpop.f32.mrb[0].mxu0
      %v962 = vadd.f32 0.0, %v961
      %v963 = vpop.f32.mrb[0].mxu0
      %964 = vmatprep.mubr.bf16.mxu0 0
      %965 = vmatmul.mubr.bf16.gmra.mrb[0].mxu0 %v624
      %v966 = vpop.f32.mrb[0].mxu0
      %v967 = vadd.f32 0.0, %v966
      %v968 = vpop.f32.mrb[0].mxu0
      %v969 = vpop.f32.mrb[0].mxu0
      %v970 = vadd.f32 0.0, %v969
      %v971 = vpop.f32.mrb[0].mxu0
      %972 = vmatprep.mubr.bf16.mxu0 0
      %973 = vmatmul.mubr.bf16.gmra.mrb[0].mxu0 %v625
      %v974 = vpop.f32.mrb[0].mxu0
      %v975 = vadd.f32 0.0, %v974
      %v976 = vpop.f32.mrb[0].mxu0
      %v977 = vpop.f32.mrb[0].mxu0
      %v978 = vadd.f32 0.0, %v977
      %v979 = vpop.f32.mrb[0].mxu0
      %980 = vmatprep.mubr.bf16.mxu0 0
      %981 = vmatmul.mubr.bf16.gmra.mrb[0].mxu0 %v626
      %v982 = vpop.f32.mrb[0].mxu0
      %v983 = vadd.f32 0.0, %v982
      %v984 = vpop.f32.mrb[0].mxu0
      %v985 = vpop.f32.mrb[0].mxu0
      %v986 = vadd.f32 0.0, %v985
      %v987 = vpop.f32.mrb[0].mxu0
      %988 = vmatprep.mubr.bf16.mxu0 0
      %989 = vmatmul.mubr.bf16.gmra.mrb[0].mxu0 %v627
      %v990 = vpop.f32.mrb[0].mxu0
      %v991 = vadd.f32 0.0, %v990
      %v992 = vpop.f32.mrb[0].mxu0
      %v993 = vpop.f32.mrb[0].mxu0
      %v994 = vadd.f32 0.0, %v993
      %v995 = vpop.f32.mrb[0].mxu0
      %996 = vdwg.mxu0
      %v1001 = vunpack.c.l.b16 %v367
      %v1002 = vunpack.c.l.b16 %v368
      %v1003 = vunpack.c.l.b16 %v399
      %v1004 = vunpack.c.l.b16 %v400
      %v1005 = vpack.c.b16 %v1002, %v1001
      %v1006 = vpack.c.b16 %v1004, %v1003
      %v1025 = vunpack.c.l.b16 %v431
      %v1026 = vunpack.c.l.b16 %v432
      %v1027 = vunpack.c.l.b16 %v433
      %v1028 = vunpack.c.l.b16 %v434
      %v1029 = vunpack.c.l.b16 %v435
      %v1030 = vunpack.c.l.b16 %v436
      %v1031 = vunpack.c.l.b16 %v437
      %v1032 = vunpack.c.l.b16 %v438
      %v1033 = vunpack.c.l.b16 %v439
      %v1034 = vunpack.c.l.b16 %v440
      %v1035 = vunpack.c.l.b16 %v441
      %v1036 = vunpack.c.l.b16 %v442
      %v1037 = vunpack.c.l.b16 %v443
      %v1038 = vunpack.c.l.b16 %v444
      %v1039 = vunpack.c.l.b16 %v445
      %v1040 = vunpack.c.l.b16 %v446
      %v1041 = vpack.c.b16 %v1026, %v1025
      %v1042 = vpack.c.b16 %v1028, %v1027
      %v1043 = vpack.c.b16 %v1030, %v1029
      %v1044 = vpack.c.b16 %v1032, %v1031
      %v1045 = vpack.c.b16 %v1034, %v1033
      %v1046 = vpack.c.b16 %v1036, %v1035
      %v1047 = vpack.c.b16 %v1038, %v1037
      %v1048 = vpack.c.b16 %v1040, %v1039
      %1057 = vmatprep.subr.bf16.mxu0 0
      %1058 = vmatpush1.bf16.msra.mxu0 %v1041
      %1059 = vmatprep.subr.bf16.mxu0 0
      %1060 = vmatpush1.bf16.msra.mxu0 %v1042
      %1061 = vmatprep.subr.bf16.mxu0 0
      %1062 = vmatpush1.bf16.msra.mxu0 %v1043
      %1063 = vmatprep.subr.bf16.mxu0 0
      %1064 = vmatpush1.bf16.msra.mxu0 %v1044
      %1065 = vmatprep.subr.bf16.mxu0 0
      %1066 = vmatpush1.bf16.msra.mxu0 %v1045
      %1067 = vmatprep.subr.bf16.mxu0 0
      %1068 = vmatpush1.bf16.msra.mxu0 %v1046
      %1069 = vmatprep.subr.bf16.mxu0 0
      %1070 = vmatpush1.bf16.msra.mxu0 %v1047
      %1071 = vmatprep.subr.bf16.mxu0 0
      %1072 = vmatpush1.bf16.msra.mxu0 %v1048
      %1073 = vmatprep.subr.bf16.mxu0 0
      %1074 = vmatpush1.bf16.msra.mxu0 0
      %1075 = vmatprep.subr.bf16.mxu0 0
      %1076 = vmatpush1.bf16.msra.mxu0 0
      %1077 = vmatprep.subr.bf16.mxu0 0
      %1078 = vmatpush1.bf16.msra.mxu0 0
      %1079 = vmatprep.subr.bf16.mxu0 0
      %1080 = vmatpush1.bf16.msra.mxu0 0
      %1081 = vmatprep.subr.bf16.mxu0 0
      %1082 = vmatpush1.bf16.msra.mxu0 0
      %1083 = vmatprep.subr.bf16.mxu0 0
      %1084 = vmatpush1.bf16.msra.mxu0 0
      %1085 = vmatprep.subr.bf16.mxu0 0
      %1086 = vmatpush1.bf16.msra.mxu0 0
      %1087 = vmatprep.subr.bf16.mxu0 0
      %1088 = vmatpush1.bf16.msra.mxu0 0
      %1089 = vmatprep.mubr.bf16.mxu0 0
      %1090 = vmatmul.mubr.bf16.gmra.mrb[0].mxu0 %v1005
      %v1091 = vpop.f32.mrb[0].mxu0
      %v1092 = vadd.f32 %v743, %v1091
      %v1093 = vpop.f32.mrb[0].mxu0
      %v1094 = vpop.f32.mrb[0].mxu0
      %v1095 = vadd.f32 %v746, %v1094
      %v1096 = vpop.f32.mrb[0].mxu0
      %1097 = vmatprep.mubr.bf16.mxu0 0
      %1098 = vmatmul.mubr.bf16.gmra.mrb[0].mxu0 %v596
      %v1099 = vpop.f32.mrb[0].mxu0
      %v1100 = vadd.f32 %v751, %v1099
      %v1101 = vpop.f32.mrb[0].mxu0
      %v1102 = vpop.f32.mrb[0].mxu0
      %v1103 = vadd.f32 %v754, %v1102
      %v1104 = vpop.f32.mrb[0].mxu0
      %1105 = vmatprep.mubr.bf16.mxu0 0
      %1106 = vmatmul.mubr.bf16.gmra.mrb[0].mxu0 %v597
      %v1107 = vpop.f32.mrb[0].mxu0
      %v1108 = vadd.f32 %v759, %v1107
      %v1109 = vpop.f32.mrb[0].mxu0
      %v1110 = vpop.f32.mrb[0].mxu0
      %v1111 = vadd.f32 %v762, %v1110
      %v1112 = vpop.f32.mrb[0].mxu0
      %1113 = vmatprep.mubr.bf16.mxu0 0
      %1114 = vmatmul.mubr.bf16.gmra.mrb[0].mxu0 %v598
      %v1115 = vpop.f32.mrb[0].mxu0
      %v1116 = vadd.f32 %v767, %v1115
      %v1117 = vpop.f32.mrb[0].mxu0
      %v1118 = vpop.f32.mrb[0].mxu0
      %v1119 = vadd.f32 %v770, %v1118
      %v1120 = vpop.f32.mrb[0].mxu0
      %1121 = vmatprep.mubr.bf16.mxu0 0
      %1122 = vmatmul.mubr.bf16.gmra.mrb[0].mxu0 %v599
      %v1123 = vpop.f32.mrb[0].mxu0
      %v1124 = vadd.f32 %v775, %v1123
      %v1125 = vpop.f32.mrb[0].mxu0
      %v1126 = vpop.f32.mrb[0].mxu0
      %v1127 = vadd.f32 %v778, %v1126
      %v1128 = vpop.f32.mrb[0].mxu0
      %1129 = vmatprep.mubr.bf16.mxu0 0
      %1130 = vmatmul.mubr.bf16.gmra.mrb[0].mxu0 %v600
      %v1131 = vpop.f32.mrb[0].mxu0
      %v1132 = vadd.f32 %v783, %v1131
      %v1133 = vpop.f32.mrb[0].mxu0
      %v1134 = vpop.f32.mrb[0].mxu0
      %v1135 = vadd.f32 %v786, %v1134
      %v1136 = vpop.f32.mrb[0].mxu0
      %1137 = vmatprep.mubr.bf16.mxu0 0
      %1138 = vmatmul.mubr.bf16.gmra.mrb[0].mxu0 %v601
      %v1139 = vpop.f32.mrb[0].mxu0
      %v1140 = vadd.f32 %v791, %v1139
      %v1141 = vpop.f32.mrb[0].mxu0
      %v1142 = vpop.f32.mrb[0].mxu0
      %v1143 = vadd.f32 %v794, %v1142
      %v1144 = vpop.f32.mrb[0].mxu0
      %1145 = vmatprep.mubr.bf16.mxu0 0
      %1146 = vmatmul.mubr.bf16.gmra.mrb[0].mxu0 %v602
      %v1147 = vpop.f32.mrb[0].mxu0
      %v1148 = vadd.f32 %v799, %v1147
      %v1149 = vpop.f32.mrb[0].mxu0
      %v1150 = vpop.f32.mrb[0].mxu0
      %v1151 = vadd.f32 %v802, %v1150
      %v1152 = vpop.f32.mrb[0].mxu0
      %1153 = vmatprep.mubr.bf16.mxu0 0
      %1154 = vmatmul.mubr.bf16.gmra.mrb[0].mxu0 %v603
      %v1155 = vpop.f32.mrb[0].mxu0
      %v1156 = vadd.f32 %v807, %v1155
      %v1157 = vpop.f32.mrb[0].mxu0
      %v1158 = vpop.f32.mrb[0].mxu0
      %v1159 = vadd.f32 %v810, %v1158
      %v1160 = vpop.f32.mrb[0].mxu0
      %1161 = vmatprep.mubr.bf16.mxu0 0
      %1162 = vmatmul.mubr.bf16.gmra.mrb[0].mxu0 %v604
      %v1163 = vpop.f32.mrb[0].mxu0
      %v1164 = vadd.f32 %v815, %v1163
      %v1165 = vpop.f32.mrb[0].mxu0
      %v1166 = vpop.f32.mrb[0].mxu0
      %v1167 = vadd.f32 %v818, %v1166
      %v1168 = vpop.f32.mrb[0].mxu0
      %1169 = vmatprep.mubr.bf16.mxu0 0
      %1170 = vmatmul.mubr.bf16.gmra.mrb[0].mxu0 %v605
      %v1171 = vpop.f32.mrb[0].mxu0
      %v1172 = vadd.f32 %v823, %v1171
      %v1173 = vpop.f32.mrb[0].mxu0
      %v1174 = vpop.f32.mrb[0].mxu0
      %v1175 = vadd.f32 %v826, %v1174
      %v1176 = vpop.f32.mrb[0].mxu0
      %1177 = vmatprep.mubr.bf16.mxu0 0
      %1178 = vmatmul.mubr.bf16.gmra.mrb[0].mxu0 %v606
      %v1179 = vpop.f32.mrb[0].mxu0
      %v1180 = vadd.f32 %v831, %v1179
      %v1181 = vpop.f32.mrb[0].mxu0
      %v1182 = vpop.f32.mrb[0].mxu0
      %v1183 = vadd.f32 %v834, %v1182
      %v1184 = vpop.f32.mrb[0].mxu0
      %1185 = vmatprep.mubr.bf16.mxu0 0
      %1186 = vmatmul.mubr.bf16.gmra.mrb[0].mxu0 %v607
      %v1187 = vpop.f32.mrb[0].mxu0
      %v1188 = vadd.f32 %v839, %v1187
      %v1189 = vpop.f32.mrb[0].mxu0
      %v1190 = vpop.f32.mrb[0].mxu0
      %v1191 = vadd.f32 %v842, %v1190
      %v1192 = vpop.f32.mrb[0].mxu0
      %1193 = vmatprep.mubr.bf16.mxu0 0
      %1194 = vmatmul.mubr.bf16.gmra.mrb[0].mxu0 %v608
      %v1195 = vpop.f32.mrb[0].mxu0
      %v1196 = vadd.f32 %v847, %v1195
      %v1197 = vpop.f32.mrb[0].mxu0
      %v1198 = vpop.f32.mrb[0].mxu0
      %v1199 = vadd.f32 %v850, %v1198
      %v1200 = vpop.f32.mrb[0].mxu0
      %1201 = vmatprep.mubr.bf16.mxu0 0
      %1202 = vmatmul.mubr.bf16.gmra.mrb[0].mxu0 %v609
      %v1203 = vpop.f32.mrb[0].mxu0
      %v1204 = vadd.f32 %v855, %v1203
      %v1205 = vpop.f32.mrb[0].mxu0
      %v1206 = vpop.f32.mrb[0].mxu0
      %v1207 = vadd.f32 %v858, %v1206
      %v1208 = vpop.f32.mrb[0].mxu0
      %1209 = vmatprep.mubr.bf16.mxu0 0
      %1210 = vmatmul.mubr.bf16.gmra.mrb[0].mxu0 %v610
      %v1211 = vpop.f32.mrb[0].mxu0
      %v1212 = vadd.f32 %v863, %v1211
      %v1213 = vpop.f32.mrb[0].mxu0
      %v1214 = vpop.f32.mrb[0].mxu0
      %v1215 = vadd.f32 %v866, %v1214
      %v1216 = vpop.f32.mrb[0].mxu0
      %1217 = vmatprep.mubr.bf16.mxu0 0
      %1218 = vmatmul.mubr.bf16.gmra.mrb[0].mxu0 %v1006
      %v1219 = vpop.f32.mrb[0].mxu0
      %v1220 = vadd.f32 %v871, %v1219
      %v1221 = vpop.f32.mrb[0].mxu0
      %v1222 = vpop.f32.mrb[0].mxu0
      %v1223 = vadd.f32 %v874, %v1222
      %v1224 = vpop.f32.mrb[0].mxu0
      %1225 = vmatprep.mubr.bf16.mxu0 0
      %1226 = vmatmul.mubr.bf16.gmra.mrb[0].mxu0 %v612
      %v1227 = vpop.f32.mrb[0].mxu0
      %v1228 = vadd.f32 %v879, %v1227
      %v1229 = vpop.f32.mrb[0].mxu0
      %v1230 = vpop.f32.mrb[0].mxu0
      %v1231 = vadd.f32 %v882, %v1230
      %v1232 = vpop.f32.mrb[0].mxu0
      %1233 = vmatprep.mubr.bf16.mxu0 0
      %1234 = vmatmul.mubr.bf16.gmra.mrb[0].mxu0 %v613
      %v1235 = vpop.f32.mrb[0].mxu0
      %v1236 = vadd.f32 %v887, %v1235
      %v1237 = vpop.f32.mrb[0].mxu0
      %v1238 = vpop.f32.mrb[0].mxu0
      %v1239 = vadd.f32 %v890, %v1238
      %v1240 = vpop.f32.mrb[0].mxu0
      %1241 = vmatprep.mubr.bf16.mxu0 0
      %1242 = vmatmul.mubr.bf16.gmra.mrb[0].mxu0 %v614
      %v1243 = vpop.f32.mrb[0].mxu0
      %v1244 = vadd.f32 %v895, %v1243
      %v1245 = vpop.f32.mrb[0].mxu0
      %v1246 = vpop.f32.mrb[0].mxu0
      %v1247 = vadd.f32 %v898, %v1246
      %v1248 = vpop.f32.mrb[0].mxu0
      %1249 = vmatprep.mubr.bf16.mxu0 0
      %1250 = vmatmul.mubr.bf16.gmra.mrb[0].mxu0 %v615
      %v1251 = vpop.f32.mrb[0].mxu0
      %v1252 = vadd.f32 %v903, %v1251
      %v1253 = vpop.f32.mrb[0].mxu0
      %v1254 = vpop.f32.mrb[0].mxu0
      %v1255 = vadd.f32 %v906, %v1254
      %v1256 = vpop.f32.mrb[0].mxu0
      %1257 = vmatprep.mubr.bf16.mxu0 0
      %1258 = vmatmul.mubr.bf16.gmra.mrb[0].mxu0 %v616
      %v1259 = vpop.f32.mrb[0].mxu0
      %v1260 = vadd.f32 %v911, %v1259
      %v1261 = vpop.f32.mrb[0].mxu0
      %v1262 = vpop.f32.mrb[0].mxu0
      %v1263 = vadd.f32 %v914, %v1262
      %v1264 = vpop.f32.mrb[0].mxu0
      %1265 = vmatprep.mubr.bf16.mxu0 0
      %1266 = vmatmul.mubr.bf16.gmra.mrb[0].mxu0 %v617
      %v1267 = vpop.f32.mrb[0].mxu0
      %v1268 = vadd.f32 %v919, %v1267
      %v1269 = vpop.f32.mrb[0].mxu0
      %v1270 = vpop.f32.mrb[0].mxu0
      %v1271 = vadd.f32 %v922, %v1270
      %v1272 = vpop.f32.mrb[0].mxu0
      %1273 = vmatprep.mubr.bf16.mxu0 0
      %1274 = vmatmul.mubr.bf16.gmra.mrb[0].mxu0 %v618
      %v1275 = vpop.f32.mrb[0].mxu0
      %v1276 = vadd.f32 %v927, %v1275
      %v1277 = vpop.f32.mrb[0].mxu0
      %v1278 = vpop.f32.mrb[0].mxu0
      %v1279 = vadd.f32 %v930, %v1278
      %v1280 = vpop.f32.mrb[0].mxu0
      %1281 = vmatprep.mubr.bf16.mxu0 0
      %1282 = vmatmul.mubr.bf16.gmra.mrb[0].mxu0 %v619
      %v1283 = vpop.f32.mrb[0].mxu0
      %v1284 = vadd.f32 %v935, %v1283
      %v1285 = vpop.f32.mrb[0].mxu0
      %v1286 = vpop.f32.mrb[0].mxu0
      %v1287 = vadd.f32 %v938, %v1286
      %v1288 = vpop.f32.mrb[0].mxu0
      %1289 = vmatprep.mubr.bf16.mxu0 0
      %1290 = vmatmul.mubr.bf16.gmra.mrb[0].mxu0 %v620
      %v1291 = vpop.f32.mrb[0].mxu0
      %v1292 = vadd.f32 %v943, %v1291
      %v1293 = vpop.f32.mrb[0].mxu0
      %v1294 = vpop.f32.mrb[0].mxu0
      %v1295 = vadd.f32 %v946, %v1294
      %v1296 = vpop.f32.mrb[0].mxu0
      %1297 = vmatprep.mubr.bf16.mxu0 0
      %1298 = vmatmul.mubr.bf16.gmra.mrb[0].mxu0 %v621
      %v1299 = vpop.f32.mrb[0].mxu0
      %v1300 = vadd.f32 %v951, %v1299
      %v1301 = vpop.f32.mrb[0].mxu0
      %v1302 = vpop.f32.mrb[0].mxu0
      %v1303 = vadd.f32 %v954, %v1302
      %v1304 = vpop.f32.mrb[0].mxu0
      %1305 = vmatprep.mubr.bf16.mxu0 0
      %1306 = vmatmul.mubr.bf16.gmra.mrb[0].mxu0 %v622
      %v1307 = vpop.f32.mrb[0].mxu0
      %v1308 = vadd.f32 %v959, %v1307
      %v1309 = vpop.f32.mrb[0].mxu0
      %v1310 = vpop.f32.mrb[0].mxu0
      %v1311 = vadd.f32 %v962, %v1310
      %v1312 = vpop.f32.mrb[0].mxu0
      %1313 = vmatprep.mubr.bf16.mxu0 0
      %1314 = vmatmul.mubr.bf16.gmra.mrb[0].mxu0 %v623
      %v1315 = vpop.f32.mrb[0].mxu0
      %v1316 = vadd.f32 %v967, %v1315
      %v1317 = vpop.f32.mrb[0].mxu0
      %v1318 = vpop.f32.mrb[0].mxu0
      %v1319 = vadd.f32 %v970, %v1318
      %v1320 = vpop.f32.mrb[0].mxu0
      %1321 = vmatprep.mubr.bf16.mxu0 0
      %1322 = vmatmul.mubr.bf16.gmra.mrb[0].mxu0 %v624
      %v1323 = vpop.f32.mrb[0].mxu0
      %v1324 = vadd.f32 %v975, %v1323
      %v1325 = vpop.f32.mrb[0].mxu0
      %v1326 = vpop.f32.mrb[0].mxu0
      %v1327 = vadd.f32 %v978, %v1326
      %v1328 = vpop.f32.mrb[0].mxu0
      %1329 = vmatprep.mubr.bf16.mxu0 0
      %1330 = vmatmul.mubr.bf16.gmra.mrb[0].mxu0 %v625
      %v1331 = vpop.f32.mrb[0].mxu0
      %v1332 = vadd.f32 %v983, %v1331
      %v1333 = vpop.f32.mrb[0].mxu0
      %v1334 = vpop.f32.mrb[0].mxu0
      %v1335 = vadd.f32 %v986, %v1334
      %v1336 = vpop.f32.mrb[0].mxu0
      %1337 = vmatprep.mubr.bf16.mxu0 0
      %1338 = vmatmul.mubr.bf16.gmra.mrb[0].mxu0 %v626
      %v1339 = vpop.f32.mrb[0].mxu0
      %v1340 = vadd.f32 %v991, %v1339
      %v1341 = vpop.f32.mrb[0].mxu0
      %v1342 = vpop.f32.mrb[0].mxu0
      %v1343 = vadd.f32 %v994, %v1342
      %v1344 = vpop.f32.mrb[0].mxu0
      %1345 = vdwg.mxu0
      %v1346 = vld [vmem:[%s350 + $0x10] sm:$0xf]
      %v1347 = vld [vmem:[%s350 + $0x14] sm:$0xf]
      %v1348 = vld [vmem:[%s350 + $0x18] sm:$0xf]
      %v1349 = vld [vmem:[%s350 + $0x1c] sm:$0xf]
      %v1350 = vld [vmem:[%s350 + $0x20] sm:$0xf]
      %v1351 = vld [vmem:[%s350 + $0x24] sm:$0xf]
      %v1352 = vld [vmem:[%s350 + $0x28] sm:$0xf]
      %v1353 = vld [vmem:[%s350 + $0x2c] sm:$0xf]
      %v1354 = vld [vmem:[%s350 + $0x30] sm:$0xf]
      %v1355 = vld [vmem:[%s350 + $0x34] sm:$0xf]
      %v1356 = vld [vmem:[%s350 + $0x38] sm:$0xf]
      %v1357 = vld [vmem:[%s350 + $0x3c] sm:$0xf]
      %v1358 = vld [vmem:[%s350 + $0x40] sm:$0xf]
      %v1359 = vld [vmem:[%s350 + $0x44] sm:$0xf]
      %v1360 = vld [vmem:[%s350 + $0x48] sm:$0xf]
      %v1361 = vld [vmem:[%s350 + $0x4c] sm:$0xf]
      %v1362 = vld [vmem:[%s350 + $0x50] sm:$0xf]
      %v1363 = vld [vmem:[%s350 + $0x54] sm:$0xf]
      %v1364 = vld [vmem:[%s350 + $0x58] sm:$0xf]
      %v1365 = vld [vmem:[%s350 + $0x5c] sm:$0xf]
      %v1366 = vld [vmem:[%s350 + $0x60] sm:$0xf]
      %v1367 = vld [vmem:[%s350 + $0x64] sm:$0xf]
      %v1368 = vld [vmem:[%s350 + $0x68] sm:$0xf]
      %v1369 = vld [vmem:[%s350 + $0x6c] sm:$0xf]
      %v1370 = vld [vmem:[%s350 + $0x70] sm:$0xf]
      %v1371 = vld [vmem:[%s350 + $0x74] sm:$0xf]
      %v1372 = vld [vmem:[%s350 + $0x78] sm:$0xf]
      %v1373 = vld [vmem:[%s350 + $0x7c] sm:$0xf]
      %v1374 = vld [vmem:[%s350 + $0x80] sm:$0xf]
      %v1375 = vld [vmem:[%s350 + $0x84] sm:$0xf]
      %v1376 = vld [vmem:[%s350 + $0x88] sm:$0xf]
      %v1377 = vld [vmem:[%s350 + $0x8c] sm:$0xf]
      %v1378 = vld [vmem:[%s350 + $0xa0] sm:$0xf]
      %v1379 = vld [vmem:[%s350 + $0xa4] sm:$0xf]
      %v1380 = vld [vmem:[%s350 + $0xa8] sm:$0xf]
      %v1381 = vld [vmem:[%s350 + $0xac] sm:$0xf]
      %v1382 = vld [vmem:[%s350 + $0xb0] sm:$0xf]
      %v1383 = vld [vmem:[%s350 + $0xb4] sm:$0xf]
      %v1384 = vld [vmem:[%s350 + $0xb8] sm:$0xf]
      %v1385 = vld [vmem:[%s350 + $0xbc] sm:$0xf]
      %v1386 = vld [vmem:[%s350 + $0xc0] sm:$0xf]
      %v1387 = vld [vmem:[%s350 + $0xc4] sm:$0xf]
      %v1388 = vld [vmem:[%s350 + $0xc8] sm:$0xf]
      %v1389 = vld [vmem:[%s350 + $0xcc] sm:$0xf]
      %v1390 = vld [vmem:[%s350 + $0xd0] sm:$0xf]
      %v1391 = vld [vmem:[%s350 + $0xd4] sm:$0xf]
      %v1392 = vld [vmem:[%s350 + $0xd8] sm:$0xf]
      %v1393 = vld [vmem:[%s350 + $0xdc] sm:$0xf]
      %v1394 = vld [vmem:[%s350 + $0xe0] sm:$0xf]
      %v1395 = vld [vmem:[%s350 + $0xe4] sm:$0xf]
      %v1396 = vld [vmem:[%s350 + $0xe8] sm:$0xf]
      %v1397 = vld [vmem:[%s350 + $0xec] sm:$0xf]
      %v1398 = vld [vmem:[%s350 + $0xf0] sm:$0xf]
      %v1399 = vld [vmem:[%s350 + $0xf4] sm:$0xf]
      %v1400 = vld [vmem:[%s350 + $0xf8] sm:$0xf]
      %v1401 = vld [vmem:[%s350 + $0xfc] sm:$0xf]
      %v1402 = vld [vmem:[%s350 + $0x100] sm:$0xf]
      %v1403 = vld [vmem:[%s350 + $0x104] sm:$0xf]
      %v1404 = vld [vmem:[%s350 + $0x108] sm:$0xf]
      %v1405 = vld [vmem:[%s350 + $0x10c] sm:$0xf]
      %v1406 = vld [vmem:[%s350 + $0x110] sm:$0xf]
      %v1407 = vld [vmem:[%s350 + $0x114] sm:$0xf]
      %v1408 = vld [vmem:[%s350 + $0x118] sm:$0xf]
      %v1409 = vld [vmem:[%s350 + $0x11c] sm:$0xf]
      %s1410 = scalar_lea.vmem %s3, 128
      %v1411 = vld [vmem:[%s1410] sm:$0xf]
      %v1412 = vld [vmem:[%s1410 + $0x4] sm:$0xf]
      %v1413 = vld [vmem:[%s1410 + $0x8] sm:$0xf]
      %v1414 = vld [vmem:[%s1410 + $0xc] sm:$0xf]
      %v1415 = vld [vmem:[%s1410 + $0x10] sm:$0xf]
      %v1416 = vld [vmem:[%s1410 + $0x14] sm:$0xf]
      %v1417 = vld [vmem:[%s1410 + $0x18] sm:$0xf]
      %v1418 = vld [vmem:[%s1410 + $0x1c] sm:$0xf]
      %v1419 = vld [vmem:[%s1410 + $0x20] sm:$0xf]
      %v1420 = vld [vmem:[%s1410 + $0x24] sm:$0xf]
      %v1421 = vld [vmem:[%s1410 + $0x28] sm:$0xf]
      %v1422 = vld [vmem:[%s1410 + $0x2c] sm:$0xf]
      %v1423 = vld [vmem:[%s1410 + $0x30] sm:$0xf]
      %v1424 = vld [vmem:[%s1410 + $0x34] sm:$0xf]
      %v1425 = vld [vmem:[%s1410 + $0x38] sm:$0xf]
      %v1426 = vld [vmem:[%s1410 + $0x3c] sm:$0xf]
      %v1491 = vunpack.c.l.b16 %v1346
      %v1492 = vunpack.c.l.b16 %v1347
      %v1493 = vunpack.c.l.b16 %v1348
      %v1494 = vunpack.c.l.b16 %v1349
      %v1495 = vunpack.c.l.b16 %v1350
      %v1496 = vunpack.c.l.b16 %v1351
      %v1497 = vunpack.c.l.b16 %v1352
      %v1498 = vunpack.c.l.b16 %v1353
      %v1499 = vunpack.c.l.b16 %v1354
      %v1500 = vunpack.c.l.b16 %v1355
      %v1501 = vunpack.c.l.b16 %v1356
      %v1502 = vunpack.c.l.b16 %v1357
      %v1503 = vunpack.c.l.b16 %v1358
      %v1504 = vunpack.c.l.b16 %v1359
      %v1505 = vunpack.c.l.b16 %v1360
      %v1506 = vunpack.c.l.b16 %v1361
      %v1507 = vunpack.c.l.b16 %v1362
      %v1508 = vunpack.c.l.b16 %v1363
      %v1509 = vunpack.c.l.b16 %v1364
      %v1510 = vunpack.c.l.b16 %v1365
      %v1511 = vunpack.c.l.b16 %v1366
      %v1512 = vunpack.c.l.b16 %v1367
      %v1513 = vunpack.c.l.b16 %v1368
      %v1514 = vunpack.c.l.b16 %v1369
      %v1515 = vunpack.c.l.b16 %v1370
      %v1516 = vunpack.c.l.b16 %v1371
      %v1517 = vunpack.c.l.b16 %v1372
      %v1518 = vunpack.c.l.b16 %v1373
      %v1519 = vunpack.c.l.b16 %v1374
      %v1520 = vunpack.c.l.b16 %v1375
      %v1521 = vunpack.c.l.b16 %v1376
      %v1522 = vunpack.c.l.b16 %v1377
      %v1523 = vunpack.c.l.b16 %v1378
      %v1524 = vunpack.c.l.b16 %v1379
      %v1525 = vunpack.c.l.b16 %v1380
      %v1526 = vunpack.c.l.b16 %v1381
      %v1527 = vunpack.c.l.b16 %v1382
      %v1528 = vunpack.c.l.b16 %v1383
      %v1529 = vunpack.c.l.b16 %v1384
      %v1530 = vunpack.c.l.b16 %v1385
      %v1531 = vunpack.c.l.b16 %v1386
      %v1532 = vunpack.c.l.b16 %v1387
      %v1533 = vunpack.c.l.b16 %v1388
      %v1534 = vunpack.c.l.b16 %v1389
      %v1535 = vunpack.c.l.b16 %v1390
      %v1536 = vunpack.c.l.b16 %v1391
      %v1537 = vunpack.c.l.b16 %v1392
      %v1538 = vunpack.c.l.b16 %v1393
      %v1539 = vunpack.c.l.b16 %v1394
      %v1540 = vunpack.c.l.b16 %v1395
      %v1541 = vunpack.c.l.b16 %v1396
      %v1542 = vunpack.c.l.b16 %v1397
      %v1543 = vunpack.c.l.b16 %v1398
      %v1544 = vunpack.c.l.b16 %v1399
      %v1545 = vunpack.c.l.b16 %v1400
      %v1546 = vunpack.c.l.b16 %v1401
      %v1547 = vunpack.c.l.b16 %v1402
      %v1548 = vunpack.c.l.b16 %v1403
      %v1549 = vunpack.c.l.b16 %v1404
      %v1550 = vunpack.c.l.b16 %v1405
      %v1551 = vunpack.c.l.b16 %v1406
      %v1552 = vunpack.c.l.b16 %v1407
      %v1553 = vunpack.c.l.b16 %v1408
      %v1554 = vunpack.c.l.b16 %v1409
      %v1555 = vpack.c.b16 %v1492, %v1491
      %v1556 = vpack.c.b16 %v1494, %v1493
      %v1557 = vpack.c.b16 %v1496, %v1495
      %v1558 = vpack.c.b16 %v1498, %v1497
      %v1559 = vpack.c.b16 %v1500, %v1499
      %v1560 = vpack.c.b16 %v1502, %v1501
      %v1561 = vpack.c.b16 %v1504, %v1503
      %v1562 = vpack.c.b16 %v1506, %v1505
      %v1563 = vpack.c.b16 %v1508, %v1507
      %v1564 = vpack.c.b16 %v1510, %v1509
      %v1565 = vpack.c.b16 %v1512, %v1511
      %v1566 = vpack.c.b16 %v1514, %v1513
      %v1567 = vpack.c.b16 %v1516, %v1515
      %v1568 = vpack.c.b16 %v1518, %v1517
      %v1569 = vpack.c.b16 %v1520, %v1519
      %v1570 = vpack.c.b16 %v1522, %v1521
      %v1571 = vpack.c.b16 %v1524, %v1523
      %v1572 = vpack.c.b16 %v1526, %v1525
      %v1573 = vpack.c.b16 %v1528, %v1527
      %v1574 = vpack.c.b16 %v1530, %v1529
      %v1575 = vpack.c.b16 %v1532, %v1531
      %v1576 = vpack.c.b16 %v1534, %v1533
      %v1577 = vpack.c.b16 %v1536, %v1535
      %v1578 = vpack.c.b16 %v1538, %v1537
      %v1579 = vpack.c.b16 %v1540, %v1539
      %v1580 = vpack.c.b16 %v1542, %v1541
      %v1581 = vpack.c.b16 %v1544, %v1543
      %v1582 = vpack.c.b16 %v1546, %v1545
      %v1583 = vpack.c.b16 %v1548, %v1547
      %v1584 = vpack.c.b16 %v1550, %v1549
      %v1585 = vpack.c.b16 %v1552, %v1551
      %v1586 = vpack.c.b16 %v1554, %v1553
      %v1635 = vunpack.c.l.b16 %v1411
      %v1636 = vunpack.c.l.b16 %v1412
      %v1637 = vunpack.c.l.b16 %v1413
      %v1638 = vunpack.c.l.b16 %v1414
      %v1639 = vunpack.c.l.b16 %v1415
      %v1640 = vunpack.c.l.b16 %v1416
      %v1641 = vunpack.c.l.b16 %v1417
      %v1642 = vunpack.c.l.b16 %v1418
      %v1643 = vunpack.c.l.b16 %v1419
      %v1644 = vunpack.c.l.b16 %v1420
      %v1645 = vunpack.c.l.b16 %v1421
      %v1646 = vunpack.c.l.b16 %v1422
      %v1647 = vunpack.c.l.b16 %v1423
      %v1648 = vunpack.c.l.b16 %v1424
      %v1649 = vunpack.c.l.b16 %v1425
      %v1650 = vunpack.c.l.b16 %v1426
      %v1651 = vpack.c.b16 %v1636, %v1635
      %v1652 = vpack.c.b16 %v1638, %v1637
      %v1653 = vpack.c.b16 %v1640, %v1639
      %v1654 = vpack.c.b16 %v1642, %v1641
      %v1655 = vpack.c.b16 %v1644, %v1643
      %v1656 = vpack.c.b16 %v1646, %v1645
      %v1657 = vpack.c.b16 %v1648, %v1647
      %v1658 = vpack.c.b16 %v1650, %v1649
      %1667 = vmatprep.subr.bf16.mxu0 0
      %1668 = vmatpush1.bf16.msra.mxu0 %v1651
      %1669 = vmatprep.subr.bf16.mxu0 0
      %1670 = vmatpush1.bf16.msra.mxu0 %v1652
      %1671 = vmatprep.subr.bf16.mxu0 0
      %1672 = vmatpush1.bf16.msra.mxu0 %v1653
      %1673 = vmatprep.subr.bf16.mxu0 0
      %1674 = vmatpush1.bf16.msra.mxu0 %v1654
      %1675 = vmatprep.subr.bf16.mxu0 0
      %1676 = vmatpush1.bf16.msra.mxu0 %v1655
      %1677 = vmatprep.subr.bf16.mxu0 0
      %1678 = vmatpush1.bf16.msra.mxu0 %v1656
      %1679 = vmatprep.subr.bf16.mxu0 0
      %1680 = vmatpush1.bf16.msra.mxu0 %v1657
      %1681 = vmatprep.subr.bf16.mxu0 0
      %1682 = vmatpush1.bf16.msra.mxu0 %v1658
      %1683 = vmatprep.subr.bf16.mxu0 0
      %1684 = vmatpush1.bf16.msra.mxu0 0
      %1685 = vmatprep.subr.bf16.mxu0 0
      %1686 = vmatpush1.bf16.msra.mxu0 0
      %1687 = vmatprep.subr.bf16.mxu0 0
      %1688 = vmatpush1.bf16.msra.mxu0 0
      %1689 = vmatprep.subr.bf16.mxu0 0
      %1690 = vmatpush1.bf16.msra.mxu0 0
      %1691 = vmatprep.subr.bf16.mxu0 0
      %1692 = vmatpush1.bf16.msra.mxu0 0
      %1693 = vmatprep.subr.bf16.mxu0 0
      %1694 = vmatpush1.bf16.msra.mxu0 0
      %1695 = vmatprep.subr.bf16.mxu0 0
      %1696 = vmatpush1.bf16.msra.mxu0 0
      %1697 = vmatprep.subr.bf16.mxu0 0
      %1698 = vmatpush1.bf16.msra.mxu0 0
      %1699 = vmatprep.mubr.bf16.mxu0 0
      %1700 = vmatmul.mubr.bf16.gmra.mrb[0].mxu0 %v1555
      %v1701 = vpop.f32.mrb[0].mxu0
      %v1702 = vadd.f32 0.0, %v1701
      %v1703 = vpop.f32.mrb[0].mxu0
      %v1704 = vpop.f32.mrb[0].mxu0
      %v1705 = vadd.f32 0.0, %v1704
      %v1706 = vpop.f32.mrb[0].mxu0
      %1707 = vmatprep.mubr.bf16.mxu0 0
      %1708 = vmatmul.mubr.bf16.gmra.mrb[0].mxu0 %v1556
      %v1709 = vpop.f32.mrb[0].mxu0
      %v1710 = vadd.f32 0.0, %v1709
      %v1711 = vpop.f32.mrb[0].mxu0
      %v1712 = vpop.f32.mrb[0].mxu0
      %v1713 = vadd.f32 0.0, %v1712
      %v1714 = vpop.f32.mrb[0].mxu0
      %1715 = vmatprep.mubr.bf16.mxu0 0
      %1716 = vmatmul.mubr.bf16.gmra.mrb[0].mxu0 %v1557
      %v1717 = vpop.f32.mrb[0].mxu0
      %v1718 = vadd.f32 0.0, %v1717
      %v1719 = vpop.f32.mrb[0].mxu0
      %v1720 = vpop.f32.mrb[0].mxu0
      %v1721 = vadd.f32 0.0, %v1720
      %v1722 = vpop.f32.mrb[0].mxu0
      %1723 = vmatprep.mubr.bf16.mxu0 0
      %1724 = vmatmul.mubr.bf16.gmra.mrb[0].mxu0 %v1558
      %v1725 = vpop.f32.mrb[0].mxu0
      %v1726 = vadd.f32 0.0, %v1725
      %v1727 = vpop.f32.mrb[0].mxu0
      %v1728 = vpop.f32.mrb[0].mxu0
      %v1729 = vadd.f32 0.0, %v1728
      %v1730 = vpop.f32.mrb[0].mxu0
      %1731 = vmatprep.mubr.bf16.mxu0 0
      %1732 = vmatmul.mubr.bf16.gmra.mrb[0].mxu0 %v1559
      %v1733 = vpop.f32.mrb[0].mxu0
      %v1734 = vadd.f32 0.0, %v1733
      %v1735 = vpop.f32.mrb[0].mxu0
      %v1736 = vpop.f32.mrb[0].mxu0
      %v1737 = vadd.f32 0.0, %v1736
      %v1738 = vpop.f32.mrb[0].mxu0
      %1739 = vmatprep.mubr.bf16.mxu0 0
      %1740 = vmatmul.mubr.bf16.gmra.mrb[0].mxu0 %v1560
      %v1741 = vpop.f32.mrb[0].mxu0
      %v1742 = vadd.f32 0.0, %v1741
      %v1743 = vpop.f32.mrb[0].mxu0
      %v1744 = vpop.f32.mrb[0].mxu0
      %v1745 = vadd.f32 0.0, %v1744
      %v1746 = vpop.f32.mrb[0].mxu0
      %1747 = vmatprep.mubr.bf16.mxu0 0
      %1748 = vmatmul.mubr.bf16.gmra.mrb[0].mxu0 %v1561
      %v1749 = vpop.f32.mrb[0].mxu0
      %v1750 = vadd.f32 0.0, %v1749
      %v1751 = vpop.f32.mrb[0].mxu0
      %v1752 = vpop.f32.mrb[0].mxu0
      %v1753 = vadd.f32 0.0, %v1752
      %v1754 = vpop.f32.mrb[0].mxu0
      %1755 = vmatprep.mubr.bf16.mxu0 0
      %1756 = vmatmul.mubr.bf16.gmra.mrb[0].mxu0 %v1562
      %v1757 = vpop.f32.mrb[0].mxu0
      %v1758 = vadd.f32 0.0, %v1757
      %v1759 = vpop.f32.mrb[0].mxu0
      %v1760 = vpop.f32.mrb[0].mxu0
      %v1761 = vadd.f32 0.0, %v1760
      %v1762 = vpop.f32.mrb[0].mxu0
      %1763 = vmatprep.mubr.bf16.mxu0 0
      %1764 = vmatmul.mubr.bf16.gmra.mrb[0].mxu0 %v1563
      %v1765 = vpop.f32.mrb[0].mxu0
      %v1766 = vadd.f32 0.0, %v1765
      %v1767 = vpop.f32.mrb[0].mxu0
      %v1768 = vpop.f32.mrb[0].mxu0
      %v1769 = vadd.f32 0.0, %v1768
      %v1770 = vpop.f32.mrb[0].mxu0
      %1771 = vmatprep.mubr.bf16.mxu0 0
      %1772 = vmatmul.mubr.bf16.gmra.mrb[0].mxu0 %v1564
      %v1773 = vpop.f32.mrb[0].mxu0
      %v1774 = vadd.f32 0.0, %v1773
      %v1775 = vpop.f32.mrb[0].mxu0
      %v1776 = vpop.f32.mrb[0].mxu0
      %v1777 = vadd.f32 0.0, %v1776
      %v1778 = vpop.f32.mrb[0].mxu0
      %1779 = vmatprep.mubr.bf16.mxu0 0
      %1780 = vmatmul.mubr.bf16.gmra.mrb[0].mxu0 %v1565
      %v1781 = vpop.f32.mrb[0].mxu0
      %v1782 = vadd.f32 0.0, %v1781
      %v1783 = vpop.f32.mrb[0].mxu0
      %v1784 = vpop.f32.mrb[0].mxu0
      %v1785 = vadd.f32 0.0, %v1784
      %v1786 = vpop.f32.mrb[0].mxu0
      %1787 = vmatprep.mubr.bf16.mxu0 0
      %1788 = vmatmul.mubr.bf16.gmra.mrb[0].mxu0 %v1566
      %v1789 = vpop.f32.mrb[0].mxu0
      %v1790 = vadd.f32 0.0, %v1789
      %v1791 = vpop.f32.mrb[0].mxu0
      %v1792 = vpop.f32.mrb[0].mxu0
      %v1793 = vadd.f32 0.0, %v1792
      %v1794 = vpop.f32.mrb[0].mxu0
      %1795 = vmatprep.mubr.bf16.mxu0 0
      %1796 = vmatmul.mubr.bf16.gmra.mrb[0].mxu0 %v1567
      %v1797 = vpop.f32.mrb[0].mxu0
      %v1798 = vadd.f32 0.0, %v1797
      %v1799 = vpop.f32.mrb[0].mxu0
      %v1800 = vpop.f32.mrb[0].mxu0
      %v1801 = vadd.f32 0.0, %v1800
      %v1802 = vpop.f32.mrb[0].mxu0
      %1803 = vmatprep.mubr.bf16.mxu0 0
      %1804 = vmatmul.mubr.bf16.gmra.mrb[0].mxu0 %v1568
      %v1805 = vpop.f32.mrb[0].mxu0
      %v1806 = vadd.f32 0.0, %v1805
      %v1807 = vpop.f32.mrb[0].mxu0
      %v1808 = vpop.f32.mrb[0].mxu0
      %v1809 = vadd.f32 0.0, %v1808
      %v1810 = vpop.f32.mrb[0].mxu0
      %1811 = vmatprep.mubr.bf16.mxu0 0
      %1812 = vmatmul.mubr.bf16.gmra.mrb[0].mxu0 %v1569
      %v1813 = vpop.f32.mrb[0].mxu0
      %v1814 = vadd.f32 0.0, %v1813
      %v1815 = vpop.f32.mrb[0].mxu0
      %v1816 = vpop.f32.mrb[0].mxu0
      %v1817 = vadd.f32 0.0, %v1816
      %v1818 = vpop.f32.mrb[0].mxu0
      %1819 = vmatprep.mubr.bf16.mxu0 0
      %1820 = vmatmul.mubr.bf16.gmra.mrb[0].mxu0 %v1570
      %v1821 = vpop.f32.mrb[0].mxu0
      %v1822 = vadd.f32 0.0, %v1821
      %v1823 = vpop.f32.mrb[0].mxu0
      %v1824 = vpop.f32.mrb[0].mxu0
      %v1825 = vadd.f32 0.0, %v1824
      %v1826 = vpop.f32.mrb[0].mxu0
      %1827 = vmatprep.mubr.bf16.mxu0 0
      %1828 = vmatmul.mubr.bf16.gmra.mrb[0].mxu0 %v1571
      %v1829 = vpop.f32.mrb[0].mxu0
      %v1830 = vadd.f32 0.0, %v1829
      %v1831 = vpop.f32.mrb[0].mxu0
      %v1832 = vpop.f32.mrb[0].mxu0
      %v1833 = vadd.f32 0.0, %v1832
      %v1834 = vpop.f32.mrb[0].mxu0
      %1835 = vmatprep.mubr.bf16.mxu0 0
      %1836 = vmatmul.mubr.bf16.gmra.mrb[0].mxu0 %v1572
      %v1837 = vpop.f32.mrb[0].mxu0
      %v1838 = vadd.f32 0.0, %v1837
      %v1839 = vpop.f32.mrb[0].mxu0
      %v1840 = vpop.f32.mrb[0].mxu0
      %v1841 = vadd.f32 0.0, %v1840
      %v1842 = vpop.f32.mrb[0].mxu0
      %1843 = vmatprep.mubr.bf16.mxu0 0
      %1844 = vmatmul.mubr.bf16.gmra.mrb[0].mxu0 %v1573
      %v1845 = vpop.f32.mrb[0].mxu0
      %v1846 = vadd.f32 0.0, %v1845
      %v1847 = vpop.f32.mrb[0].mxu0
      %v1848 = vpop.f32.mrb[0].mxu0
      %v1849 = vadd.f32 0.0, %v1848
      %v1850 = vpop.f32.mrb[0].mxu0
      %1851 = vmatprep.mubr.bf16.mxu0 0
      %1852 = vmatmul.mubr.bf16.gmra.mrb[0].mxu0 %v1574
      %v1853 = vpop.f32.mrb[0].mxu0
      %v1854 = vadd.f32 0.0, %v1853
      %v1855 = vpop.f32.mrb[0].mxu0
      %v1856 = vpop.f32.mrb[0].mxu0
      %v1857 = vadd.f32 0.0, %v1856
      %v1858 = vpop.f32.mrb[0].mxu0
      %1859 = vmatprep.mubr.bf16.mxu0 0
      %1860 = vmatmul.mubr.bf16.gmra.mrb[0].mxu0 %v1575
      %v1861 = vpop.f32.mrb[0].mxu0
      %v1862 = vadd.f32 0.0, %v1861
      %v1863 = vpop.f32.mrb[0].mxu0
      %v1864 = vpop.f32.mrb[0].mxu0
      %v1865 = vadd.f32 0.0, %v1864
      %v1866 = vpop.f32.mrb[0].mxu0
      %1867 = vmatprep.mubr.bf16.mxu0 0
      %1868 = vmatmul.mubr.bf16.gmra.mrb[0].mxu0 %v1576
      %v1869 = vpop.f32.mrb[0].mxu0
      %v1870 = vadd.f32 0.0, %v1869
      %v1871 = vpop.f32.mrb[0].mxu0
      %v1872 = vpop.f32.mrb[0].mxu0
      %v1873 = vadd.f32 0.0, %v1872
      %v1874 = vpop.f32.mrb[0].mxu0
      %1875 = vmatprep.mubr.bf16.mxu0 0
      %1876 = vmatmul.mubr.bf16.gmra.mrb[0].mxu0 %v1577
      %v1877 = vpop.f32.mrb[0].mxu0
      %v1878 = vadd.f32 0.0, %v1877
      %v1879 = vpop.f32.mrb[0].mxu0
      %v1880 = vpop.f32.mrb[0].mxu0
      %v1881 = vadd.f32 0.0, %v1880
      %v1882 = vpop.f32.mrb[0].mxu0
      %1883 = vmatprep.mubr.bf16.mxu0 0
      %1884 = vmatmul.mubr.bf16.gmra.mrb[0].mxu0 %v1578
      %v1885 = vpop.f32.mrb[0].mxu0
      %v1886 = vadd.f32 0.0, %v1885
      %v1887 = vpop.f32.mrb[0].mxu0
      %v1888 = vpop.f32.mrb[0].mxu0
      %v1889 = vadd.f32 0.0, %v1888
      %v1890 = vpop.f32.mrb[0].mxu0
      %1891 = vmatprep.mubr.bf16.mxu0 0
      %1892 = vmatmul.mubr.bf16.gmra.mrb[0].mxu0 %v1579
      %v1893 = vpop.f32.mrb[0].mxu0
      %v1894 = vadd.f32 0.0, %v1893
      %v1895 = vpop.f32.mrb[0].mxu0
      %v1896 = vpop.f32.mrb[0].mxu0
      %v1897 = vadd.f32 0.0, %v1896
      %v1898 = vpop.f32.mrb[0].mxu0
      %1899 = vmatprep.mubr.bf16.mxu0 0
      %1900 = vmatmul.mubr.bf16.gmra.mrb[0].mxu0 %v1580
      %v1901 = vpop.f32.mrb[0].mxu0
      %v1902 = vadd.f32 0.0, %v1901
      %v1903 = vpop.f32.mrb[0].mxu0
      %v1904 = vpop.f32.mrb[0].mxu0
      %v1905 = vadd.f32 0.0, %v1904
      %v1906 = vpop.f32.mrb[0].mxu0
      %1907 = vmatprep.mubr.bf16.mxu0 0
      %1908 = vmatmul.mubr.bf16.gmra.mrb[0].mxu0 %v1581
      %v1909 = vpop.f32.mrb[0].mxu0
      %v1910 = vadd.f32 0.0, %v1909
      %v1911 = vpop.f32.mrb[0].mxu0
      %v1912 = vpop.f32.mrb[0].mxu0
      %v1913 = vadd.f32 0.0, %v1912
      %v1914 = vpop.f32.mrb[0].mxu0
      %1915 = vmatprep.mubr.bf16.mxu0 0
      %1916 = vmatmul.mubr.bf16.gmra.mrb[0].mxu0 %v1582
      %v1917 = vpop.f32.mrb[0].mxu0
      %v1918 = vadd.f32 0.0, %v1917
      %v1919 = vpop.f32.mrb[0].mxu0
      %v1920 = vpop.f32.mrb[0].mxu0
      %v1921 = vadd.f32 0.0, %v1920
      %v1922 = vpop.f32.mrb[0].mxu0
      %1923 = vmatprep.mubr.bf16.mxu0 0
      %1924 = vmatmul.mubr.bf16.gmra.mrb[0].mxu0 %v1583
      %v1925 = vpop.f32.mrb[0].mxu0
      %v1926 = vadd.f32 0.0, %v1925
      %v1927 = vpop.f32.mrb[0].mxu0
      %v1928 = vpop.f32.mrb[0].mxu0
      %v1929 = vadd.f32 0.0, %v1928
      %v1930 = vpop.f32.mrb[0].mxu0
      %1931 = vmatprep.mubr.bf16.mxu0 0
      %1932 = vmatmul.mubr.bf16.gmra.mrb[0].mxu0 %v1584
      %v1933 = vpop.f32.mrb[0].mxu0
      %v1934 = vadd.f32 0.0, %v1933
      %v1935 = vpop.f32.mrb[0].mxu0
      %v1936 = vpop.f32.mrb[0].mxu0
      %v1937 = vadd.f32 0.0, %v1936
      %v1938 = vpop.f32.mrb[0].mxu0
      %1939 = vmatprep.mubr.bf16.mxu0 0
      %1940 = vmatmul.mubr.bf16.gmra.mrb[0].mxu0 %v1585
      %v1941 = vpop.f32.mrb[0].mxu0
      %v1942 = vadd.f32 0.0, %v1941
      %v1943 = vpop.f32.mrb[0].mxu0
      %v1944 = vpop.f32.mrb[0].mxu0
      %v1945 = vadd.f32 0.0, %v1944
      %v1946 = vpop.f32.mrb[0].mxu0
      %1947 = vmatprep.mubr.bf16.mxu0 0
      %1948 = vmatmul.mubr.bf16.gmra.mrb[0].mxu0 %v1586
      %v1949 = vpop.f32.mrb[0].mxu0
      %v1950 = vadd.f32 0.0, %v1949
      %v1951 = vpop.f32.mrb[0].mxu0
      %v1952 = vpop.f32.mrb[0].mxu0
      %v1953 = vadd.f32 0.0, %v1952
      %v1954 = vpop.f32.mrb[0].mxu0
      %1955 = vdwg.mxu0
      %v1956 = vadd.f32 %v1092, %v1702
      %v1957 = vadd.f32 %v1095, %v1705
      %v1958 = vadd.f32 %v1100, %v1710
      %v1959 = vadd.f32 %v1103, %v1713
      %v1960 = vadd.f32 %v1108, %v1718
      %v1961 = vadd.f32 %v1111, %v1721
      %v1962 = vadd.f32 %v1116, %v1726
      %v1963 = vadd.f32 %v1119, %v1729
      %v1964 = vadd.f32 %v1124, %v1734
      %v1965 = vadd.f32 %v1127, %v1737
      %v1966 = vadd.f32 %v1132, %v1742
      %v1967 = vadd.f32 %v1135, %v1745
      %v1968 = vadd.f32 %v1140, %v1750
      %v1969 = vadd.f32 %v1143, %v1753
      %v1970 = vadd.f32 %v1148, %v1758
      %v1971 = vadd.f32 %v1151, %v1761
      %v1972 = vadd.f32 %v1156, %v1766
      %v1973 = vadd.f32 %v1159, %v1769
      %v1974 = vadd.f32 %v1164, %v1774
      %v1975 = vadd.f32 %v1167, %v1777
      %v1976 = vadd.f32 %v1172, %v1782
      %v1977 = vadd.f32 %v1175, %v1785
      %v1978 = vadd.f32 %v1180, %v1790
      %v1979 = vadd.f32 %v1183, %v1793
      %v1980 = vadd.f32 %v1188, %v1798
      %v1981 = vadd.f32 %v1191, %v1801
      %v1982 = vadd.f32 %v1196, %v1806
      %v1983 = vadd.f32 %v1199, %v1809
      %v1984 = vadd.f32 %v1204, %v1814
      %v1985 = vadd.f32 %v1207, %v1817
      %v1986 = vadd.f32 %v1212, %v1822
      %v1987 = vadd.f32 %v1215, %v1825
      %v1988 = vadd.f32 %v1220, %v1830
      %v1989 = vadd.f32 %v1223, %v1833
      %v1990 = vadd.f32 %v1228, %v1838
      %v1991 = vadd.f32 %v1231, %v1841
      %v1992 = vadd.f32 %v1236, %v1846
      %v1993 = vadd.f32 %v1239, %v1849
      %v1994 = vadd.f32 %v1244, %v1854
      %v1995 = vadd.f32 %v1247, %v1857
      %v1996 = vadd.f32 %v1252, %v1862
      %v1997 = vadd.f32 %v1255, %v1865
      %v1998 = vadd.f32 %v1260, %v1870
      %v1999 = vadd.f32 %v1263, %v1873
      %v2000 = vadd.f32 %v1268, %v1878
      %v2001 = vadd.f32 %v1271, %v1881
      %v2002 = vadd.f32 %v1276, %v1886
      %v2003 = vadd.f32 %v1279, %v1889
      %v2004 = vadd.f32 %v1284, %v1894
      %v2005 = vadd.f32 %v1287, %v1897
      %v2006 = vadd.f32 %v1292, %v1902
      %v2007 = vadd.f32 %v1295, %v1905
      %v2008 = vadd.f32 %v1300, %v1910
      %v2009 = vadd.f32 %v1303, %v1913
      %v2010 = vadd.f32 %v1308, %v1918
      %v2011 = vadd.f32 %v1311, %v1921
      %v2012 = vadd.f32 %v1316, %v1926
      %v2013 = vadd.f32 %v1319, %v1929
      %v2014 = vadd.f32 %v1324, %v1934
      %v2015 = vadd.f32 %v1327, %v1937
      %v2016 = vadd.f32 %v1332, %v1942
      %v2017 = vadd.f32 %v1335, %v1945
      %v2018 = vadd.f32 %v1340, %v1950
      %v2019 = vadd.f32 %v1343, %v1953
      %v2020 = vld [vmem:[%s4] sm:$0x1]
      %v2022 = vlaneseq
      %v2023 = vshrl.u32 %v2022, 7
      %v2024 = vsub.s32 0, %v2023
      %v2025 = vrot.slane %v2020, %v2024
      %v2027 = vadd.f32 %v1956, %v2025
      %v2028 = vadd.f32 %v1957, %v2025
      %v2029 = vadd.f32 %v1958, %v2025
      %v2030 = vadd.f32 %v1959, %v2025
      %v2031 = vadd.f32 %v1960, %v2025
      %v2032 = vadd.f32 %v1961, %v2025
      %v2033 = vadd.f32 %v1962, %v2025
      %v2034 = vadd.f32 %v1963, %v2025
      %v2035 = vadd.f32 %v1964, %v2025
      %v2036 = vadd.f32 %v1965, %v2025
      %v2037 = vadd.f32 %v1966, %v2025
      %v2038 = vadd.f32 %v1967, %v2025
      %v2039 = vadd.f32 %v1968, %v2025
      %v2040 = vadd.f32 %v1969, %v2025
      %v2041 = vadd.f32 %v1970, %v2025
      %v2042 = vadd.f32 %v1971, %v2025
      %v2043 = vadd.f32 %v1972, %v2025
      %v2044 = vadd.f32 %v1973, %v2025
      %v2045 = vadd.f32 %v1974, %v2025
      %v2046 = vadd.f32 %v1975, %v2025
      %v2047 = vadd.f32 %v1976, %v2025
      %v2048 = vadd.f32 %v1977, %v2025
      %v2049 = vadd.f32 %v1978, %v2025
      %v2050 = vadd.f32 %v1979, %v2025
      %v2051 = vadd.f32 %v1980, %v2025
      %v2052 = vadd.f32 %v1981, %v2025
      %v2053 = vadd.f32 %v1982, %v2025
      %v2054 = vadd.f32 %v1983, %v2025
      %v2055 = vadd.f32 %v1984, %v2025
      %v2056 = vadd.f32 %v1985, %v2025
      %v2057 = vadd.f32 %v1986, %v2025
      %v2058 = vadd.f32 %v1987, %v2025
      %v2059 = vadd.f32 %v1988, %v2025
      %v2060 = vadd.f32 %v1989, %v2025
      %v2061 = vadd.f32 %v1990, %v2025
      %v2062 = vadd.f32 %v1991, %v2025
      %v2063 = vadd.f32 %v1992, %v2025
      %v2064 = vadd.f32 %v1993, %v2025
      %v2065 = vadd.f32 %v1994, %v2025
      %v2066 = vadd.f32 %v1995, %v2025
      %v2067 = vadd.f32 %v1996, %v2025
      %v2068 = vadd.f32 %v1997, %v2025
      %v2069 = vadd.f32 %v1998, %v2025
      %v2070 = vadd.f32 %v1999, %v2025
      %v2071 = vadd.f32 %v2000, %v2025
      %v2072 = vadd.f32 %v2001, %v2025
      %v2073 = vadd.f32 %v2002, %v2025
      %v2074 = vadd.f32 %v2003, %v2025
      %v2075 = vadd.f32 %v2004, %v2025
      %v2076 = vadd.f32 %v2005, %v2025
      %v2077 = vadd.f32 %v2006, %v2025
      %v2078 = vadd.f32 %v2007, %v2025
      %v2079 = vadd.f32 %v2008, %v2025
      %v2080 = vadd.f32 %v2009, %v2025
      %v2081 = vadd.f32 %v2010, %v2025
      %v2082 = vadd.f32 %v2011, %v2025
      %v2083 = vadd.f32 %v2012, %v2025
      %v2084 = vadd.f32 %v2013, %v2025
      %v2085 = vadd.f32 %v2014, %v2025
      %v2086 = vadd.f32 %v2015, %v2025
      %v2087 = vadd.f32 %v2016, %v2025
      %v2088 = vadd.f32 %v2017, %v2025
      %v2089 = vadd.f32 %v2018, %v2025
      %v2090 = vadd.f32 %v2019, %v2025
      %v2091 = vmax.f32 %v2027, 0.0
      %v2092 = vmax.f32 %v2028, 0.0
      %v2093 = vmax.f32 %v2029, 0.0
      %v2094 = vmax.f32 %v2030, 0.0
      %v2095 = vmax.f32 %v2031, 0.0
      %v2096 = vmax.f32 %v2032, 0.0
      %v2097 = vmax.f32 %v2033, 0.0
      %v2098 = vmax.f32 %v2034, 0.0
      %v2099 = vmax.f32 %v2035, 0.0
      %v2100 = vmax.f32 %v2036, 0.0
      %v2101 = vmax.f32 %v2037, 0.0
      %v2102 = vmax.f32 %v2038, 0.0
      %v2103 = vmax.f32 %v2039, 0.0
      %v2104 = vmax.f32 %v2040, 0.0
      %v2105 = vmax.f32 %v2041, 0.0
      %v2106 = vmax.f32 %v2042, 0.0
      %v2107 = vmax.f32 %v2043, 0.0
      %v2108 = vmax.f32 %v2044, 0.0
      %v2109 = vmax.f32 %v2045, 0.0
      %v2110 = vmax.f32 %v2046, 0.0
      %v2111 = vmax.f32 %v2047, 0.0
      %v2112 = vmax.f32 %v2048, 0.0
      %v2113 = vmax.f32 %v2049, 0.0
      %v2114 = vmax.f32 %v2050, 0.0
      %v2115 = vmax.f32 %v2051, 0.0
      %v2116 = vmax.f32 %v2052, 0.0
      %v2117 = vmax.f32 %v2053, 0.0
      %v2118 = vmax.f32 %v2054, 0.0
      %v2119 = vmax.f32 %v2055, 0.0
      %v2120 = vmax.f32 %v2056, 0.0
      %v2121 = vmax.f32 %v2057, 0.0
      %v2122 = vmax.f32 %v2058, 0.0
      %v2123 = vmax.f32 %v2059, 0.0
      %v2124 = vmax.f32 %v2060, 0.0
      %v2125 = vmax.f32 %v2061, 0.0
      %v2126 = vmax.f32 %v2062, 0.0
      %v2127 = vmax.f32 %v2063, 0.0
      %v2128 = vmax.f32 %v2064, 0.0
      %v2129 = vmax.f32 %v2065, 0.0
      %v2130 = vmax.f32 %v2066, 0.0
      %v2131 = vmax.f32 %v2067, 0.0
      %v2132 = vmax.f32 %v2068, 0.0
      %v2133 = vmax.f32 %v2069, 0.0
      %v2134 = vmax.f32 %v2070, 0.0
      %v2135 = vmax.f32 %v2071, 0.0
      %v2136 = vmax.f32 %v2072, 0.0
      %v2137 = vmax.f32 %v2073, 0.0
      %v2138 = vmax.f32 %v2074, 0.0
      %v2139 = vmax.f32 %v2075, 0.0
      %v2140 = vmax.f32 %v2076, 0.0
      %v2141 = vmax.f32 %v2077, 0.0
      %v2142 = vmax.f32 %v2078, 0.0
      %v2143 = vmax.f32 %v2079, 0.0
      %v2144 = vmax.f32 %v2080, 0.0
      %v2145 = vmax.f32 %v2081, 0.0
      %v2146 = vmax.f32 %v2082, 0.0
      %v2147 = vmax.f32 %v2083, 0.0
      %v2148 = vmax.f32 %v2084, 0.0
      %v2149 = vmax.f32 %v2085, 0.0
      %v2150 = vmax.f32 %v2086, 0.0
      %v2151 = vmax.f32 %v2087, 0.0
      %v2152 = vmax.f32 %v2088, 0.0
      %v2153 = vmax.f32 %v2089, 0.0
      %v2154 = vmax.f32 %v2090, 0.0
      %v2155 = vpack.c.bf16 %v2092, %v2091
      %v2156 = vpack.c.bf16 %v2094, %v2093
      %v2157 = vpack.c.bf16 %v2096, %v2095
      %v2158 = vpack.c.bf16 %v2098, %v2097
      %v2159 = vpack.c.bf16 %v2100, %v2099
      %v2160 = vpack.c.bf16 %v2102, %v2101
      %v2161 = vpack.c.bf16 %v2104, %v2103
      %v2162 = vpack.c.bf16 %v2106, %v2105
      %v2163 = vpack.c.bf16 %v2108, %v2107
      %v2164 = vpack.c.bf16 %v2110, %v2109
      %v2165 = vpack.c.bf16 %v2112, %v2111
      %v2166 = vpack.c.bf16 %v2114, %v2113
      %v2167 = vpack.c.bf16 %v2116, %v2115
      %v2168 = vpack.c.bf16 %v2118, %v2117
      %v2169 = vpack.c.bf16 %v2120, %v2119
      %v2170 = vpack.c.bf16 %v2122, %v2121
      %v2171 = vpack.c.bf16 %v2124, %v2123
      %v2172 = vpack.c.bf16 %v2126, %v2125
      %v2173 = vpack.c.bf16 %v2128, %v2127
      %v2174 = vpack.c.bf16 %v2130, %v2129
      %v2175 = vpack.c.bf16 %v2132, %v2131
      %v2176 = vpack.c.bf16 %v2134, %v2133
      %v2177 = vpack.c.bf16 %v2136, %v2135
      %v2178 = vpack.c.bf16 %v2138, %v2137
      %v2179 = vpack.c.bf16 %v2140, %v2139
      %v2180 = vpack.c.bf16 %v2142, %v2141
      %v2181 = vpack.c.bf16 %v2144, %v2143
      %v2182 = vpack.c.bf16 %v2146, %v2145
      %v2183 = vpack.c.bf16 %v2148, %v2147
      %v2184 = vpack.c.bf16 %v2150, %v2149
      %v2185 = vpack.c.bf16 %v2152, %v2151
      %v2186 = vpack.c.bf16 %v2154, %v2153
      %v2187 = vld [vmem:[%s5] sm:$0xf]
      %v2188 = vld [vmem:[%s5 + $0x4] sm:$0xf]
      %v2189 = vld [vmem:[%s5 + $0x8] sm:$0xf]
      %v2190 = vld [vmem:[%s5 + $0xc] sm:$0xf]
      %v2191 = vld [vmem:[%s5 + $0x10] sm:$0xf]
      %v2192 = vld [vmem:[%s5 + $0x14] sm:$0xf]
      %v2193 = vld [vmem:[%s5 + $0x18] sm:$0xf]
      %v2194 = vld [vmem:[%s5 + $0x1c] sm:$0xf]
      %v2195 = vld [vmem:[%s5 + $0x20] sm:$0xf]
      %v2196 = vld [vmem:[%s5 + $0x24] sm:$0xf]
      %v2197 = vld [vmem:[%s5 + $0x28] sm:$0xf]
      %v2198 = vld [vmem:[%s5 + $0x2c] sm:$0xf]
      %v2199 = vld [vmem:[%s5 + $0x30] sm:$0xf]
      %v2200 = vld [vmem:[%s5 + $0x34] sm:$0xf]
      %v2201 = vld [vmem:[%s5 + $0x38] sm:$0xf]
      %v2202 = vld [vmem:[%s5 + $0x3c] sm:$0xf]
      %v2203 = vld [vmem:[%s6] sm:$0x1]
      %v2205 = vlaneseq
      %v2206 = vshrl.u32 %v2205, 7
      %v2207 = vsub.s32 0, %v2206
      %v2208 = vrot.slane %v2203, %v2207
      %v2226 = vunpack.c.l.b16 %v2187
      %v2227 = vunpack.c.l.b16 %v2188
      %v2228 = vunpack.c.l.b16 %v2189
      %v2229 = vunpack.c.l.b16 %v2190
      %v2230 = vunpack.c.l.b16 %v2191
      %v2231 = vunpack.c.l.b16 %v2192
      %v2232 = vunpack.c.l.b16 %v2193
      %v2233 = vunpack.c.l.b16 %v2194
      %v2234 = vunpack.c.l.b16 %v2195
      %v2235 = vunpack.c.l.b16 %v2196
      %v2236 = vunpack.c.l.b16 %v2197
      %v2237 = vunpack.c.l.b16 %v2198
      %v2238 = vunpack.c.l.b16 %v2199
      %v2239 = vunpack.c.l.b16 %v2200
      %v2240 = vunpack.c.l.b16 %v2201
      %v2241 = vunpack.c.l.b16 %v2202
      %v2242 = vpack.c.b16 %v2227, %v2226
      %v2243 = vpack.c.b16 %v2229, %v2228
      %v2244 = vpack.c.b16 %v2231, %v2230
      %v2245 = vpack.c.b16 %v2233, %v2232
      %v2246 = vpack.c.b16 %v2235, %v2234
      %v2247 = vpack.c.b16 %v2237, %v2236
      %v2248 = vpack.c.b16 %v2239, %v2238
      %v2249 = vpack.c.b16 %v2241, %v2240
      %2258 = vmatprep.subr.bf16.mxu0 0
      %2259 = vmatpush1.bf16.msra.mxu0 %v2242
      %2260 = vmatprep.subr.bf16.mxu0 0
      %2261 = vmatpush1.bf16.msra.mxu0 %v2243
      %2262 = vmatprep.subr.bf16.mxu0 0
      %2263 = vmatpush1.bf16.msra.mxu0 %v2244
      %2264 = vmatprep.subr.bf16.mxu0 0
      %2265 = vmatpush1.bf16.msra.mxu0 %v2245
      %2266 = vmatprep.subr.bf16.mxu0 0
      %2267 = vmatpush1.bf16.msra.mxu0 %v2246
      %2268 = vmatprep.subr.bf16.mxu0 0
      %2269 = vmatpush1.bf16.msra.mxu0 %v2247
      %2270 = vmatprep.subr.bf16.mxu0 0
      %2271 = vmatpush1.bf16.msra.mxu0 %v2248
      %2272 = vmatprep.subr.bf16.mxu0 0
      %2273 = vmatpush1.bf16.msra.mxu0 %v2249
      %2274 = vmatprep.subr.bf16.mxu0 0
      %2275 = vmatpush1.bf16.msra.mxu0 0
      %2276 = vmatprep.subr.bf16.mxu0 0
      %2277 = vmatpush1.bf16.msra.mxu0 0
      %2278 = vmatprep.subr.bf16.mxu0 0
      %2279 = vmatpush1.bf16.msra.mxu0 0
      %2280 = vmatprep.subr.bf16.mxu0 0
      %2281 = vmatpush1.bf16.msra.mxu0 0
      %2282 = vmatprep.subr.bf16.mxu0 0
      %2283 = vmatpush1.bf16.msra.mxu0 0
      %2284 = vmatprep.subr.bf16.mxu0 0
      %2285 = vmatpush1.bf16.msra.mxu0 0
      %2286 = vmatprep.subr.bf16.mxu0 0
      %2287 = vmatpush1.bf16.msra.mxu0 0
      %2288 = vmatprep.subr.bf16.mxu0 0
      %2289 = vmatpush1.bf16.msra.mxu0 0
      %2290 = vmatprep.mubr.bf16.mxu0 0
      %2291 = vmatmul.mubr.bf16.gmra.mrb[0].mxu0 %v2155
      %v2292 = vpop.f32.mrb[0].mxu0
      %v2293 = vadd.f32 %v2208, %v2292
      %v2294 = vpop.f32.mrb[0].mxu0
      %v2295 = vpop.f32.mrb[0].mxu0
      %v2296 = vadd.f32 %v2208, %v2295
      %v2297 = vpop.f32.mrb[0].mxu0
      %2298 = vmatprep.mubr.bf16.mxu0 0
      %2299 = vmatmul.mubr.bf16.gmra.mrb[0].mxu0 %v2156
      %v2300 = vpop.f32.mrb[0].mxu0
      %v2301 = vadd.f32 %v2208, %v2300
      %v2302 = vpop.f32.mrb[0].mxu0
      %v2303 = vpop.f32.mrb[0].mxu0
      %v2304 = vadd.f32 %v2208, %v2303
      %v2305 = vpop.f32.mrb[0].mxu0
      %2306 = vmatprep.mubr.bf16.mxu0 0
      %2307 = vmatmul.mubr.bf16.gmra.mrb[0].mxu0 %v2157
      %v2308 = vpop.f32.mrb[0].mxu0
      %v2309 = vadd.f32 %v2208, %v2308
      %v2310 = vpop.f32.mrb[0].mxu0
      %v2311 = vpop.f32.mrb[0].mxu0
      %v2312 = vadd.f32 %v2208, %v2311
      %v2313 = vpop.f32.mrb[0].mxu0
      %2314 = vmatprep.mubr.bf16.mxu0 0
      %2315 = vmatmul.mubr.bf16.gmra.mrb[0].mxu0 %v2158
      %v2316 = vpop.f32.mrb[0].mxu0
      %v2317 = vadd.f32 %v2208, %v2316
      %v2318 = vpop.f32.mrb[0].mxu0
      %v2319 = vpop.f32.mrb[0].mxu0
      %v2320 = vadd.f32 %v2208, %v2319
      %v2321 = vpop.f32.mrb[0].mxu0
      %2322 = vmatprep.mubr.bf16.mxu0 0
      %2323 = vmatmul.mubr.bf16.gmra.mrb[0].mxu0 %v2159
      %v2324 = vpop.f32.mrb[0].mxu0
      %v2325 = vadd.f32 %v2208, %v2324
      %v2326 = vpop.f32.mrb[0].mxu0
      %v2327 = vpop.f32.mrb[0].mxu0
      %v2328 = vadd.f32 %v2208, %v2327
      %v2329 = vpop.f32.mrb[0].mxu0
      %2330 = vmatprep.mubr.bf16.mxu0 0
      %2331 = vmatmul.mubr.bf16.gmra.mrb[0].mxu0 %v2160
      %v2332 = vpop.f32.mrb[0].mxu0
      %v2333 = vadd.f32 %v2208, %v2332
      %v2334 = vpop.f32.mrb[0].mxu0
      %v2335 = vpop.f32.mrb[0].mxu0
      %v2336 = vadd.f32 %v2208, %v2335
      %v2337 = vpop.f32.mrb[0].mxu0
      %2338 = vmatprep.mubr.bf16.mxu0 0
      %2339 = vmatmul.mubr.bf16.gmra.mrb[0].mxu0 %v2161
      %v2340 = vpop.f32.mrb[0].mxu0
      %v2341 = vadd.f32 %v2208, %v2340
      %v2342 = vpop.f32.mrb[0].mxu0
      %v2343 = vpop.f32.mrb[0].mxu0
      %v2344 = vadd.f32 %v2208, %v2343
      %v2345 = vpop.f32.mrb[0].mxu0
      %2346 = vmatprep.mubr.bf16.mxu0 0
      %2347 = vmatmul.mubr.bf16.gmra.mrb[0].mxu0 %v2162
      %v2348 = vpop.f32.mrb[0].mxu0
      %v2349 = vadd.f32 %v2208, %v2348
      %v2350 = vpop.f32.mrb[0].mxu0
      %v2351 = vpop.f32.mrb[0].mxu0
      %v2352 = vadd.f32 %v2208, %v2351
      %v2353 = vpop.f32.mrb[0].mxu0
      %2354 = vmatprep.mubr.bf16.mxu0 0
      %2355 = vmatmul.mubr.bf16.gmra.mrb[0].mxu0 %v2163
      %v2356 = vpop.f32.mrb[0].mxu0
      %v2357 = vadd.f32 %v2208, %v2356
      %v2358 = vpop.f32.mrb[0].mxu0
      %v2359 = vpop.f32.mrb[0].mxu0
      %v2360 = vadd.f32 %v2208, %v2359
      %v2361 = vpop.f32.mrb[0].mxu0
      %2362 = vmatprep.mubr.bf16.mxu0 0
      %2363 = vmatmul.mubr.bf16.gmra.mrb[0].mxu0 %v2164
      %v2364 = vpop.f32.mrb[0].mxu0
      %v2365 = vadd.f32 %v2208, %v2364
      %v2366 = vpop.f32.mrb[0].mxu0
      %v2367 = vpop.f32.mrb[0].mxu0
      %v2368 = vadd.f32 %v2208, %v2367
      %v2369 = vpop.f32.mrb[0].mxu0
      %2370 = vmatprep.mubr.bf16.mxu0 0
      %2371 = vmatmul.mubr.bf16.gmra.mrb[0].mxu0 %v2165
      %v2372 = vpop.f32.mrb[0].mxu0
      %v2373 = vadd.f32 %v2208, %v2372
      %v2374 = vpop.f32.mrb[0].mxu0
      %v2375 = vpop.f32.mrb[0].mxu0
      %v2376 = vadd.f32 %v2208, %v2375
      %v2377 = vpop.f32.mrb[0].mxu0
      %2378 = vmatprep.mubr.bf16.mxu0 0
      %2379 = vmatmul.mubr.bf16.gmra.mrb[0].mxu0 %v2166
      %v2380 = vpop.f32.mrb[0].mxu0
      %v2381 = vadd.f32 %v2208, %v2380
      %v2382 = vpop.f32.mrb[0].mxu0
      %v2383 = vpop.f32.mrb[0].mxu0
      %v2384 = vadd.f32 %v2208, %v2383
      %v2385 = vpop.f32.mrb[0].mxu0
      %2386 = vmatprep.mubr.bf16.mxu0 0
      %2387 = vmatmul.mubr.bf16.gmra.mrb[0].mxu0 %v2167
      %v2388 = vpop.f32.mrb[0].mxu0
      %v2389 = vadd.f32 %v2208, %v2388
      %v2390 = vpop.f32.mrb[0].mxu0
      %v2391 = vpop.f32.mrb[0].mxu0
      %v2392 = vadd.f32 %v2208, %v2391
      %v2393 = vpop.f32.mrb[0].mxu0
      %2394 = vmatprep.mubr.bf16.mxu0 0
      %2395 = vmatmul.mubr.bf16.gmra.mrb[0].mxu0 %v2168
      %v2396 = vpop.f32.mrb[0].mxu0
      %v2397 = vadd.f32 %v2208, %v2396
      %v2398 = vpop.f32.mrb[0].mxu0
      %v2399 = vpop.f32.mrb[0].mxu0
      %v2400 = vadd.f32 %v2208, %v2399
      %v2401 = vpop.f32.mrb[0].mxu0
      %2402 = vmatprep.mubr.bf16.mxu0 0
      %2403 = vmatmul.mubr.bf16.gmra.mrb[0].mxu0 %v2169
      %v2404 = vpop.f32.mrb[0].mxu0
      %v2405 = vadd.f32 %v2208, %v2404
      %v2406 = vpop.f32.mrb[0].mxu0
      %v2407 = vpop.f32.mrb[0].mxu0
      %v2408 = vadd.f32 %v2208, %v2407
      %v2409 = vpop.f32.mrb[0].mxu0
      %2410 = vmatprep.mubr.bf16.mxu0 0
      %2411 = vmatmul.mubr.bf16.gmra.mrb[0].mxu0 %v2170
      %v2412 = vpop.f32.mrb[0].mxu0
      %v2413 = vadd.f32 %v2208, %v2412
      %v2414 = vpop.f32.mrb[0].mxu0
      %v2415 = vpop.f32.mrb[0].mxu0
      %v2416 = vadd.f32 %v2208, %v2415
      %v2417 = vpop.f32.mrb[0].mxu0
      %2418 = vmatprep.mubr.bf16.mxu0 0
      %2419 = vmatmul.mubr.bf16.gmra.mrb[0].mxu0 %v2171
      %v2420 = vpop.f32.mrb[0].mxu0
      %v2421 = vadd.f32 %v2208, %v2420
      %v2422 = vpop.f32.mrb[0].mxu0
      %v2423 = vpop.f32.mrb[0].mxu0
      %v2424 = vadd.f32 %v2208, %v2423
      %v2425 = vpop.f32.mrb[0].mxu0
      %2426 = vmatprep.mubr.bf16.mxu0 0
      %2427 = vmatmul.mubr.bf16.gmra.mrb[0].mxu0 %v2172
      %v2428 = vpop.f32.mrb[0].mxu0
      %v2429 = vadd.f32 %v2208, %v2428
      %v2430 = vpop.f32.mrb[0].mxu0
      %v2431 = vpop.f32.mrb[0].mxu0
      %v2432 = vadd.f32 %v2208, %v2431
      %v2433 = vpop.f32.mrb[0].mxu0
      %2434 = vmatprep.mubr.bf16.mxu0 0
      %2435 = vmatmul.mubr.bf16.gmra.mrb[0].mxu0 %v2173
      %v2436 = vpop.f32.mrb[0].mxu0
      %v2437 = vadd.f32 %v2208, %v2436
      %v2438 = vpop.f32.mrb[0].mxu0
      %v2439 = vpop.f32.mrb[0].mxu0
      %v2440 = vadd.f32 %v2208, %v2439
      %v2441 = vpop.f32.mrb[0].mxu0
      %2442 = vmatprep.mubr.bf16.mxu0 0
      %2443 = vmatmul.mubr.bf16.gmra.mrb[0].mxu0 %v2174
      %v2444 = vpop.f32.mrb[0].mxu0
      %v2445 = vadd.f32 %v2208, %v2444
      %v2446 = vpop.f32.mrb[0].mxu0
      %v2447 = vpop.f32.mrb[0].mxu0
      %v2448 = vadd.f32 %v2208, %v2447
      %v2449 = vpop.f32.mrb[0].mxu0
      %2450 = vmatprep.mubr.bf16.mxu0 0
      %2451 = vmatmul.mubr.bf16.gmra.mrb[0].mxu0 %v2175
      %v2452 = vpop.f32.mrb[0].mxu0
      %v2453 = vadd.f32 %v2208, %v2452
      %v2454 = vpop.f32.mrb[0].mxu0
      %v2455 = vpop.f32.mrb[0].mxu0
      %v2456 = vadd.f32 %v2208, %v2455
      %v2457 = vpop.f32.mrb[0].mxu0
      %2458 = vmatprep.mubr.bf16.mxu0 0
      %2459 = vmatmul.mubr.bf16.gmra.mrb[0].mxu0 %v2176
      %v2460 = vpop.f32.mrb[0].mxu0
      %v2461 = vadd.f32 %v2208, %v2460
      %v2462 = vpop.f32.mrb[0].mxu0
      %v2463 = vpop.f32.mrb[0].mxu0
      %v2464 = vadd.f32 %v2208, %v2463
      %v2465 = vpop.f32.mrb[0].mxu0
      %2466 = vmatprep.mubr.bf16.mxu0 0
      %2467 = vmatmul.mubr.bf16.gmra.mrb[0].mxu0 %v2177
      %v2468 = vpop.f32.mrb[0].mxu0
      %v2469 = vadd.f32 %v2208, %v2468
      %v2470 = vpop.f32.mrb[0].mxu0
      %v2471 = vpop.f32.mrb[0].mxu0
      %v2472 = vadd.f32 %v2208, %v2471
      %v2473 = vpop.f32.mrb[0].mxu0
      %2474 = vmatprep.mubr.bf16.mxu0 0
      %2475 = vmatmul.mubr.bf16.gmra.mrb[0].mxu0 %v2178
      %v2476 = vpop.f32.mrb[0].mxu0
      %v2477 = vadd.f32 %v2208, %v2476
      %v2478 = vpop.f32.mrb[0].mxu0
      %v2479 = vpop.f32.mrb[0].mxu0
      %v2480 = vadd.f32 %v2208, %v2479
      %v2481 = vpop.f32.mrb[0].mxu0
      %2482 = vmatprep.mubr.bf16.mxu0 0
      %2483 = vmatmul.mubr.bf16.gmra.mrb[0].mxu0 %v2179
      %v2484 = vpop.f32.mrb[0].mxu0
      %v2485 = vadd.f32 %v2208, %v2484
      %v2486 = vpop.f32.mrb[0].mxu0
      %v2487 = vpop.f32.mrb[0].mxu0
      %v2488 = vadd.f32 %v2208, %v2487
      %v2489 = vpop.f32.mrb[0].mxu0
      %2490 = vmatprep.mubr.bf16.mxu0 0
      %2491 = vmatmul.mubr.bf16.gmra.mrb[0].mxu0 %v2180
      %v2492 = vpop.f32.mrb[0].mxu0
      %v2493 = vadd.f32 %v2208, %v2492
      %v2494 = vpop.f32.mrb[0].mxu0
      %v2495 = vpop.f32.mrb[0].mxu0
      %v2496 = vadd.f32 %v2208, %v2495
      %v2497 = vpop.f32.mrb[0].mxu0
      %2498 = vmatprep.mubr.bf16.mxu0 0
      %2499 = vmatmul.mubr.bf16.gmra.mrb[0].mxu0 %v2181
      %v2500 = vpop.f32.mrb[0].mxu0
      %v2501 = vadd.f32 %v2208, %v2500
      %v2502 = vpop.f32.mrb[0].mxu0
      %v2503 = vpop.f32.mrb[0].mxu0
      %v2504 = vadd.f32 %v2208, %v2503
      %v2505 = vpop.f32.mrb[0].mxu0
      %2506 = vmatprep.mubr.bf16.mxu0 0
      %2507 = vmatmul.mubr.bf16.gmra.mrb[0].mxu0 %v2182
      %v2508 = vpop.f32.mrb[0].mxu0
      %v2509 = vadd.f32 %v2208, %v2508
      %v2510 = vpop.f32.mrb[0].mxu0
      %v2511 = vpop.f32.mrb[0].mxu0
      %v2512 = vadd.f32 %v2208, %v2511
      %v2513 = vpop.f32.mrb[0].mxu0
      %2514 = vmatprep.mubr.bf16.mxu0 0
      %2515 = vmatmul.mubr.bf16.gmra.mrb[0].mxu0 %v2183
      %v2516 = vpop.f32.mrb[0].mxu0
      %v2517 = vadd.f32 %v2208, %v2516
      %v2518 = vpop.f32.mrb[0].mxu0
      %v2519 = vpop.f32.mrb[0].mxu0
      %v2520 = vadd.f32 %v2208, %v2519
      %v2521 = vpop.f32.mrb[0].mxu0
      %2522 = vmatprep.mubr.bf16.mxu0 0
      %2523 = vmatmul.mubr.bf16.gmra.mrb[0].mxu0 %v2184
      %v2524 = vpop.f32.mrb[0].mxu0
      %v2525 = vadd.f32 %v2208, %v2524
      %v2526 = vpop.f32.mrb[0].mxu0
      %v2527 = vpop.f32.mrb[0].mxu0
      %v2528 = vadd.f32 %v2208, %v2527
      %v2529 = vpop.f32.mrb[0].mxu0
      %2530 = vmatprep.mubr.bf16.mxu0 0
      %2531 = vmatmul.mubr.bf16.gmra.mrb[0].mxu0 %v2185
      %v2532 = vpop.f32.mrb[0].mxu0
      %v2533 = vadd.f32 %v2208, %v2532
      %v2534 = vpop.f32.mrb[0].mxu0
      %v2535 = vpop.f32.mrb[0].mxu0
      %v2536 = vadd.f32 %v2208, %v2535
      %v2537 = vpop.f32.mrb[0].mxu0
      %2538 = vmatprep.mubr.bf16.mxu0 0
      %2539 = vmatmul.mubr.bf16.gmra.mrb[0].mxu0 %v2186
      %v2540 = vpop.f32.mrb[0].mxu0
      %v2541 = vadd.f32 %v2208, %v2540
      %v2542 = vpop.f32.mrb[0].mxu0
      %v2543 = vpop.f32.mrb[0].mxu0
      %v2544 = vadd.f32 %v2208, %v2543
      %v2545 = vpop.f32.mrb[0].mxu0
      %2546 = vdwg.mxu0
      %v2547 = vmax.f32 %v2293, 0.0
      %v2548 = vmax.f32 %v2296, 0.0
      %v2549 = vmax.f32 %v2301, 0.0
      %v2550 = vmax.f32 %v2304, 0.0
      %v2551 = vmax.f32 %v2309, 0.0
      %v2552 = vmax.f32 %v2312, 0.0
      %v2553 = vmax.f32 %v2317, 0.0
      %v2554 = vmax.f32 %v2320, 0.0
      %v2555 = vmax.f32 %v2325, 0.0
      %v2556 = vmax.f32 %v2328, 0.0
      %v2557 = vmax.f32 %v2333, 0.0
      %v2558 = vmax.f32 %v2336, 0.0
      %v2559 = vmax.f32 %v2341, 0.0
      %v2560 = vmax.f32 %v2344, 0.0
      %v2561 = vmax.f32 %v2349, 0.0
      %v2562 = vmax.f32 %v2352, 0.0
      %v2563 = vmax.f32 %v2357, 0.0
      %v2564 = vmax.f32 %v2360, 0.0
      %v2565 = vmax.f32 %v2365, 0.0
      %v2566 = vmax.f32 %v2368, 0.0
      %v2567 = vmax.f32 %v2373, 0.0
      %v2568 = vmax.f32 %v2376, 0.0
      %v2569 = vmax.f32 %v2381, 0.0
      %v2570 = vmax.f32 %v2384, 0.0
      %v2571 = vmax.f32 %v2389, 0.0
      %v2572 = vmax.f32 %v2392, 0.0
      %v2573 = vmax.f32 %v2397, 0.0
      %v2574 = vmax.f32 %v2400, 0.0
      %v2575 = vmax.f32 %v2405, 0.0
      %v2576 = vmax.f32 %v2408, 0.0
      %v2577 = vmax.f32 %v2413, 0.0
      %v2578 = vmax.f32 %v2416, 0.0
      %v2579 = vmax.f32 %v2421, 0.0
      %v2580 = vmax.f32 %v2424, 0.0
      %v2581 = vmax.f32 %v2429, 0.0
      %v2582 = vmax.f32 %v2432, 0.0
      %v2583 = vmax.f32 %v2437, 0.0
      %v2584 = vmax.f32 %v2440, 0.0
      %v2585 = vmax.f32 %v2445, 0.0
      %v2586 = vmax.f32 %v2448, 0.0
      %v2587 = vmax.f32 %v2453, 0.0
      %v2588 = vmax.f32 %v2456, 0.0
      %v2589 = vmax.f32 %v2461, 0.0
      %v2590 = vmax.f32 %v2464, 0.0
      %v2591 = vmax.f32 %v2469, 0.0
      %v2592 = vmax.f32 %v2472, 0.0
      %v2593 = vmax.f32 %v2477, 0.0
      %v2594 = vmax.f32 %v2480, 0.0
      %v2595 = vmax.f32 %v2485, 0.0
      %v2596 = vmax.f32 %v2488, 0.0
      %v2597 = vmax.f32 %v2493, 0.0
      %v2598 = vmax.f32 %v2496, 0.0
      %v2599 = vmax.f32 %v2501, 0.0
      %v2600 = vmax.f32 %v2504, 0.0
      %v2601 = vmax.f32 %v2509, 0.0
      %v2602 = vmax.f32 %v2512, 0.0
      %v2603 = vmax.f32 %v2517, 0.0
      %v2604 = vmax.f32 %v2520, 0.0
      %v2605 = vmax.f32 %v2525, 0.0
      %v2606 = vmax.f32 %v2528, 0.0
      %v2607 = vmax.f32 %v2533, 0.0
      %v2608 = vmax.f32 %v2536, 0.0
      %v2609 = vmax.f32 %v2541, 0.0
      %v2610 = vmax.f32 %v2544, 0.0
      %v2611 = vpack.c.bf16 %v2548, %v2547
      %v2612 = vpack.c.bf16 %v2550, %v2549
      %v2613 = vpack.c.bf16 %v2552, %v2551
      %v2614 = vpack.c.bf16 %v2554, %v2553
      %v2615 = vpack.c.bf16 %v2556, %v2555
      %v2616 = vpack.c.bf16 %v2558, %v2557
      %v2617 = vpack.c.bf16 %v2560, %v2559
      %v2618 = vpack.c.bf16 %v2562, %v2561
      %v2619 = vpack.c.bf16 %v2564, %v2563
      %v2620 = vpack.c.bf16 %v2566, %v2565
      %v2621 = vpack.c.bf16 %v2568, %v2567
      %v2622 = vpack.c.bf16 %v2570, %v2569
      %v2623 = vpack.c.bf16 %v2572, %v2571
      %v2624 = vpack.c.bf16 %v2574, %v2573
      %v2625 = vpack.c.bf16 %v2576, %v2575
      %v2626 = vpack.c.bf16 %v2578, %v2577
      %v2627 = vpack.c.bf16 %v2580, %v2579
      %v2628 = vpack.c.bf16 %v2582, %v2581
      %v2629 = vpack.c.bf16 %v2584, %v2583
      %v2630 = vpack.c.bf16 %v2586, %v2585
      %v2631 = vpack.c.bf16 %v2588, %v2587
      %v2632 = vpack.c.bf16 %v2590, %v2589
      %v2633 = vpack.c.bf16 %v2592, %v2591
      %v2634 = vpack.c.bf16 %v2594, %v2593
      %v2635 = vpack.c.bf16 %v2596, %v2595
      %v2636 = vpack.c.bf16 %v2598, %v2597
      %v2637 = vpack.c.bf16 %v2600, %v2599
      %v2638 = vpack.c.bf16 %v2602, %v2601
      %v2639 = vpack.c.bf16 %v2604, %v2603
      %v2640 = vpack.c.bf16 %v2606, %v2605
      %v2641 = vpack.c.bf16 %v2608, %v2607
      %v2642 = vpack.c.bf16 %v2610, %v2609
      %v2643 = vld [vmem:[%s7] sm:$0xf]
      %v2644 = vld [vmem:[%s7 + $0x4] sm:$0xf]
      %v2645 = vld [vmem:[%s7 + $0x8] sm:$0xf]
      %v2646 = vld [vmem:[%s7 + $0xc] sm:$0xf]
      %v2647 = vld [vmem:[%s7 + $0x10] sm:$0xf]
      %v2648 = vld [vmem:[%s7 + $0x14] sm:$0xf]
      %v2649 = vld [vmem:[%s7 + $0x18] sm:$0xf]
      %v2650 = vld [vmem:[%s7 + $0x1c] sm:$0xf]
      %v2651 = vld [vmem:[%s7 + $0x20] sm:$0xf]
      %v2652 = vld [vmem:[%s7 + $0x24] sm:$0xf]
      %v2653 = vld [vmem:[%s7 + $0x28] sm:$0xf]
      %v2654 = vld [vmem:[%s7 + $0x2c] sm:$0xf]
      %v2655 = vld [vmem:[%s7 + $0x30] sm:$0xf]
      %v2656 = vld [vmem:[%s7 + $0x34] sm:$0xf]
      %v2657 = vld [vmem:[%s7 + $0x38] sm:$0xf]
      %v2658 = vld [vmem:[%s7 + $0x3c] sm:$0xf]
      %v2659 = vld [vmem:[%s8] sm:$0x1]
      %v2661 = vlaneseq
      %v2662 = vshrl.u32 %v2661, 7
      %v2663 = vsub.s32 0, %v2662
      %v2664 = vrot.slane %v2659, %v2663
      %v2682 = vunpack.c.l.b16 %v2643
      %v2683 = vunpack.c.l.b16 %v2644
      %v2684 = vunpack.c.l.b16 %v2645
      %v2685 = vunpack.c.l.b16 %v2646
      %v2686 = vunpack.c.l.b16 %v2647
      %v2687 = vunpack.c.l.b16 %v2648
      %v2688 = vunpack.c.l.b16 %v2649
      %v2689 = vunpack.c.l.b16 %v2650
      %v2690 = vunpack.c.l.b16 %v2651
      %v2691 = vunpack.c.l.b16 %v2652
      %v2692 = vunpack.c.l.b16 %v2653
      %v2693 = vunpack.c.l.b16 %v2654
      %v2694 = vunpack.c.l.b16 %v2655
      %v2695 = vunpack.c.l.b16 %v2656
      %v2696 = vunpack.c.l.b16 %v2657
      %v2697 = vunpack.c.l.b16 %v2658
      %v2698 = vpack.c.b16 %v2683, %v2682
      %v2699 = vpack.c.b16 %v2685, %v2684
      %v2700 = vpack.c.b16 %v2687, %v2686
      %v2701 = vpack.c.b16 %v2689, %v2688
      %v2702 = vpack.c.b16 %v2691, %v2690
      %v2703 = vpack.c.b16 %v2693, %v2692
      %v2704 = vpack.c.b16 %v2695, %v2694
      %v2705 = vpack.c.b16 %v2697, %v2696
      %2714 = vmatprep.subr.bf16.mxu0 0
      %2715 = vmatpush1.bf16.msra.mxu0 %v2698
      %2716 = vmatprep.subr.bf16.mxu0 0
      %2717 = vmatpush1.bf16.msra.mxu0 %v2699
      %2718 = vmatprep.subr.bf16.mxu0 0
      %2719 = vmatpush1.bf16.msra.mxu0 %v2700
      %2720 = vmatprep.subr.bf16.mxu0 0
      %2721 = vmatpush1.bf16.msra.mxu0 %v2701
      %2722 = vmatprep.subr.bf16.mxu0 0
      %2723 = vmatpush1.bf16.msra.mxu0 %v2702
      %2724 = vmatprep.subr.bf16.mxu0 0
      %2725 = vmatpush1.bf16.msra.mxu0 %v2703
      %2726 = vmatprep.subr.bf16.mxu0 0
      %2727 = vmatpush1.bf16.msra.mxu0 %v2704
      %2728 = vmatprep.subr.bf16.mxu0 0
      %2729 = vmatpush1.bf16.msra.mxu0 %v2705
      %2730 = vmatprep.subr.bf16.mxu0 0
      %2731 = vmatpush1.bf16.msra.mxu0 0
      %2732 = vmatprep.subr.bf16.mxu0 0
      %2733 = vmatpush1.bf16.msra.mxu0 0
      %2734 = vmatprep.subr.bf16.mxu0 0
      %2735 = vmatpush1.bf16.msra.mxu0 0
      %2736 = vmatprep.subr.bf16.mxu0 0
      %2737 = vmatpush1.bf16.msra.mxu0 0
      %2738 = vmatprep.subr.bf16.mxu0 0
      %2739 = vmatpush1.bf16.msra.mxu0 0
      %2740 = vmatprep.subr.bf16.mxu0 0
      %2741 = vmatpush1.bf16.msra.mxu0 0
      %2742 = vmatprep.subr.bf16.mxu0 0
      %2743 = vmatpush1.bf16.msra.mxu0 0
      %2744 = vmatprep.subr.bf16.mxu0 0
      %2745 = vmatpush1.bf16.msra.mxu0 0
      %2746 = vmatprep.mubr.bf16.mxu0 0
      %2747 = vmatmul.mubr.bf16.gmra.mrb[0].mxu0 %v2611
      %v2748 = vpop.f32.mrb[0].mxu0
      %v2749 = vadd.f32 %v2664, %v2748
      %v2750 = vpop.f32.mrb[0].mxu0
      %v2751 = vpop.f32.mrb[0].mxu0
      %v2752 = vadd.f32 %v2664, %v2751
      %v2753 = vpop.f32.mrb[0].mxu0
      %2754 = vmatprep.mubr.bf16.mxu0 0
      %2755 = vmatmul.mubr.bf16.gmra.mrb[0].mxu0 %v2612
      %v2756 = vpop.f32.mrb[0].mxu0
      %v2757 = vadd.f32 %v2664, %v2756
      %v2758 = vpop.f32.mrb[0].mxu0
      %v2759 = vpop.f32.mrb[0].mxu0
      %v2760 = vadd.f32 %v2664, %v2759
      %v2761 = vpop.f32.mrb[0].mxu0
      %2762 = vmatprep.mubr.bf16.mxu0 0
      %2763 = vmatmul.mubr.bf16.gmra.mrb[0].mxu0 %v2613
      %v2764 = vpop.f32.mrb[0].mxu0
      %v2765 = vadd.f32 %v2664, %v2764
      %v2766 = vpop.f32.mrb[0].mxu0
      %v2767 = vpop.f32.mrb[0].mxu0
      %v2768 = vadd.f32 %v2664, %v2767
      %v2769 = vpop.f32.mrb[0].mxu0
      %2770 = vmatprep.mubr.bf16.mxu0 0
      %2771 = vmatmul.mubr.bf16.gmra.mrb[0].mxu0 %v2614
      %v2772 = vpop.f32.mrb[0].mxu0
      %v2773 = vadd.f32 %v2664, %v2772
      %v2774 = vpop.f32.mrb[0].mxu0
      %v2775 = vpop.f32.mrb[0].mxu0
      %v2776 = vadd.f32 %v2664, %v2775
      %v2777 = vpop.f32.mrb[0].mxu0
      %2778 = vmatprep.mubr.bf16.mxu0 0
      %2779 = vmatmul.mubr.bf16.gmra.mrb[0].mxu0 %v2615
      %v2780 = vpop.f32.mrb[0].mxu0
      %v2781 = vadd.f32 %v2664, %v2780
      %v2782 = vpop.f32.mrb[0].mxu0
      %v2783 = vpop.f32.mrb[0].mxu0
      %v2784 = vadd.f32 %v2664, %v2783
      %v2785 = vpop.f32.mrb[0].mxu0
      %2786 = vmatprep.mubr.bf16.mxu0 0
      %2787 = vmatmul.mubr.bf16.gmra.mrb[0].mxu0 %v2616
      %v2788 = vpop.f32.mrb[0].mxu0
      %v2789 = vadd.f32 %v2664, %v2788
      %v2790 = vpop.f32.mrb[0].mxu0
      %v2791 = vpop.f32.mrb[0].mxu0
      %v2792 = vadd.f32 %v2664, %v2791
      %v2793 = vpop.f32.mrb[0].mxu0
      %2794 = vmatprep.mubr.bf16.mxu0 0
      %2795 = vmatmul.mubr.bf16.gmra.mrb[0].mxu0 %v2617
      %v2796 = vpop.f32.mrb[0].mxu0
      %v2797 = vadd.f32 %v2664, %v2796
      %v2798 = vpop.f32.mrb[0].mxu0
      %v2799 = vpop.f32.mrb[0].mxu0
      %v2800 = vadd.f32 %v2664, %v2799
      %v2801 = vpop.f32.mrb[0].mxu0
      %2802 = vmatprep.mubr.bf16.mxu0 0
      %2803 = vmatmul.mubr.bf16.gmra.mrb[0].mxu0 %v2618
      %v2804 = vpop.f32.mrb[0].mxu0
      %v2805 = vadd.f32 %v2664, %v2804
      %v2806 = vpop.f32.mrb[0].mxu0
      %v2807 = vpop.f32.mrb[0].mxu0
      %v2808 = vadd.f32 %v2664, %v2807
      %v2809 = vpop.f32.mrb[0].mxu0
      %2810 = vmatprep.mubr.bf16.mxu0 0
      %2811 = vmatmul.mubr.bf16.gmra.mrb[0].mxu0 %v2619
      %v2812 = vpop.f32.mrb[0].mxu0
      %v2813 = vadd.f32 %v2664, %v2812
      %v2814 = vpop.f32.mrb[0].mxu0
      %v2815 = vpop.f32.mrb[0].mxu0
      %v2816 = vadd.f32 %v2664, %v2815
      %v2817 = vpop.f32.mrb[0].mxu0
      %2818 = vmatprep.mubr.bf16.mxu0 0
      %2819 = vmatmul.mubr.bf16.gmra.mrb[0].mxu0 %v2620
      %v2820 = vpop.f32.mrb[0].mxu0
      %v2821 = vadd.f32 %v2664, %v2820
      %v2822 = vpop.f32.mrb[0].mxu0
      %v2823 = vpop.f32.mrb[0].mxu0
      %v2824 = vadd.f32 %v2664, %v2823
      %v2825 = vpop.f32.mrb[0].mxu0
      %2826 = vmatprep.mubr.bf16.mxu0 0
      %2827 = vmatmul.mubr.bf16.gmra.mrb[0].mxu0 %v2621
      %v2828 = vpop.f32.mrb[0].mxu0
      %v2829 = vadd.f32 %v2664, %v2828
      %v2830 = vpop.f32.mrb[0].mxu0
      %v2831 = vpop.f32.mrb[0].mxu0
      %v2832 = vadd.f32 %v2664, %v2831
      %v2833 = vpop.f32.mrb[0].mxu0
      %2834 = vmatprep.mubr.bf16.mxu0 0
      %2835 = vmatmul.mubr.bf16.gmra.mrb[0].mxu0 %v2622
      %v2836 = vpop.f32.mrb[0].mxu0
      %v2837 = vadd.f32 %v2664, %v2836
      %v2838 = vpop.f32.mrb[0].mxu0
      %v2839 = vpop.f32.mrb[0].mxu0
      %v2840 = vadd.f32 %v2664, %v2839
      %v2841 = vpop.f32.mrb[0].mxu0
      %2842 = vmatprep.mubr.bf16.mxu0 0
      %2843 = vmatmul.mubr.bf16.gmra.mrb[0].mxu0 %v2623
      %v2844 = vpop.f32.mrb[0].mxu0
      %v2845 = vadd.f32 %v2664, %v2844
      %v2846 = vpop.f32.mrb[0].mxu0
      %v2847 = vpop.f32.mrb[0].mxu0
      %v2848 = vadd.f32 %v2664, %v2847
      %v2849 = vpop.f32.mrb[0].mxu0
      %2850 = vmatprep.mubr.bf16.mxu0 0
      %2851 = vmatmul.mubr.bf16.gmra.mrb[0].mxu0 %v2624
      %v2852 = vpop.f32.mrb[0].mxu0
      %v2853 = vadd.f32 %v2664, %v2852
      %v2854 = vpop.f32.mrb[0].mxu0
      %v2855 = vpop.f32.mrb[0].mxu0
      %v2856 = vadd.f32 %v2664, %v2855
      %v2857 = vpop.f32.mrb[0].mxu0
      %2858 = vmatprep.mubr.bf16.mxu0 0
      %2859 = vmatmul.mubr.bf16.gmra.mrb[0].mxu0 %v2625
      %v2860 = vpop.f32.mrb[0].mxu0
      %v2861 = vadd.f32 %v2664, %v2860
      %v2862 = vpop.f32.mrb[0].mxu0
      %v2863 = vpop.f32.mrb[0].mxu0
      %v2864 = vadd.f32 %v2664, %v2863
      %v2865 = vpop.f32.mrb[0].mxu0
      %2866 = vmatprep.mubr.bf16.mxu0 0
      %2867 = vmatmul.mubr.bf16.gmra.mrb[0].mxu0 %v2626
      %v2868 = vpop.f32.mrb[0].mxu0
      %v2869 = vadd.f32 %v2664, %v2868
      %v2870 = vpop.f32.mrb[0].mxu0
      %v2871 = vpop.f32.mrb[0].mxu0
      %v2872 = vadd.f32 %v2664, %v2871
      %v2873 = vpop.f32.mrb[0].mxu0
      %2874 = vmatprep.mubr.bf16.mxu0 0
      %2875 = vmatmul.mubr.bf16.gmra.mrb[0].mxu0 %v2627
      %v2876 = vpop.f32.mrb[0].mxu0
      %v2877 = vadd.f32 %v2664, %v2876
      %v2878 = vpop.f32.mrb[0].mxu0
      %v2879 = vpop.f32.mrb[0].mxu0
      %v2880 = vadd.f32 %v2664, %v2879
      %v2881 = vpop.f32.mrb[0].mxu0
      %2882 = vmatprep.mubr.bf16.mxu0 0
      %2883 = vmatmul.mubr.bf16.gmra.mrb[0].mxu0 %v2628
      %v2884 = vpop.f32.mrb[0].mxu0
      %v2885 = vadd.f32 %v2664, %v2884
      %v2886 = vpop.f32.mrb[0].mxu0
      %v2887 = vpop.f32.mrb[0].mxu0
      %v2888 = vadd.f32 %v2664, %v2887
      %v2889 = vpop.f32.mrb[0].mxu0
      %2890 = vmatprep.mubr.bf16.mxu0 0
      %2891 = vmatmul.mubr.bf16.gmra.mrb[0].mxu0 %v2629
      %v2892 = vpop.f32.mrb[0].mxu0
      %v2893 = vadd.f32 %v2664, %v2892
      %v2894 = vpop.f32.mrb[0].mxu0
      %v2895 = vpop.f32.mrb[0].mxu0
      %v2896 = vadd.f32 %v2664, %v2895
      %v2897 = vpop.f32.mrb[0].mxu0
      %2898 = vmatprep.mubr.bf16.mxu0 0
      %2899 = vmatmul.mubr.bf16.gmra.mrb[0].mxu0 %v2630
      %v2900 = vpop.f32.mrb[0].mxu0
      %v2901 = vadd.f32 %v2664, %v2900
      %v2902 = vpop.f32.mrb[0].mxu0
      %v2903 = vpop.f32.mrb[0].mxu0
      %v2904 = vadd.f32 %v2664, %v2903
      %v2905 = vpop.f32.mrb[0].mxu0
      %2906 = vmatprep.mubr.bf16.mxu0 0
      %2907 = vmatmul.mubr.bf16.gmra.mrb[0].mxu0 %v2631
      %v2908 = vpop.f32.mrb[0].mxu0
      %v2909 = vadd.f32 %v2664, %v2908
      %v2910 = vpop.f32.mrb[0].mxu0
      %v2911 = vpop.f32.mrb[0].mxu0
      %v2912 = vadd.f32 %v2664, %v2911
      %v2913 = vpop.f32.mrb[0].mxu0
      %2914 = vmatprep.mubr.bf16.mxu0 0
      %2915 = vmatmul.mubr.bf16.gmra.mrb[0].mxu0 %v2632
      %v2916 = vpop.f32.mrb[0].mxu0
      %v2917 = vadd.f32 %v2664, %v2916
      %v2918 = vpop.f32.mrb[0].mxu0
      %v2919 = vpop.f32.mrb[0].mxu0
      %v2920 = vadd.f32 %v2664, %v2919
      %v2921 = vpop.f32.mrb[0].mxu0
      %2922 = vmatprep.mubr.bf16.mxu0 0
      %2923 = vmatmul.mubr.bf16.gmra.mrb[0].mxu0 %v2633
      %v2924 = vpop.f32.mrb[0].mxu0
      %v2925 = vadd.f32 %v2664, %v2924
      %v2926 = vpop.f32.mrb[0].mxu0
      %v2927 = vpop.f32.mrb[0].mxu0
      %v2928 = vadd.f32 %v2664, %v2927
      %v2929 = vpop.f32.mrb[0].mxu0
      %2930 = vmatprep.mubr.bf16.mxu0 0
      %2931 = vmatmul.mubr.bf16.gmra.mrb[0].mxu0 %v2634
      %v2932 = vpop.f32.mrb[0].mxu0
      %v2933 = vadd.f32 %v2664, %v2932
      %v2934 = vpop.f32.mrb[0].mxu0
      %v2935 = vpop.f32.mrb[0].mxu0
      %v2936 = vadd.f32 %v2664, %v2935
      %v2937 = vpop.f32.mrb[0].mxu0
      %2938 = vmatprep.mubr.bf16.mxu0 0
      %2939 = vmatmul.mubr.bf16.gmra.mrb[0].mxu0 %v2635
      %v2940 = vpop.f32.mrb[0].mxu0
      %v2941 = vadd.f32 %v2664, %v2940
      %v2942 = vpop.f32.mrb[0].mxu0
      %v2943 = vpop.f32.mrb[0].mxu0
      %v2944 = vadd.f32 %v2664, %v2943
      %v2945 = vpop.f32.mrb[0].mxu0
      %2946 = vmatprep.mubr.bf16.mxu0 0
      %2947 = vmatmul.mubr.bf16.gmra.mrb[0].mxu0 %v2636
      %v2948 = vpop.f32.mrb[0].mxu0
      %v2949 = vadd.f32 %v2664, %v2948
      %v2950 = vpop.f32.mrb[0].mxu0
      %v2951 = vpop.f32.mrb[0].mxu0
      %v2952 = vadd.f32 %v2664, %v2951
      %v2953 = vpop.f32.mrb[0].mxu0
      %2954 = vmatprep.mubr.bf16.mxu0 0
      %2955 = vmatmul.mubr.bf16.gmra.mrb[0].mxu0 %v2637
      %v2956 = vpop.f32.mrb[0].mxu0
      %v2957 = vadd.f32 %v2664, %v2956
      %v2958 = vpop.f32.mrb[0].mxu0
      %v2959 = vpop.f32.mrb[0].mxu0
      %v2960 = vadd.f32 %v2664, %v2959
      %v2961 = vpop.f32.mrb[0].mxu0
      %2962 = vmatprep.mubr.bf16.mxu0 0
      %2963 = vmatmul.mubr.bf16.gmra.mrb[0].mxu0 %v2638
      %v2964 = vpop.f32.mrb[0].mxu0
      %v2965 = vadd.f32 %v2664, %v2964
      %v2966 = vpop.f32.mrb[0].mxu0
      %v2967 = vpop.f32.mrb[0].mxu0
      %v2968 = vadd.f32 %v2664, %v2967
      %v2969 = vpop.f32.mrb[0].mxu0
      %2970 = vmatprep.mubr.bf16.mxu0 0
      %2971 = vmatmul.mubr.bf16.gmra.mrb[0].mxu0 %v2639
      %v2972 = vpop.f32.mrb[0].mxu0
      %v2973 = vadd.f32 %v2664, %v2972
      %v2974 = vpop.f32.mrb[0].mxu0
      %v2975 = vpop.f32.mrb[0].mxu0
      %v2976 = vadd.f32 %v2664, %v2975
      %v2977 = vpop.f32.mrb[0].mxu0
      %2978 = vmatprep.mubr.bf16.mxu0 0
      %2979 = vmatmul.mubr.bf16.gmra.mrb[0].mxu0 %v2640
      %v2980 = vpop.f32.mrb[0].mxu0
      %v2981 = vadd.f32 %v2664, %v2980
      %v2982 = vpop.f32.mrb[0].mxu0
      %v2983 = vpop.f32.mrb[0].mxu0
      %v2984 = vadd.f32 %v2664, %v2983
      %v2985 = vpop.f32.mrb[0].mxu0
      %2986 = vmatprep.mubr.bf16.mxu0 0
      %2987 = vmatmul.mubr.bf16.gmra.mrb[0].mxu0 %v2641
      %v2988 = vpop.f32.mrb[0].mxu0
      %v2989 = vadd.f32 %v2664, %v2988
      %v2990 = vpop.f32.mrb[0].mxu0
      %v2991 = vpop.f32.mrb[0].mxu0
      %v2992 = vadd.f32 %v2664, %v2991
      %v2993 = vpop.f32.mrb[0].mxu0
      %2994 = vmatprep.mubr.bf16.mxu0 0
      %2995 = vmatmul.mubr.bf16.gmra.mrb[0].mxu0 %v2642
      %v2996 = vpop.f32.mrb[0].mxu0
      %v2997 = vadd.f32 %v2664, %v2996
      %v2998 = vpop.f32.mrb[0].mxu0
      %v2999 = vpop.f32.mrb[0].mxu0
      %v3000 = vadd.f32 %v2664, %v2999
      %v3001 = vpop.f32.mrb[0].mxu0
      %3002 = vdwg.mxu0
      %v3003 = vsub.f32 0.0, %v2749
      %v3004 = vsub.f32 0.0, %v2752
      %v3005 = vsub.f32 0.0, %v2757
      %v3006 = vsub.f32 0.0, %v2760
      %v3007 = vsub.f32 0.0, %v2765
      %v3008 = vsub.f32 0.0, %v2768
      %v3009 = vsub.f32 0.0, %v2773
      %v3010 = vsub.f32 0.0, %v2776
      %v3011 = vsub.f32 0.0, %v2781
      %v3012 = vsub.f32 0.0, %v2784
      %v3013 = vsub.f32 0.0, %v2789
      %v3014 = vsub.f32 0.0, %v2792
      %v3015 = vsub.f32 0.0, %v2797
      %v3016 = vsub.f32 0.0, %v2800
      %v3017 = vsub.f32 0.0, %v2805
      %v3018 = vsub.f32 0.0, %v2808
      %v3019 = vsub.f32 0.0, %v2813
      %v3020 = vsub.f32 0.0, %v2816
      %v3021 = vsub.f32 0.0, %v2821
      %v3022 = vsub.f32 0.0, %v2824
      %v3023 = vsub.f32 0.0, %v2829
      %v3024 = vsub.f32 0.0, %v2832
      %v3025 = vsub.f32 0.0, %v2837
      %v3026 = vsub.f32 0.0, %v2840
      %v3027 = vsub.f32 0.0, %v2845
      %v3028 = vsub.f32 0.0, %v2848
      %v3029 = vsub.f32 0.0, %v2853
      %v3030 = vsub.f32 0.0, %v2856
      %v3031 = vsub.f32 0.0, %v2861
      %v3032 = vsub.f32 0.0, %v2864
      %v3033 = vsub.f32 0.0, %v2869
      %v3034 = vsub.f32 0.0, %v2872
      %v3035 = vsub.f32 0.0, %v2877
      %v3036 = vsub.f32 0.0, %v2880
      %v3037 = vsub.f32 0.0, %v2885
      %v3038 = vsub.f32 0.0, %v2888
      %v3039 = vsub.f32 0.0, %v2893
      %v3040 = vsub.f32 0.0, %v2896
      %v3041 = vsub.f32 0.0, %v2901
      %v3042 = vsub.f32 0.0, %v2904
      %v3043 = vsub.f32 0.0, %v2909
      %v3044 = vsub.f32 0.0, %v2912
      %v3045 = vsub.f32 0.0, %v2917
      %v3046 = vsub.f32 0.0, %v2920
      %v3047 = vsub.f32 0.0, %v2925
      %v3048 = vsub.f32 0.0, %v2928
      %v3049 = vsub.f32 0.0, %v2933
      %v3050 = vsub.f32 0.0, %v2936
      %v3051 = vsub.f32 0.0, %v2941
      %v3052 = vsub.f32 0.0, %v2944
      %v3053 = vsub.f32 0.0, %v2949
      %v3054 = vsub.f32 0.0, %v2952
      %v3055 = vsub.f32 0.0, %v2957
      %v3056 = vsub.f32 0.0, %v2960
      %v3057 = vsub.f32 0.0, %v2965
      %v3058 = vsub.f32 0.0, %v2968
      %v3059 = vsub.f32 0.0, %v2973
      %v3060 = vsub.f32 0.0, %v2976
      %v3061 = vsub.f32 0.0, %v2981
      %v3062 = vsub.f32 0.0, %v2984
      %v3063 = vsub.f32 0.0, %v2989
      %v3064 = vsub.f32 0.0, %v2992
      %v3065 = vsub.f32 0.0, %v2997
      %v3066 = vsub.f32 0.0, %v3000
      %v3067 = vmul.f32 %v3003, 1.442695
      %v3068 = vpow.pop %v3067
      %v3069 = vmul.f32 %v3004, 1.442695
      %v3070 = vpow.pop %v3069
      %v3071 = vmul.f32 %v3005, 1.442695
      %v3072 = vpow.pop %v3071
      %v3073 = vmul.f32 %v3006, 1.442695
      %v3074 = vpow.pop %v3073
      %v3075 = vmul.f32 %v3007, 1.442695
      %v3076 = vpow.pop %v3075
      %v3077 = vmul.f32 %v3008, 1.442695
      %v3078 = vpow.pop %v3077
      %v3079 = vmul.f32 %v3009, 1.442695
      %v3080 = vpow.pop %v3079
      %v3081 = vmul.f32 %v3010, 1.442695
      %v3082 = vpow.pop %v3081
      %v3083 = vmul.f32 %v3011, 1.442695
      %v3084 = vpow.pop %v3083
      %v3085 = vmul.f32 %v3012, 1.442695
      %v3086 = vpow.pop %v3085
      %v3087 = vmul.f32 %v3013, 1.442695
      %v3088 = vpow.pop %v3087
      %v3089 = vmul.f32 %v3014, 1.442695
      %v3090 = vpow.pop %v3089
      %v3091 = vmul.f32 %v3015, 1.442695
      %v3092 = vpow.pop %v3091
      %v3093 = vmul.f32 %v3016, 1.442695
      %v3094 = vpow.pop %v3093
      %v3095 = vmul.f32 %v3017, 1.442695
      %v3096 = vpow.pop %v3095
      %v3097 = vmul.f32 %v3018, 1.442695
      %v3098 = vpow.pop %v3097
      %v3099 = vmul.f32 %v3019, 1.442695
      %v3100 = vpow.pop %v3099
      %v3101 = vmul.f32 %v3020, 1.442695
      %v3102 = vpow.pop %v3101
      %v3103 = vmul.f32 %v3021, 1.442695
      %v3104 = vpow.pop %v3103
      %v3105 = vmul.f32 %v3022, 1.442695
      %v3106 = vpow.pop %v3105
      %v3107 = vmul.f32 %v3023, 1.442695
      %v3108 = vpow.pop %v3107
      %v3109 = vmul.f32 %v3024, 1.442695
      %v3110 = vpow.pop %v3109
      %v3111 = vmul.f32 %v3025, 1.442695
      %v3112 = vpow.pop %v3111
      %v3113 = vmul.f32 %v3026, 1.442695
      %v3114 = vpow.pop %v3113
      %v3115 = vmul.f32 %v3027, 1.442695
      %v3116 = vpow.pop %v3115
      %v3117 = vmul.f32 %v3028, 1.442695
      %v3118 = vpow.pop %v3117
      %v3119 = vmul.f32 %v3029, 1.442695
      %v3120 = vpow.pop %v3119
      %v3121 = vmul.f32 %v3030, 1.442695
      %v3122 = vpow.pop %v3121
      %v3123 = vmul.f32 %v3031, 1.442695
      %v3124 = vpow.pop %v3123
      %v3125 = vmul.f32 %v3032, 1.442695
      %v3126 = vpow.pop %v3125
      %v3127 = vmul.f32 %v3033, 1.442695
      %v3128 = vpow.pop %v3127
      %v3129 = vmul.f32 %v3034, 1.442695
      %v3130 = vpow.pop %v3129
      %v3131 = vmul.f32 %v3035, 1.442695
      %v3132 = vpow.pop %v3131
      %v3133 = vmul.f32 %v3036, 1.442695
      %v3134 = vpow.pop %v3133
      %v3135 = vmul.f32 %v3037, 1.442695
      %v3136 = vpow.pop %v3135
      %v3137 = vmul.f32 %v3038, 1.442695
      %v3138 = vpow.pop %v3137
      %v3139 = vmul.f32 %v3039, 1.442695
      %v3140 = vpow.pop %v3139
      %v3141 = vmul.f32 %v3040, 1.442695
      %v3142 = vpow.pop %v3141
      %v3143 = vmul.f32 %v3041, 1.442695
      %v3144 = vpow.pop %v3143
      %v3145 = vmul.f32 %v3042, 1.442695
      %v3146 = vpow.pop %v3145
      %v3147 = vmul.f32 %v3043, 1.442695
      %v3148 = vpow.pop %v3147
      %v3149 = vmul.f32 %v3044, 1.442695
      %v3150 = vpow.pop %v3149
      %v3151 = vmul.f32 %v3045, 1.442695
      %v3152 = vpow.pop %v3151
      %v3153 = vmul.f32 %v3046, 1.442695
      %v3154 = vpow.pop %v3153
      %v3155 = vmul.f32 %v3047, 1.442695
      %v3156 = vpow.pop %v3155
      %v3157 = vmul.f32 %v3048, 1.442695
      %v3158 = vpow.pop %v3157
      %v3159 = vmul.f32 %v3049, 1.442695
      %v3160 = vpow.pop %v3159
      %v3161 = vmul.f32 %v3050, 1.442695
      %v3162 = vpow.pop %v3161
      %v3163 = vmul.f32 %v3051, 1.442695
      %v3164 = vpow.pop %v3163
      %v3165 = vmul.f32 %v3052, 1.442695
      %v3166 = vpow.pop %v3165
      %v3167 = vmul.f32 %v3053, 1.442695
      %v3168 = vpow.pop %v3167
      %v3169 = vmul.f32 %v3054, 1.442695
      %v3170 = vpow.pop %v3169
      %v3171 = vmul.f32 %v3055, 1.442695
      %v3172 = vpow.pop %v3171
      %v3173 = vmul.f32 %v3056, 1.442695
      %v3174 = vpow.pop %v3173
      %v3175 = vmul.f32 %v3057, 1.442695
      %v3176 = vpow.pop %v3175
      %v3177 = vmul.f32 %v3058, 1.442695
      %v3178 = vpow.pop %v3177
      %v3179 = vmul.f32 %v3059, 1.442695
      %v3180 = vpow.pop %v3179
      %v3181 = vmul.f32 %v3060, 1.442695
      %v3182 = vpow.pop %v3181
      %v3183 = vmul.f32 %v3061, 1.442695
      %v3184 = vpow.pop %v3183
      %v3185 = vmul.f32 %v3062, 1.442695
      %v3186 = vpow.pop %v3185
      %v3187 = vmul.f32 %v3063, 1.442695
      %v3188 = vpow.pop %v3187
      %v3189 = vmul.f32 %v3064, 1.442695
      %v3190 = vpow.pop %v3189
      %v3191 = vmul.f32 %v3065, 1.442695
      %v3192 = vpow.pop %v3191
      %v3193 = vmul.f32 %v3066, 1.442695
      %v3194 = vpow.pop %v3193
      %v3195 = vadd.f32 %v3068, 1.0
      %v3196 = vadd.f32 %v3070, 1.0
      %v3197 = vadd.f32 %v3072, 1.0
      %v3198 = vadd.f32 %v3074, 1.0
      %v3199 = vadd.f32 %v3076, 1.0
      %v3200 = vadd.f32 %v3078, 1.0
      %v3201 = vadd.f32 %v3080, 1.0
      %v3202 = vadd.f32 %v3082, 1.0
      %v3203 = vadd.f32 %v3084, 1.0
      %v3204 = vadd.f32 %v3086, 1.0
      %v3205 = vadd.f32 %v3088, 1.0
      %v3206 = vadd.f32 %v3090, 1.0
      %v3207 = vadd.f32 %v3092, 1.0
      %v3208 = vadd.f32 %v3094, 1.0
      %v3209 = vadd.f32 %v3096, 1.0
      %v3210 = vadd.f32 %v3098, 1.0
      %v3211 = vadd.f32 %v3100, 1.0
      %v3212 = vadd.f32 %v3102, 1.0
      %v3213 = vadd.f32 %v3104, 1.0
      %v3214 = vadd.f32 %v3106, 1.0
      %v3215 = vadd.f32 %v3108, 1.0
      %v3216 = vadd.f32 %v3110, 1.0
      %v3217 = vadd.f32 %v3112, 1.0
      %v3218 = vadd.f32 %v3114, 1.0
      %v3219 = vadd.f32 %v3116, 1.0
      %v3220 = vadd.f32 %v3118, 1.0
      %v3221 = vadd.f32 %v3120, 1.0
      %v3222 = vadd.f32 %v3122, 1.0
      %v3223 = vadd.f32 %v3124, 1.0
      %v3224 = vadd.f32 %v3126, 1.0
      %v3225 = vadd.f32 %v3128, 1.0
      %v3226 = vadd.f32 %v3130, 1.0
      %v3227 = vadd.f32 %v3132, 1.0
      %v3228 = vadd.f32 %v3134, 1.0
      %v3229 = vadd.f32 %v3136, 1.0
      %v3230 = vadd.f32 %v3138, 1.0
      %v3231 = vadd.f32 %v3140, 1.0
      %v3232 = vadd.f32 %v3142, 1.0
      %v3233 = vadd.f32 %v3144, 1.0
      %v3234 = vadd.f32 %v3146, 1.0
      %v3235 = vadd.f32 %v3148, 1.0
      %v3236 = vadd.f32 %v3150, 1.0
      %v3237 = vadd.f32 %v3152, 1.0
      %v3238 = vadd.f32 %v3154, 1.0
      %v3239 = vadd.f32 %v3156, 1.0
      %v3240 = vadd.f32 %v3158, 1.0
      %v3241 = vadd.f32 %v3160, 1.0
      %v3242 = vadd.f32 %v3162, 1.0
      %v3243 = vadd.f32 %v3164, 1.0
      %v3244 = vadd.f32 %v3166, 1.0
      %v3245 = vadd.f32 %v3168, 1.0
      %v3246 = vadd.f32 %v3170, 1.0
      %v3247 = vadd.f32 %v3172, 1.0
      %v3248 = vadd.f32 %v3174, 1.0
      %v3249 = vadd.f32 %v3176, 1.0
      %v3250 = vadd.f32 %v3178, 1.0
      %v3251 = vadd.f32 %v3180, 1.0
      %v3252 = vadd.f32 %v3182, 1.0
      %v3253 = vadd.f32 %v3184, 1.0
      %v3254 = vadd.f32 %v3186, 1.0
      %v3255 = vadd.f32 %v3188, 1.0
      %v3256 = vadd.f32 %v3190, 1.0
      %v3257 = vadd.f32 %v3192, 1.0
      %v3258 = vadd.f32 %v3194, 1.0
      %v3259 = vrcp.pop %v3195
      %v3260 = vrcp.pop %v3196
      %v3261 = vrcp.pop %v3197
      %v3262 = vrcp.pop %v3198
      %v3263 = vrcp.pop %v3199
      %v3264 = vrcp.pop %v3200
      %v3265 = vrcp.pop %v3201
      %v3266 = vrcp.pop %v3202
      %v3267 = vrcp.pop %v3203
      %v3268 = vrcp.pop %v3204
      %v3269 = vrcp.pop %v3205
      %v3270 = vrcp.pop %v3206
      %v3271 = vrcp.pop %v3207
      %v3272 = vrcp.pop %v3208
      %v3273 = vrcp.pop %v3209
      %v3274 = vrcp.pop %v3210
      %v3275 = vrcp.pop %v3211
      %v3276 = vrcp.pop %v3212
      %v3277 = vrcp.pop %v3213
      %v3278 = vrcp.pop %v3214
      %v3279 = vrcp.pop %v3215
      %v3280 = vrcp.pop %v3216
      %v3281 = vrcp.pop %v3217
      %v3282 = vrcp.pop %v3218
      %v3283 = vrcp.pop %v3219
      %v3284 = vrcp.pop %v3220
      %v3285 = vrcp.pop %v3221
      %v3286 = vrcp.pop %v3222
      %v3287 = vrcp.pop %v3223
      %v3288 = vrcp.pop %v3224
      %v3289 = vrcp.pop %v3225
      %v3290 = vrcp.pop %v3226
      %v3291 = vrcp.pop %v3227
      %v3292 = vrcp.pop %v3228
      %v3293 = vrcp.pop %v3229
      %v3294 = vrcp.pop %v3230
      %v3295 = vrcp.pop %v3231
      %v3296 = vrcp.pop %v3232
      %v3297 = vrcp.pop %v3233
      %v3298 = vrcp.pop %v3234
      %v3299 = vrcp.pop %v3235
      %v3300 = vrcp.pop %v3236
      %v3301 = vrcp.pop %v3237
      %v3302 = vrcp.pop %v3238
      %v3303 = vrcp.pop %v3239
      %v3304 = vrcp.pop %v3240
      %v3305 = vrcp.pop %v3241
      %v3306 = vrcp.pop %v3242
      %v3307 = vrcp.pop %v3243
      %v3308 = vrcp.pop %v3244
      %v3309 = vrcp.pop %v3245
      %v3310 = vrcp.pop %v3246
      %v3311 = vrcp.pop %v3247
      %v3312 = vrcp.pop %v3248
      %v3313 = vrcp.pop %v3249
      %v3314 = vrcp.pop %v3250
      %v3315 = vrcp.pop %v3251
      %v3316 = vrcp.pop %v3252
      %v3317 = vrcp.pop %v3253
      %v3318 = vrcp.pop %v3254
      %v3319 = vrcp.pop %v3255
      %v3320 = vrcp.pop %v3256
      %v3321 = vrcp.pop %v3257
      %v3322 = vrcp.pop %v3258
      %v3323 = vpack.c.bf16 %v3260, %v3259
      %v3324 = vpack.c.bf16 %v3262, %v3261
      %v3325 = vpack.c.bf16 %v3264, %v3263
      %v3326 = vpack.c.bf16 %v3266, %v3265
      %v3327 = vpack.c.bf16 %v3268, %v3267
      %v3328 = vpack.c.bf16 %v3270, %v3269
      %v3329 = vpack.c.bf16 %v3272, %v3271
      %v3330 = vpack.c.bf16 %v3274, %v3273
      %v3331 = vpack.c.bf16 %v3276, %v3275
      %v3332 = vpack.c.bf16 %v3278, %v3277
      %v3333 = vpack.c.bf16 %v3280, %v3279
      %v3334 = vpack.c.bf16 %v3282, %v3281
      %v3335 = vpack.c.bf16 %v3284, %v3283
      %v3336 = vpack.c.bf16 %v3286, %v3285
      %v3337 = vpack.c.bf16 %v3288, %v3287
      %v3338 = vpack.c.bf16 %v3290, %v3289
      %v3339 = vpack.c.bf16 %v3292, %v3291
      %v3340 = vpack.c.bf16 %v3294, %v3293
      %v3341 = vpack.c.bf16 %v3296, %v3295
      %v3342 = vpack.c.bf16 %v3298, %v3297
      %v3343 = vpack.c.bf16 %v3300, %v3299
      %v3344 = vpack.c.bf16 %v3302, %v3301
      %v3345 = vpack.c.bf16 %v3304, %v3303
      %v3346 = vpack.c.bf16 %v3306, %v3305
      %v3347 = vpack.c.bf16 %v3308, %v3307
      %v3348 = vpack.c.bf16 %v3310, %v3309
      %v3349 = vpack.c.bf16 %v3312, %v3311
      %v3350 = vpack.c.bf16 %v3314, %v3313
      %v3351 = vpack.c.bf16 %v3316, %v3315
      %v3352 = vpack.c.bf16 %v3318, %v3317
      %v3353 = vpack.c.bf16 %v3320, %v3319
      %v3354 = vpack.c.bf16 %v3322, %v3321
      %v3355 = vld [vmem:[%s2] sm:$0xff]
      %v3356 = vld [vmem:[%s2 + $0x8] sm:$0xff]
      %v3357 = vld [vmem:[%s2 + $0x10] sm:$0xff]
      %v3358 = vld [vmem:[%s2 + $0x18] sm:$0xff]
      %v3359 = vld [vmem:[%s2 + $0x20] sm:$0xff]
      %v3360 = vld [vmem:[%s2 + $0x28] sm:$0xff]
      %v3361 = vld [vmem:[%s2 + $0x30] sm:$0xff]
      %v3362 = vld [vmem:[%s2 + $0x38] sm:$0xff]
      %v3363 = vld [vmem:[%s2 + $0x40] sm:$0xff]
      %v3364 = vld [vmem:[%s2 + $0x48] sm:$0xff]
      %v3365 = vld [vmem:[%s2 + $0x50] sm:$0xff]
      %v3366 = vld [vmem:[%s2 + $0x58] sm:$0xff]
      %v3367 = vld [vmem:[%s2 + $0x60] sm:$0xff]
      %v3368 = vld [vmem:[%s2 + $0x68] sm:$0xff]
      %v3369 = vld [vmem:[%s2 + $0x70] sm:$0xff]
      %v3370 = vld [vmem:[%s2 + $0x78] sm:$0xff]
      %v3371 = vld [vmem:[%s2 + $0x80] sm:$0xff]
      %v3372 = vld [vmem:[%s2 + $0x88] sm:$0xff]
      %v3373 = vld [vmem:[%s2 + $0x90] sm:$0xff]
      %v3374 = vld [vmem:[%s2 + $0x98] sm:$0xff]
      %v3375 = vld [vmem:[%s2 + $0xa0] sm:$0xff]
      %v3376 = vld [vmem:[%s2 + $0xa8] sm:$0xff]
      %v3377 = vld [vmem:[%s2 + $0xb0] sm:$0xff]
      %v3378 = vld [vmem:[%s2 + $0xb8] sm:$0xff]
      %v3379 = vld [vmem:[%s2 + $0xc0] sm:$0xff]
      %v3380 = vld [vmem:[%s2 + $0xc8] sm:$0xff]
      %v3381 = vld [vmem:[%s2 + $0xd0] sm:$0xff]
      %v3382 = vld [vmem:[%s2 + $0xd8] sm:$0xff]
      %v3383 = vld [vmem:[%s2 + $0xe0] sm:$0xff]
      %v3384 = vld [vmem:[%s2 + $0xe8] sm:$0xff]
      %v3385 = vld [vmem:[%s2 + $0xf0] sm:$0xff]
      %v3386 = vld [vmem:[%s2 + $0xf8] sm:$0xff]
      %v3419 = vunpack.c.l.b16 %v3355
      %v3420 = vunpack.c.h.b16 %v3355
      %v3421 = vunpack.c.l.b16 %v3356
      %v3422 = vunpack.c.h.b16 %v3356
      %v3423 = vunpack.c.l.b16 %v3357
      %v3424 = vunpack.c.h.b16 %v3357
      %v3425 = vunpack.c.l.b16 %v3358
      %v3426 = vunpack.c.h.b16 %v3358
      %v3427 = vunpack.c.l.b16 %v3359
      %v3428 = vunpack.c.h.b16 %v3359
      %v3429 = vunpack.c.l.b16 %v3360
      %v3430 = vunpack.c.h.b16 %v3360
      %v3431 = vunpack.c.l.b16 %v3361
      %v3432 = vunpack.c.h.b16 %v3361
      %v3433 = vunpack.c.l.b16 %v3362
      %v3434 = vunpack.c.h.b16 %v3362
      %v3435 = vunpack.c.l.b16 %v3363
      %v3436 = vunpack.c.h.b16 %v3363
      %v3437 = vunpack.c.l.b16 %v3364
      %v3438 = vunpack.c.h.b16 %v3364
      %v3439 = vunpack.c.l.b16 %v3365
      %v3440 = vunpack.c.h.b16 %v3365
      %v3441 = vunpack.c.l.b16 %v3366
      %v3442 = vunpack.c.h.b16 %v3366
      %v3443 = vunpack.c.l.b16 %v3367
      %v3444 = vunpack.c.h.b16 %v3367
      %v3445 = vunpack.c.l.b16 %v3368
      %v3446 = vunpack.c.h.b16 %v3368
      %v3447 = vunpack.c.l.b16 %v3369
      %v3448 = vunpack.c.h.b16 %v3369
      %v3449 = vunpack.c.l.b16 %v3370
      %v3450 = vunpack.c.h.b16 %v3370
      %v3451 = vunpack.c.l.b16 %v3371
      %v3452 = vunpack.c.h.b16 %v3371
      %v3453 = vunpack.c.l.b16 %v3372
      %v3454 = vunpack.c.h.b16 %v3372
      %v3455 = vunpack.c.l.b16 %v3373
      %v3456 = vunpack.c.h.b16 %v3373
      %v3457 = vunpack.c.l.b16 %v3374
      %v3458 = vunpack.c.h.b16 %v3374
      %v3459 = vunpack.c.l.b16 %v3375
      %v3460 = vunpack.c.h.b16 %v3375
      %v3461 = vunpack.c.l.b16 %v3376
      %v3462 = vunpack.c.h.b16 %v3376
      %v3463 = vunpack.c.l.b16 %v3377
      %v3464 = vunpack.c.h.b16 %v3377
      %v3465 = vunpack.c.l.b16 %v3378
      %v3466 = vunpack.c.h.b16 %v3378
      %v3467 = vunpack.c.l.b16 %v3379
      %v3468 = vunpack.c.h.b16 %v3379
      %v3469 = vunpack.c.l.b16 %v3380
      %v3470 = vunpack.c.h.b16 %v3380
      %v3471 = vunpack.c.l.b16 %v3381
      %v3472 = vunpack.c.h.b16 %v3381
      %v3473 = vunpack.c.l.b16 %v3382
      %v3474 = vunpack.c.h.b16 %v3382
      %v3475 = vunpack.c.l.b16 %v3383
      %v3476 = vunpack.c.h.b16 %v3383
      %v3477 = vunpack.c.l.b16 %v3384
      %v3478 = vunpack.c.h.b16 %v3384
      %v3479 = vunpack.c.l.b16 %v3385
      %v3480 = vunpack.c.h.b16 %v3385
      %v3481 = vunpack.c.l.b16 %v3386
      %v3482 = vunpack.c.h.b16 %v3386
      %v3483 = vpack.c.b16 %v3421, %v3419
      %v3484 = vpack.c.b16 %v3422, %v3420
      %v3485 = vpack.c.b16 %v3425, %v3423
      %v3486 = vpack.c.b16 %v3426, %v3424
      %v3487 = vpack.c.b16 %v3429, %v3427
      %v3488 = vpack.c.b16 %v3430, %v3428
      %v3489 = vpack.c.b16 %v3433, %v3431
      %v3490 = vpack.c.b16 %v3434, %v3432
      %v3491 = vpack.c.b16 %v3437, %v3435
      %v3492 = vpack.c.b16 %v3438, %v3436
      %v3493 = vpack.c.b16 %v3441, %v3439
      %v3494 = vpack.c.b16 %v3442, %v3440
      %v3495 = vpack.c.b16 %v3445, %v3443
      %v3496 = vpack.c.b16 %v3446, %v3444
      %v3497 = vpack.c.b16 %v3449, %v3447
      %v3498 = vpack.c.b16 %v3450, %v3448
      %v3499 = vpack.c.b16 %v3453, %v3451
      %v3500 = vpack.c.b16 %v3454, %v3452
      %v3501 = vpack.c.b16 %v3457, %v3455
      %v3502 = vpack.c.b16 %v3458, %v3456
      %v3503 = vpack.c.b16 %v3461, %v3459
      %v3504 = vpack.c.b16 %v3462, %v3460
      %v3505 = vpack.c.b16 %v3465, %v3463
      %v3506 = vpack.c.b16 %v3466, %v3464
      %v3507 = vpack.c.b16 %v3469, %v3467
      %v3508 = vpack.c.b16 %v3470, %v3468
      %v3509 = vpack.c.b16 %v3473, %v3471
      %v3510 = vpack.c.b16 %v3474, %v3472
      %v3511 = vpack.c.b16 %v3477, %v3475
      %v3512 = vpack.c.b16 %v3478, %v3476
      %v3513 = vpack.c.b16 %v3481, %v3479
      %v3514 = vpack.c.b16 %v3482, %v3480
      %3547 = vmatprep.subr.bf16.mxu0 0
      %3548 = vmatpush1.bf16.msra.mxu0 %v3323
      %3549 = vmatprep.subr.bf16.mxu0 0
      %3550 = vmatpush1.bf16.msra.mxu0 %v3324
      %3551 = vmatprep.subr.bf16.mxu0 0
      %3552 = vmatpush1.bf16.msra.mxu0 %v3325
      %3553 = vmatprep.subr.bf16.mxu0 0
      %3554 = vmatpush1.bf16.msra.mxu0 %v3326
      %3555 = vmatprep.subr.bf16.mxu0 0
      %3556 = vmatpush1.bf16.msra.mxu0 %v3327
      %3557 = vmatprep.subr.bf16.mxu0 0
      %3558 = vmatpush1.bf16.msra.mxu0 %v3328
      %3559 = vmatprep.subr.bf16.mxu0 0
      %3560 = vmatpush1.bf16.msra.mxu0 %v3329
      %3561 = vmatprep.subr.bf16.mxu0 0
      %3562 = vmatpush1.bf16.msra.mxu0 %v3330
      %3563 = vmatprep.subr.bf16.mxu0 0
      %3564 = vmatpush1.bf16.msra.mxu0 %v3331
      %3565 = vmatprep.subr.bf16.mxu0 0
      %3566 = vmatpush1.bf16.msra.mxu0 %v3332
      %3567 = vmatprep.subr.bf16.mxu0 0
      %3568 = vmatpush1.bf16.msra.mxu0 %v3333
      %3569 = vmatprep.subr.bf16.mxu0 0
      %3570 = vmatpush1.bf16.msra.mxu0 %v3334
      %3571 = vmatprep.subr.bf16.mxu0 0
      %3572 = vmatpush1.bf16.msra.mxu0 %v3335
      %3573 = vmatprep.subr.bf16.mxu0 0
      %3574 = vmatpush1.bf16.msra.mxu0 %v3336
      %3575 = vmatprep.subr.bf16.mxu0 0
      %3576 = vmatpush1.bf16.msra.mxu0 %v3337
      %3577 = vmatprep.subr.bf16.mxu0 0
      %3578 = vmatpush1.bf16.msra.mxu0 %v3338
      %3579 = vmatprep.mubr.bf16.mxu0 %v3484
      %3580 = vmatmul.mubr.bf16.gmra.mrb[0].mxu0 %v3483
      %v3581 = vpop.f32.mrb[0].mxu0
      %v3582 = vadd.f32 0.0, %v3581
      %v3583 = vpop.f32.mrb[0].mxu0
      %v3584 = vpop.f32.mrb[0].mxu0
      %v3585 = vadd.f32 0.0, %v3584
      %v3586 = vpop.f32.mrb[0].mxu0
      %3587 = vmatprep.mubr.bf16.mxu0 %v3486
      %3588 = vmatmul.mubr.bf16.gmra.mrb[0].mxu0 %v3485
      %v3589 = vpop.f32.mrb[0].mxu0
      %v3590 = vadd.f32 0.0, %v3589
      %v3591 = vpop.f32.mrb[0].mxu0
      %v3592 = vpop.f32.mrb[0].mxu0
      %v3593 = vadd.f32 0.0, %v3592
      %v3594 = vpop.f32.mrb[0].mxu0
      %3595 = vmatprep.mubr.bf16.mxu0 %v3488
      %3596 = vmatmul.mubr.bf16.gmra.mrb[0].mxu0 %v3487
      %v3597 = vpop.f32.mrb[0].mxu0
      %v3598 = vadd.f32 0.0, %v3597
      %v3599 = vpop.f32.mrb[0].mxu0
      %v3600 = vpop.f32.mrb[0].mxu0
      %v3601 = vadd.f32 0.0, %v3600
      %v3602 = vpop.f32.mrb[0].mxu0
      %3603 = vmatprep.mubr.bf16.mxu0 %v3490
      %3604 = vmatmul.mubr.bf16.gmra.mrb[0].mxu0 %v3489
      %v3605 = vpop.f32.mrb[0].mxu0
      %v3606 = vadd.f32 0.0, %v3605
      %v3607 = vpop.f32.mrb[0].mxu0
      %v3608 = vpop.f32.mrb[0].mxu0
      %v3609 = vadd.f32 0.0, %v3608
      %v3610 = vpop.f32.mrb[0].mxu0
      %3611 = vmatprep.mubr.bf16.mxu0 %v3492
      %3612 = vmatmul.mubr.bf16.gmra.mrb[0].mxu0 %v3491
      %v3613 = vpop.f32.mrb[0].mxu0
      %v3614 = vadd.f32 0.0, %v3613
      %v3615 = vpop.f32.mrb[0].mxu0
      %v3616 = vpop.f32.mrb[0].mxu0
      %v3617 = vadd.f32 0.0, %v3616
      %v3618 = vpop.f32.mrb[0].mxu0
      %3619 = vmatprep.mubr.bf16.mxu0 %v3494
      %3620 = vmatmul.mubr.bf16.gmra.mrb[0].mxu0 %v3493
      %v3621 = vpop.f32.mrb[0].mxu0
      %v3622 = vadd.f32 0.0, %v3621
      %v3623 = vpop.f32.mrb[0].mxu0
      %v3624 = vpop.f32.mrb[0].mxu0
      %v3625 = vadd.f32 0.0, %v3624
      %v3626 = vpop.f32.mrb[0].mxu0
      %3627 = vmatprep.mubr.bf16.mxu0 %v3496
      %3628 = vmatmul.mubr.bf16.gmra.mrb[0].mxu0 %v3495
      %v3629 = vpop.f32.mrb[0].mxu0
      %v3630 = vadd.f32 0.0, %v3629
      %v3631 = vpop.f32.mrb[0].mxu0
      %v3632 = vpop.f32.mrb[0].mxu0
      %v3633 = vadd.f32 0.0, %v3632
      %v3634 = vpop.f32.mrb[0].mxu0
      %3635 = vmatprep.mubr.bf16.mxu0 %v3498
      %3636 = vmatmul.mubr.bf16.gmra.mrb[0].mxu0 %v3497
      %v3637 = vpop.f32.mrb[0].mxu0
      %v3638 = vadd.f32 0.0, %v3637
      %v3639 = vpop.f32.mrb[0].mxu0
      %v3640 = vpop.f32.mrb[0].mxu0
      %v3641 = vadd.f32 0.0, %v3640
      %v3642 = vpop.f32.mrb[0].mxu0
      %3643 = vmatprep.mubr.bf16.mxu0 %v3500
      %3644 = vmatmul.mubr.bf16.gmra.mrb[0].mxu0 %v3499
      %v3645 = vpop.f32.mrb[0].mxu0
      %v3646 = vadd.f32 0.0, %v3645
      %v3647 = vpop.f32.mrb[0].mxu0
      %v3648 = vpop.f32.mrb[0].mxu0
      %v3649 = vadd.f32 0.0, %v3648
      %v3650 = vpop.f32.mrb[0].mxu0
      %3651 = vmatprep.mubr.bf16.mxu0 %v3502
      %3652 = vmatmul.mubr.bf16.gmra.mrb[0].mxu0 %v3501
      %v3653 = vpop.f32.mrb[0].mxu0
      %v3654 = vadd.f32 0.0, %v3653
      %v3655 = vpop.f32.mrb[0].mxu0
      %v3656 = vpop.f32.mrb[0].mxu0
      %v3657 = vadd.f32 0.0, %v3656
      %v3658 = vpop.f32.mrb[0].mxu0
      %3659 = vmatprep.mubr.bf16.mxu0 %v3504
      %3660 = vmatmul.mubr.bf16.gmra.mrb[0].mxu0 %v3503
      %v3661 = vpop.f32.mrb[0].mxu0
      %v3662 = vadd.f32 0.0, %v3661
      %v3663 = vpop.f32.mrb[0].mxu0
      %v3664 = vpop.f32.mrb[0].mxu0
      %v3665 = vadd.f32 0.0, %v3664
      %v3666 = vpop.f32.mrb[0].mxu0
      %3667 = vmatprep.mubr.bf16.mxu0 %v3506
      %3668 = vmatmul.mubr.bf16.gmra.mrb[0].mxu0 %v3505
      %v3669 = vpop.f32.mrb[0].mxu0
      %v3670 = vadd.f32 0.0, %v3669
      %v3671 = vpop.f32.mrb[0].mxu0
      %v3672 = vpop.f32.mrb[0].mxu0
      %v3673 = vadd.f32 0.0, %v3672
      %v3674 = vpop.f32.mrb[0].mxu0
      %3675 = vmatprep.mubr.bf16.mxu0 %v3508
      %3676 = vmatmul.mubr.bf16.gmra.mrb[0].mxu0 %v3507
      %v3677 = vpop.f32.mrb[0].mxu0
      %v3678 = vadd.f32 0.0, %v3677
      %v3679 = vpop.f32.mrb[0].mxu0
      %v3680 = vpop.f32.mrb[0].mxu0
      %v3681 = vadd.f32 0.0, %v3680
      %v3682 = vpop.f32.mrb[0].mxu0
      %3683 = vmatprep.mubr.bf16.mxu0 %v3510
      %3684 = vmatmul.mubr.bf16.gmra.mrb[0].mxu0 %v3509
      %v3685 = vpop.f32.mrb[0].mxu0
      %v3686 = vadd.f32 0.0, %v3685
      %v3687 = vpop.f32.mrb[0].mxu0
      %v3688 = vpop.f32.mrb[0].mxu0
      %v3689 = vadd.f32 0.0, %v3688
      %v3690 = vpop.f32.mrb[0].mxu0
      %3691 = vmatprep.mubr.bf16.mxu0 %v3512
      %3692 = vmatmul.mubr.bf16.gmra.mrb[0].mxu0 %v3511
      %v3693 = vpop.f32.mrb[0].mxu0
      %v3694 = vadd.f32 0.0, %v3693
      %v3695 = vpop.f32.mrb[0].mxu0
      %v3696 = vpop.f32.mrb[0].mxu0
      %v3697 = vadd.f32 0.0, %v3696
      %v3698 = vpop.f32.mrb[0].mxu0
      %3699 = vmatprep.mubr.bf16.mxu0 %v3514
      %3700 = vmatmul.mubr.bf16.gmra.mrb[0].mxu0 %v3513
      %v3701 = vpop.f32.mrb[0].mxu0
      %v3702 = vadd.f32 0.0, %v3701
      %v3703 = vpop.f32.mrb[0].mxu0
      %v3704 = vpop.f32.mrb[0].mxu0
      %v3705 = vadd.f32 0.0, %v3704
      %v3706 = vpop.f32.mrb[0].mxu0
      %3707 = vdwg.mxu0
      %v3708 = vld [vmem:[%s357] sm:$0xf]
      %v3709 = vld [vmem:[%s357 + $0x4] sm:$0xf]
      %v3710 = vld [vmem:[%s357 + $0x8] sm:$0xf]
      %v3711 = vld [vmem:[%s357 + $0xc] sm:$0xf]
      %v3712 = vld [vmem:[%s357 + $0x10] sm:$0xf]
      %v3713 = vld [vmem:[%s357 + $0x14] sm:$0xf]
      %v3714 = vld [vmem:[%s357 + $0x18] sm:$0xf]
      %v3715 = vld [vmem:[%s357 + $0x1c] sm:$0xf]
      %v3716 = vld [vmem:[%s357 + $0x20] sm:$0xf]
      %v3717 = vld [vmem:[%s357 + $0x24] sm:$0xf]
      %v3718 = vld [vmem:[%s357 + $0x28] sm:$0xf]
      %v3719 = vld [vmem:[%s357 + $0x2c] sm:$0xf]
      %v3720 = vld [vmem:[%s357 + $0x30] sm:$0xf]
      %v3721 = vld [vmem:[%s357 + $0x34] sm:$0xf]
      %v3722 = vld [vmem:[%s357 + $0x38] sm:$0xf]
      %v3723 = vld [vmem:[%s357 + $0x3c] sm:$0xf]
      %v3724 = vld [vmem:[%s357 + $0x40] sm:$0xf]
      %v3725 = vld [vmem:[%s357 + $0x44] sm:$0xf]
      %v3726 = vld [vmem:[%s357 + $0x48] sm:$0xf]
      %v3727 = vld [vmem:[%s357 + $0x4c] sm:$0xf]
      %v3728 = vld [vmem:[%s357 + $0x50] sm:$0xf]
      %v3729 = vld [vmem:[%s357 + $0x54] sm:$0xf]
      %v3730 = vld [vmem:[%s357 + $0x58] sm:$0xf]
      %v3731 = vld [vmem:[%s357 + $0x5c] sm:$0xf]
      %v3732 = vld [vmem:[%s357 + $0x60] sm:$0xf]
      %v3733 = vld [vmem:[%s357 + $0x64] sm:$0xf]
      %v3734 = vld [vmem:[%s357 + $0x68] sm:$0xf]
      %v3735 = vld [vmem:[%s357 + $0x6c] sm:$0xf]
      %v3736 = vld [vmem:[%s357 + $0x70] sm:$0xf]
      %v3737 = vld [vmem:[%s357 + $0x74] sm:$0xf]
      %v3738 = vld [vmem:[%s357 + $0x78] sm:$0xf]
      %v3739 = vld [vmem:[%s357 + $0x7c] sm:$0xf]
      %v3740 = vunpack.c.l.bf16 %v3708
      %v3741 = vunpack.c.l.bf16 %v3709
      %v3742 = vunpack.c.l.bf16 %v3710
      %v3743 = vunpack.c.l.bf16 %v3711
      %v3744 = vunpack.c.l.bf16 %v3712
      %v3745 = vunpack.c.l.bf16 %v3713
      %v3746 = vunpack.c.l.bf16 %v3714
      %v3747 = vunpack.c.l.bf16 %v3715
      %v3748 = vunpack.c.l.bf16 %v3716
      %v3749 = vunpack.c.l.bf16 %v3717
      %v3750 = vunpack.c.l.bf16 %v3718
      %v3751 = vunpack.c.l.bf16 %v3719
      %v3752 = vunpack.c.l.bf16 %v3720
      %v3753 = vunpack.c.l.bf16 %v3721
      %v3754 = vunpack.c.l.bf16 %v3722
      %v3755 = vunpack.c.l.bf16 %v3723
      %v3756 = vunpack.c.l.bf16 %v3724
      %v3757 = vunpack.c.l.bf16 %v3725
      %v3758 = vunpack.c.l.bf16 %v3726
      %v3759 = vunpack.c.l.bf16 %v3727
      %v3760 = vunpack.c.l.bf16 %v3728
      %v3761 = vunpack.c.l.bf16 %v3729
      %v3762 = vunpack.c.l.bf16 %v3730
      %v3763 = vunpack.c.l.bf16 %v3731
      %v3764 = vunpack.c.l.bf16 %v3732
      %v3765 = vunpack.c.l.bf16 %v3733
      %v3766 = vunpack.c.l.bf16 %v3734
      %v3767 = vunpack.c.l.bf16 %v3735
      %v3768 = vunpack.c.l.bf16 %v3736
      %v3769 = vunpack.c.l.bf16 %v3737
      %v3770 = vunpack.c.l.bf16 %v3738
      %v3771 = vunpack.c.l.bf16 %v3739
      %v3772 = vmul.f32 %v3582, %v3740
      %v3773 = vmul.f32 %v3585, %v3741
      %v3774 = vmul.f32 %v3590, %v3742
      %v3775 = vmul.f32 %v3593, %v3743
      %v3776 = vmul.f32 %v3598, %v3744
      %v3777 = vmul.f32 %v3601, %v3745
      %v3778 = vmul.f32 %v3606, %v3746
      %v3779 = vmul.f32 %v3609, %v3747
      %v3780 = vmul.f32 %v3614, %v3748
      %v3781 = vmul.f32 %v3617, %v3749
      %v3782 = vmul.f32 %v3622, %v3750
      %v3783 = vmul.f32 %v3625, %v3751
      %v3784 = vmul.f32 %v3630, %v3752
      %v3785 = vmul.f32 %v3633, %v3753
      %v3786 = vmul.f32 %v3638, %v3754
      %v3787 = vmul.f32 %v3641, %v3755
      %v3788 = vmul.f32 %v3646, %v3756
      %v3789 = vmul.f32 %v3649, %v3757
      %v3790 = vmul.f32 %v3654, %v3758
      %v3791 = vmul.f32 %v3657, %v3759
      %v3792 = vmul.f32 %v3662, %v3760
      %v3793 = vmul.f32 %v3665, %v3761
      %v3794 = vmul.f32 %v3670, %v3762
      %v3795 = vmul.f32 %v3673, %v3763
      %v3796 = vmul.f32 %v3678, %v3764
      %v3797 = vmul.f32 %v3681, %v3765
      %v3798 = vmul.f32 %v3686, %v3766
      %v3799 = vmul.f32 %v3689, %v3767
      %v3800 = vmul.f32 %v3694, %v3768
      %v3801 = vmul.f32 %v3697, %v3769
      %v3802 = vmul.f32 %v3702, %v3770
      %v3803 = vmul.f32 %v3705, %v3771
      %vm3804 = vcmask 261120
      %3805 = vst.msk [vmem:[%s364] sm:$0xff] %vm3804, %v3772
      %3806 = vst.msk [vmem:[%s364 + $0x8] sm:$0xff] %vm3804, %v3773
      %3807 = vst.msk [vmem:[%s364 + $0x10] sm:$0xff] %vm3804, %v3774
      %3808 = vst.msk [vmem:[%s364 + $0x18] sm:$0xff] %vm3804, %v3775
      %3809 = vst.msk [vmem:[%s364 + $0x20] sm:$0xff] %vm3804, %v3776
      %3810 = vst.msk [vmem:[%s364 + $0x28] sm:$0xff] %vm3804, %v3777
      %3811 = vst.msk [vmem:[%s364 + $0x30] sm:$0xff] %vm3804, %v3778
      %3812 = vst.msk [vmem:[%s364 + $0x38] sm:$0xff] %vm3804, %v3779
      %3813 = vst.msk [vmem:[%s364 + $0x40] sm:$0xff] %vm3804, %v3780
      %3814 = vst.msk [vmem:[%s364 + $0x48] sm:$0xff] %vm3804, %v3781
      %3815 = vst.msk [vmem:[%s364 + $0x50] sm:$0xff] %vm3804, %v3782
      %3816 = vst.msk [vmem:[%s364 + $0x58] sm:$0xff] %vm3804, %v3783
      %3817 = vst.msk [vmem:[%s364 + $0x60] sm:$0xff] %vm3804, %v3784
      %3818 = vst.msk [vmem:[%s364 + $0x68] sm:$0xff] %vm3804, %v3785
      %3819 = vst.msk [vmem:[%s364 + $0x70] sm:$0xff] %vm3804, %v3786
      %3820 = vst.msk [vmem:[%s364 + $0x78] sm:$0xff] %vm3804, %v3787
      %3821 = vst.msk [vmem:[%s364 + $0x80] sm:$0xff] %vm3804, %v3788
      %3822 = vst.msk [vmem:[%s364 + $0x88] sm:$0xff] %vm3804, %v3789
      %3823 = vst.msk [vmem:[%s364 + $0x90] sm:$0xff] %vm3804, %v3790
      %3824 = vst.msk [vmem:[%s364 + $0x98] sm:$0xff] %vm3804, %v3791
      %3825 = vst.msk [vmem:[%s364 + $0xa0] sm:$0xff] %vm3804, %v3792
      %3826 = vst.msk [vmem:[%s364 + $0xa8] sm:$0xff] %vm3804, %v3793
      %3827 = vst.msk [vmem:[%s364 + $0xb0] sm:$0xff] %vm3804, %v3794
      %3828 = vst.msk [vmem:[%s364 + $0xb8] sm:$0xff] %vm3804, %v3795
      %3829 = vst.msk [vmem:[%s364 + $0xc0] sm:$0xff] %vm3804, %v3796
      %3830 = vst.msk [vmem:[%s364 + $0xc8] sm:$0xff] %vm3804, %v3797
      %3831 = vst.msk [vmem:[%s364 + $0xd0] sm:$0xff] %vm3804, %v3798
      %3832 = vst.msk [vmem:[%s364 + $0xd8] sm:$0xff] %vm3804, %v3799
      %3833 = vst.msk [vmem:[%s364 + $0xe0] sm:$0xff] %vm3804, %v3800
      %3834 = vst.msk [vmem:[%s364 + $0xe8] sm:$0xff] %vm3804, %v3801
      %3835 = vst.msk [vmem:[%s364 + $0xf0] sm:$0xff] %vm3804, %v3802
      %3836 = vst.msk [vmem:[%s364 + $0xf8] sm:$0xff] %vm3804, %v3803
      %3837 = vmatprep.subr.bf16.mxu0 0
      %3838 = vmatpush1.bf16.msra.mxu0 %v3339
      %3839 = vmatprep.subr.bf16.mxu0 0
      %3840 = vmatpush1.bf16.msra.mxu0 %v3340
      %3841 = vmatprep.subr.bf16.mxu0 0
      %3842 = vmatpush1.bf16.msra.mxu0 %v3341
      %3843 = vmatprep.subr.bf16.mxu0 0
      %3844 = vmatpush1.bf16.msra.mxu0 %v3342
      %3845 = vmatprep.subr.bf16.mxu0 0
      %3846 = vmatpush1.bf16.msra.mxu0 %v3343
      %3847 = vmatprep.subr.bf16.mxu0 0
      %3848 = vmatpush1.bf16.msra.mxu0 %v3344
      %3849 = vmatprep.subr.bf16.mxu0 0
      %3850 = vmatpush1.bf16.msra.mxu0 %v3345
      %3851 = vmatprep.subr.bf16.mxu0 0
      %3852 = vmatpush1.bf16.msra.mxu0 %v3346
      %3853 = vmatprep.subr.bf16.mxu0 0
      %3854 = vmatpush1.bf16.msra.mxu0 %v3347
      %3855 = vmatprep.subr.bf16.mxu0 0
      %3856 = vmatpush1.bf16.msra.mxu0 %v3348
      %3857 = vmatprep.subr.bf16.mxu0 0
      %3858 = vmatpush1.bf16.msra.mxu0 %v3349
      %3859 = vmatprep.subr.bf16.mxu0 0
      %3860 = vmatpush1.bf16.msra.mxu0 %v3350
      %3861 = vmatprep.subr.bf16.mxu0 0
      %3862 = vmatpush1.bf16.msra.mxu0 %v3351
      %3863 = vmatprep.subr.bf16.mxu0 0
      %3864 = vmatpush1.bf16.msra.mxu0 %v3352
      %3865 = vmatprep.subr.bf16.mxu0 0
      %3866 = vmatpush1.bf16.msra.mxu0 %v3353
      %3867 = vmatprep.subr.bf16.mxu0 0
      %3868 = vmatpush1.bf16.msra.mxu0 %v3354
      %3869 = vmatprep.mubr.bf16.mxu0 %v3484
      %3870 = vmatmul.mubr.bf16.gmra.mrb[0].mxu0 %v3483
      %v3871 = vpop.f32.mrb[0].mxu0
      %v3872 = vadd.f32 0.0, %v3871
      %v3873 = vpop.f32.mrb[0].mxu0
      %v3874 = vpop.f32.mrb[0].mxu0
      %v3875 = vadd.f32 0.0, %v3874
      %v3876 = vpop.f32.mrb[0].mxu0
      %3877 = vmatprep.mubr.bf16.mxu0 %v3486
      %3878 = vmatmul.mubr.bf16.gmra.mrb[0].mxu0 %v3485
      %v3879 = vpop.f32.mrb[0].mxu0
      %v3880 = vadd.f32 0.0, %v3879
      %v3881 = vpop.f32.mrb[0].mxu0
      %v3882 = vpop.f32.mrb[0].mxu0
      %v3883 = vadd.f32 0.0, %v3882
      %v3884 = vpop.f32.mrb[0].mxu0
      %3885 = vmatprep.mubr.bf16.mxu0 %v3488
      %3886 = vmatmul.mubr.bf16.gmra.mrb[0].mxu0 %v3487
      %v3887 = vpop.f32.mrb[0].mxu0
      %v3888 = vadd.f32 0.0, %v3887
      %v3889 = vpop.f32.mrb[0].mxu0
      %v3890 = vpop.f32.mrb[0].mxu0
      %v3891 = vadd.f32 0.0, %v3890
      %v3892 = vpop.f32.mrb[0].mxu0
      %3893 = vmatprep.mubr.bf16.mxu0 %v3490
      %3894 = vmatmul.mubr.bf16.gmra.mrb[0].mxu0 %v3489
      %v3895 = vpop.f32.mrb[0].mxu0
      %v3896 = vadd.f32 0.0, %v3895
      %v3897 = vpop.f32.mrb[0].mxu0
      %v3898 = vpop.f32.mrb[0].mxu0
      %v3899 = vadd.f32 0.0, %v3898
      %v3900 = vpop.f32.mrb[0].mxu0
      %3901 = vmatprep.mubr.bf16.mxu0 %v3492
      %3902 = vmatmul.mubr.bf16.gmra.mrb[0].mxu0 %v3491
      %v3903 = vpop.f32.mrb[0].mxu0
      %v3904 = vadd.f32 0.0, %v3903
      %v3905 = vpop.f32.mrb[0].mxu0
      %v3906 = vpop.f32.mrb[0].mxu0
      %v3907 = vadd.f32 0.0, %v3906
      %v3908 = vpop.f32.mrb[0].mxu0
      %3909 = vmatprep.mubr.bf16.mxu0 %v3494
      %3910 = vmatmul.mubr.bf16.gmra.mrb[0].mxu0 %v3493
      %v3911 = vpop.f32.mrb[0].mxu0
      %v3912 = vadd.f32 0.0, %v3911
      %v3913 = vpop.f32.mrb[0].mxu0
      %v3914 = vpop.f32.mrb[0].mxu0
      %v3915 = vadd.f32 0.0, %v3914
      %v3916 = vpop.f32.mrb[0].mxu0
      %3917 = vmatprep.mubr.bf16.mxu0 %v3496
      %3918 = vmatmul.mubr.bf16.gmra.mrb[0].mxu0 %v3495
      %v3919 = vpop.f32.mrb[0].mxu0
      %v3920 = vadd.f32 0.0, %v3919
      %v3921 = vpop.f32.mrb[0].mxu0
      %v3922 = vpop.f32.mrb[0].mxu0
      %v3923 = vadd.f32 0.0, %v3922
      %v3924 = vpop.f32.mrb[0].mxu0
      %3925 = vmatprep.mubr.bf16.mxu0 %v3498
      %3926 = vmatmul.mubr.bf16.gmra.mrb[0].mxu0 %v3497
      %v3927 = vpop.f32.mrb[0].mxu0
      %v3928 = vadd.f32 0.0, %v3927
      %v3929 = vpop.f32.mrb[0].mxu0
      %v3930 = vpop.f32.mrb[0].mxu0
      %v3931 = vadd.f32 0.0, %v3930
      %v3932 = vpop.f32.mrb[0].mxu0
      %3933 = vmatprep.mubr.bf16.mxu0 %v3500
      %3934 = vmatmul.mubr.bf16.gmra.mrb[0].mxu0 %v3499
      %v3935 = vpop.f32.mrb[0].mxu0
      %v3936 = vadd.f32 0.0, %v3935
      %v3937 = vpop.f32.mrb[0].mxu0
      %v3938 = vpop.f32.mrb[0].mxu0
      %v3939 = vadd.f32 0.0, %v3938
      %v3940 = vpop.f32.mrb[0].mxu0
      %3941 = vmatprep.mubr.bf16.mxu0 %v3502
      %3942 = vmatmul.mubr.bf16.gmra.mrb[0].mxu0 %v3501
      %v3943 = vpop.f32.mrb[0].mxu0
      %v3944 = vadd.f32 0.0, %v3943
      %v3945 = vpop.f32.mrb[0].mxu0
      %v3946 = vpop.f32.mrb[0].mxu0
      %v3947 = vadd.f32 0.0, %v3946
      %v3948 = vpop.f32.mrb[0].mxu0
      %3949 = vmatprep.mubr.bf16.mxu0 %v3504
      %3950 = vmatmul.mubr.bf16.gmra.mrb[0].mxu0 %v3503
      %v3951 = vpop.f32.mrb[0].mxu0
      %v3952 = vadd.f32 0.0, %v3951
      %v3953 = vpop.f32.mrb[0].mxu0
      %v3954 = vpop.f32.mrb[0].mxu0
      %v3955 = vadd.f32 0.0, %v3954
      %v3956 = vpop.f32.mrb[0].mxu0
      %3957 = vmatprep.mubr.bf16.mxu0 %v3506
      %3958 = vmatmul.mubr.bf16.gmra.mrb[0].mxu0 %v3505
      %v3959 = vpop.f32.mrb[0].mxu0
      %v3960 = vadd.f32 0.0, %v3959
      %v3961 = vpop.f32.mrb[0].mxu0
      %v3962 = vpop.f32.mrb[0].mxu0
      %v3963 = vadd.f32 0.0, %v3962
      %v3964 = vpop.f32.mrb[0].mxu0
      %3965 = vmatprep.mubr.bf16.mxu0 %v3508
      %3966 = vmatmul.mubr.bf16.gmra.mrb[0].mxu0 %v3507
      %v3967 = vpop.f32.mrb[0].mxu0
      %v3968 = vadd.f32 0.0, %v3967
      %v3969 = vpop.f32.mrb[0].mxu0
      %v3970 = vpop.f32.mrb[0].mxu0
      %v3971 = vadd.f32 0.0, %v3970
      %v3972 = vpop.f32.mrb[0].mxu0
      %3973 = vmatprep.mubr.bf16.mxu0 %v3510
      %3974 = vmatmul.mubr.bf16.gmra.mrb[0].mxu0 %v3509
      %v3975 = vpop.f32.mrb[0].mxu0
      %v3976 = vadd.f32 0.0, %v3975
      %v3977 = vpop.f32.mrb[0].mxu0
      %v3978 = vpop.f32.mrb[0].mxu0
      %v3979 = vadd.f32 0.0, %v3978
      %v3980 = vpop.f32.mrb[0].mxu0
      %3981 = vmatprep.mubr.bf16.mxu0 %v3512
      %3982 = vmatmul.mubr.bf16.gmra.mrb[0].mxu0 %v3511
      %v3983 = vpop.f32.mrb[0].mxu0
      %v3984 = vadd.f32 0.0, %v3983
      %v3985 = vpop.f32.mrb[0].mxu0
      %v3986 = vpop.f32.mrb[0].mxu0
      %v3987 = vadd.f32 0.0, %v3986
      %v3988 = vpop.f32.mrb[0].mxu0
      %3989 = vmatprep.mubr.bf16.mxu0 %v3514
      %3990 = vmatmul.mubr.bf16.gmra.mrb[0].mxu0 %v3513
      %v3991 = vpop.f32.mrb[0].mxu0
      %v3992 = vadd.f32 0.0, %v3991
      %v3993 = vpop.f32.mrb[0].mxu0
      %v3994 = vpop.f32.mrb[0].mxu0
      %v3995 = vadd.f32 0.0, %v3994
      %v3996 = vpop.f32.mrb[0].mxu0
      %3997 = vdwg.mxu0
      %s3998 = scalar_lea.vmem %s357, 128
      %v3999 = vld [vmem:[%s3998] sm:$0xf]
      %v4000 = vld [vmem:[%s3998 + $0x4] sm:$0xf]
      %v4001 = vld [vmem:[%s3998 + $0x8] sm:$0xf]
      %v4002 = vld [vmem:[%s3998 + $0xc] sm:$0xf]
      %v4003 = vld [vmem:[%s3998 + $0x10] sm:$0xf]
      %v4004 = vld [vmem:[%s3998 + $0x14] sm:$0xf]
      %v4005 = vld [vmem:[%s3998 + $0x18] sm:$0xf]
      %v4006 = vld [vmem:[%s3998 + $0x1c] sm:$0xf]
      %v4007 = vld [vmem:[%s3998 + $0x20] sm:$0xf]
      %v4008 = vld [vmem:[%s3998 + $0x24] sm:$0xf]
      %v4009 = vld [vmem:[%s3998 + $0x28] sm:$0xf]
      %v4010 = vld [vmem:[%s3998 + $0x2c] sm:$0xf]
      %v4011 = vld [vmem:[%s3998 + $0x30] sm:$0xf]
      %v4012 = vld [vmem:[%s3998 + $0x34] sm:$0xf]
      %v4013 = vld [vmem:[%s3998 + $0x38] sm:$0xf]
      %v4014 = vld [vmem:[%s3998 + $0x3c] sm:$0xf]
      %v4015 = vld [vmem:[%s3998 + $0x40] sm:$0xf]
      %v4016 = vld [vmem:[%s3998 + $0x44] sm:$0xf]
      %v4017 = vld [vmem:[%s3998 + $0x48] sm:$0xf]
      %v4018 = vld [vmem:[%s3998 + $0x4c] sm:$0xf]
      %v4019 = vld [vmem:[%s3998 + $0x50] sm:$0xf]
      %v4020 = vld [vmem:[%s3998 + $0x54] sm:$0xf]
      %v4021 = vld [vmem:[%s3998 + $0x58] sm:$0xf]
      %v4022 = vld [vmem:[%s3998 + $0x5c] sm:$0xf]
      %v4023 = vld [vmem:[%s3998 + $0x60] sm:$0xf]
      %v4024 = vld [vmem:[%s3998 + $0x64] sm:$0xf]
      %v4025 = vld [vmem:[%s3998 + $0x68] sm:$0xf]
      %v4026 = vld [vmem:[%s3998 + $0x6c] sm:$0xf]
      %v4027 = vld [vmem:[%s3998 + $0x70] sm:$0xf]
      %v4028 = vld [vmem:[%s3998 + $0x74] sm:$0xf]
      %v4029 = vld [vmem:[%s3998 + $0x78] sm:$0xf]
      %v4030 = vld [vmem:[%s3998 + $0x7c] sm:$0xf]
      %v4031 = vunpack.c.l.bf16 %v3999
      %v4032 = vunpack.c.l.bf16 %v4000
      %v4033 = vunpack.c.l.bf16 %v4001
      %v4034 = vunpack.c.l.bf16 %v4002
      %v4035 = vunpack.c.l.bf16 %v4003
      %v4036 = vunpack.c.l.bf16 %v4004
      %v4037 = vunpack.c.l.bf16 %v4005
      %v4038 = vunpack.c.l.bf16 %v4006
      %v4039 = vunpack.c.l.bf16 %v4007
      %v4040 = vunpack.c.l.bf16 %v4008
      %v4041 = vunpack.c.l.bf16 %v4009
      %v4042 = vunpack.c.l.bf16 %v4010
      %v4043 = vunpack.c.l.bf16 %v4011
      %v4044 = vunpack.c.l.bf16 %v4012
      %v4045 = vunpack.c.l.bf16 %v4013
      %v4046 = vunpack.c.l.bf16 %v4014
      %v4047 = vunpack.c.l.bf16 %v4015
      %v4048 = vunpack.c.l.bf16 %v4016
      %v4049 = vunpack.c.l.bf16 %v4017
      %v4050 = vunpack.c.l.bf16 %v4018
      %v4051 = vunpack.c.l.bf16 %v4019
      %v4052 = vunpack.c.l.bf16 %v4020
      %v4053 = vunpack.c.l.bf16 %v4021
      %v4054 = vunpack.c.l.bf16 %v4022
      %v4055 = vunpack.c.l.bf16 %v4023
      %v4056 = vunpack.c.l.bf16 %v4024
      %v4057 = vunpack.c.l.bf16 %v4025
      %v4058 = vunpack.c.l.bf16 %v4026
      %v4059 = vunpack.c.l.bf16 %v4027
      %v4060 = vunpack.c.l.bf16 %v4028
      %v4061 = vunpack.c.l.bf16 %v4029
      %v4062 = vunpack.c.l.bf16 %v4030
      %v4063 = vmul.f32 %v3872, %v4031
      %v4064 = vmul.f32 %v3875, %v4032
      %v4065 = vmul.f32 %v3880, %v4033
      %v4066 = vmul.f32 %v3883, %v4034
      %v4067 = vmul.f32 %v3888, %v4035
      %v4068 = vmul.f32 %v3891, %v4036
      %v4069 = vmul.f32 %v3896, %v4037
      %v4070 = vmul.f32 %v3899, %v4038
      %v4071 = vmul.f32 %v3904, %v4039
      %v4072 = vmul.f32 %v3907, %v4040
      %v4073 = vmul.f32 %v3912, %v4041
      %v4074 = vmul.f32 %v3915, %v4042
      %v4075 = vmul.f32 %v3920, %v4043
      %v4076 = vmul.f32 %v3923, %v4044
      %v4077 = vmul.f32 %v3928, %v4045
      %v4078 = vmul.f32 %v3931, %v4046
      %v4079 = vmul.f32 %v3936, %v4047
      %v4080 = vmul.f32 %v3939, %v4048
      %v4081 = vmul.f32 %v3944, %v4049
      %v4082 = vmul.f32 %v3947, %v4050
      %v4083 = vmul.f32 %v3952, %v4051
      %v4084 = vmul.f32 %v3955, %v4052
      %v4085 = vmul.f32 %v3960, %v4053
      %v4086 = vmul.f32 %v3963, %v4054
      %v4087 = vmul.f32 %v3968, %v4055
      %v4088 = vmul.f32 %v3971, %v4056
      %v4089 = vmul.f32 %v3976, %v4057
      %v4090 = vmul.f32 %v3979, %v4058
      %v4091 = vmul.f32 %v3984, %v4059
      %v4092 = vmul.f32 %v3987, %v4060
      %v4093 = vmul.f32 %v3992, %v4061
      %v4094 = vmul.f32 %v3995, %v4062
      %s4095 = scalar_lea.vmem %s364, 256
      %4096 = vst.msk [vmem:[%s4095] sm:$0xff] %vm3804, %v4063
      %4097 = vst.msk [vmem:[%s4095 + $0x8] sm:$0xff] %vm3804, %v4064
      %4098 = vst.msk [vmem:[%s4095 + $0x10] sm:$0xff] %vm3804, %v4065
      %4099 = vst.msk [vmem:[%s4095 + $0x18] sm:$0xff] %vm3804, %v4066
      %4100 = vst.msk [vmem:[%s4095 + $0x20] sm:$0xff] %vm3804, %v4067
      %4101 = vst.msk [vmem:[%s4095 + $0x28] sm:$0xff] %vm3804, %v4068
      %4102 = vst.msk [vmem:[%s4095 + $0x30] sm:$0xff] %vm3804, %v4069
      %4103 = vst.msk [vmem:[%s4095 + $0x38] sm:$0xff] %vm3804, %v4070
      %4104 = vst.msk [vmem:[%s4095 + $0x40] sm:$0xff] %vm3804, %v4071
      %4105 = vst.msk [vmem:[%s4095 + $0x48] sm:$0xff] %vm3804, %v4072
      %4106 = vst.msk [vmem:[%s4095 + $0x50] sm:$0xff] %vm3804, %v4073
      %4107 = vst.msk [vmem:[%s4095 + $0x58] sm:$0xff] %vm3804, %v4074
      %4108 = vst.msk [vmem:[%s4095 + $0x60] sm:$0xff] %vm3804, %v4075
      %4109 = vst.msk [vmem:[%s4095 + $0x68] sm:$0xff] %vm3804, %v4076
      %4110 = vst.msk [vmem:[%s4095 + $0x70] sm:$0xff] %vm3804, %v4077
      %4111 = vst.msk [vmem:[%s4095 + $0x78] sm:$0xff] %vm3804, %v4078
      %4112 = vst.msk [vmem:[%s4095 + $0x80] sm:$0xff] %vm3804, %v4079
      %4113 = vst.msk [vmem:[%s4095 + $0x88] sm:$0xff] %vm3804, %v4080
      %4114 = vst.msk [vmem:[%s4095 + $0x90] sm:$0xff] %vm3804, %v4081
      %4115 = vst.msk [vmem:[%s4095 + $0x98] sm:$0xff] %vm3804, %v4082
      %4116 = vst.msk [vmem:[%s4095 + $0xa0] sm:$0xff] %vm3804, %v4083
      %4117 = vst.msk [vmem:[%s4095 + $0xa8] sm:$0xff] %vm3804, %v4084
      %4118 = vst.msk [vmem:[%s4095 + $0xb0] sm:$0xff] %vm3804, %v4085
      %4119 = vst.msk [vmem:[%s4095 + $0xb8] sm:$0xff] %vm3804, %v4086
      %4120 = vst.msk [vmem:[%s4095 + $0xc0] sm:$0xff] %vm3804, %v4087
      %4121 = vst.msk [vmem:[%s4095 + $0xc8] sm:$0xff] %vm3804, %v4088
      %4122 = vst.msk [vmem:[%s4095 + $0xd0] sm:$0xff] %vm3804, %v4089
      %4123 = vst.msk [vmem:[%s4095 + $0xd8] sm:$0xff] %vm3804, %v4090
      %4124 = vst.msk [vmem:[%s4095 + $0xe0] sm:$0xff] %vm3804, %v4091
      %4125 = vst.msk [vmem:[%s4095 + $0xe8] sm:$0xff] %vm3804, %v4092
      %4126 = vst.msk [vmem:[%s4095 + $0xf0] sm:$0xff] %vm3804, %v4093
      %4127 = vst.msk [vmem:[%s4095 + $0xf8] sm:$0xff] %vm3804, %v4094
      %s4128 = smul.u32 2, %s20
      %p4129 = scmp.lt.s32.totalorder %s4128, 3
      %s4130 = scalar_select %p4129, %s4128, 3
      %s4131 = smul.addr %s4130, 32
      %s4132 = smul.addr %s4131, 8
      %s4133 = scalar_lea.vmem %s9, %s4132
      // Predicated region
      $region57: #{laconv_forward.1} parent=55 // pred_check
        %p4134 = pneg %p237
      $region58: #{laconv_forward.1} parent=55 // pred_check_branch
        %4136 = sbr.rel (%p4134) target = $region60
      $region59: #{laconv_forward.1} parent=55 // pred_region
        %s4137 = smul.u32 2, %s20
      $region60: #{laconv_forward.1} parent=55 // pred_fallthru
        _
    $region56: #{laconv_forward.1} parent=5 // pred_fallthru
      _
    %p4138 = scmp.le.s32.totalorder 2, %s15
    // Predicated region
    $region61: #{laconv_forward.1} parent=5 // pred_check
      %p4139 = pneg %p4138
    $region62: #{laconv_forward.1} parent=5 // pred_check_branch
      %4141 = sbr.rel (%p4139) target = $region64
    $region63: #{laconv_forward.1} parent=5 // pred_region
      %s4142 = ssub.s32 %s15, 2
      // Predicated region
      $region65: #{laconv_forward.1} parent=63 // pred_check
        %p4143 = pneg %p243
      $region66: #{laconv_forward.1} parent=63 // pred_check_branch
        %4145 = sbr.rel (%p4143) target = $region68
      $region67: #{laconv_forward.1} parent=63 // pred_region
        %s4146 = smul.u32 2, %s21
        %p4147 = scmp.lt.s32.totalorder %s4146, 3
        %s4148 = scalar_select %p4147, %s4146, 3
        %s4149 = smul.addr %s4148, 32
        %s4150 = smul.addr %s4149, 8
        %s4151 = scalar_lea.vmem %s9, %s4150
      $region68: #{laconv_forward.1} parent=63 // pred_fallthru
        _
    $region64: #{laconv_forward.1} parent=5 // pred_fallthru
      _
  $region6: #{laconv_forward.1} parent=0 // loop_footer
    %s19 = sadd.s32 1, %s15
  $region7: #{laconv_forward.1} parent=0 // loop_footer_branch
    %14 = sbr.rel target = $region3
  $region8: #{laconv_forward.1} parent=0 // loop_exit
    _

</llo_original>
